<compile_context>
chip_gen: v6e
topology: v6e:2x2x1
jax: 0.10.0
libtpu: 0.0.40
codegen_flags: <defaults>
</compile_context>

<pallas_src>
import functools
import math

import jax
import jax.numpy as jnp
from jax import lax
from jax.experimental import pallas as pl
from jax.experimental.pallas import tpu as pltpu


def _layernorm(x, gamma, beta, eps):
    mu = jnp.mean(x, axis=-1, keepdims=True)
    xc = x - mu
    var = jnp.mean(xc * xc, axis=-1, keepdims=True)
    return xc * lax.rsqrt(var + eps) * gamma + beta


def _encoder_kernel(heads, d_k, eps,
                    x_ref, mask_ref,
                    wqkv_ref, bqkv_ref, wc_ref, bc_ref,
                    g_ref, b_ln_ref,
                    w1_ref, b1_ref, w2_ref, b2_ref,
                    o_ref):
    Bt, S, D = x_ref.shape
    H, dk = heads, d_k
    R = Bt * S

    # Fold batch*seq onto the sublane (row) axis for all row-wise ops.
    x = x_ref[...].reshape(R, D).astype(jnp.float32)

    # ---- fused QKV projection: one wide (N = 3D) MXU matmul -----------------
    qkv = jnp.dot(x, wqkv_ref[...], preferred_element_type=jnp.float32) + bqkv_ref[...]

    # ---- head-major batched layout (Bt*H, S, dk) -----------------------------
    def split_heads(base):
        tiles = []
        for b in range(Bt):                       # static loops (Bt, H small)
            rows = qkv[b * S:(b + 1) * S]
            for h in range(H):
                lo = base + h * dk
                tiles.append(rows[:, lo:lo + dk])
        return jnp.stack(tiles, axis=0)           # (Bt*H, S, dk)

    qh = split_heads(0)
    kh = split_heads(D)
    vh = split_heads(2 * D)

    # ---- additive mask bias, computed once (not per head) --------------------
    neg = jnp.where(mask_ref[...] == 0, jnp.float32(-1e9), jnp.float32(0.0))  # (Bt,1,S)
    bias = jnp.stack([neg[b] for b in range(Bt) for _ in range(H)], axis=0)   # (Bt*H,1,S)

    # ---- batched scaled-dot-product attention --------------------------------
    scale = jnp.float32(1.0 / math.sqrt(dk))
    scores = jnp.einsum("hqd,hkd->hqk", qh, kh,
                        preferred_element_type=jnp.float32) * scale + bias
    m = jnp.max(scores, axis=-1, keepdims=True)
    e = jnp.exp(scores - m)
    p = e * pl.reciprocal(jnp.sum(e, axis=-1, keepdims=True), approx=True)
    # Dropout(p=0.1) on attention weights: eval-mode identity.
    ctx = jnp.einsum("hqk,hkd->hqd", p, vh,
                     preferred_element_type=jnp.float32)              # (Bt*H, S, dk)

    # ---- output projection folded per head (no lane concatenate) -------------
    wc = wc_ref[...]                                                  # (H, dk, D)
    if Bt > 1:
        wc = jnp.broadcast_to(wc[None], (Bt, H, dk, D)).reshape(Bt * H, dk, D)
    proj = lax.dot_general(ctx, wc, (((2,), (1,)), ((0,), (0,))),
                           preferred_element_type=jnp.float32)        # (Bt*H, S, D)
    rows = []
    for b in range(Bt):
        acc = proj[b * H]
        for h in range(1, H):
            acc = acc + proj[b * H + h]
        rows.append(acc)                                              # (S, D)
    attn = jnp.concatenate(rows, axis=0) + bc_ref[...]                # (R, D)

    # ---- residual + LayerNorm (shared gamma/beta, used twice) ----------------
    g, b_ln = g_ref[...], b_ln_ref[...]
    h1 = _layernorm(attn + x, g, b_ln, eps)

    # ---- position-wise feed forward (dropout = identity) ---------------------
    mid = jnp.maximum(
        jnp.dot(h1, w1_ref[...], preferred_element_type=jnp.float32) + b1_ref[...], 0.0)
    ff = jnp.dot(mid, w2_ref[...], preferred_element_type=jnp.float32) + b2_ref[...]

    # ---- residual + LayerNorm -------------------------------------------------
    out = _layernorm(ff + h1, g, b_ln, eps)
    o_ref[...] = out.reshape(Bt, S, D).astype(o_ref.dtype)


def encoder_layer(embeddings, mask, params, heads, *, block_b=1, eps=1e-5):
    B, S, D = embeddings.shape
    assert D % heads == 0 and B % block_b == 0
    dk = D // heads
    (wq, bq, wk, bk, wv, bv, wc, bc, gamma, beta, w1, b1, w2, b2) = params
    F = w1.shape[1]

    # Pack QKV into one (D, 3D) weight -> single wide projection matmul.
    w_qkv = jnp.concatenate([wq, wk, wv], axis=1)       # (D, 3D)
    b_qkv = jnp.concatenate([bq, bk, bv], axis=1)       # (1, 3D)
    # Output projection split per head so the kernel folds it as a batched matmul.
    wc_h = wc.reshape(heads, dk, D)                     # (H, dk, D)
    # The kernel only needs per-key validity: accept (B,1,1,S) or (B,S).
    mask_k = mask.reshape(B, 1, S).astype(jnp.float32)

    kernel = functools.partial(_encoder_kernel, heads, dk, eps)
    per_b3 = lambda b: (b, 0, 0)
    fixed2 = lambda b: (0, 0)
    fixed3 = lambda b: (0, 0, 0)

    return pl.pallas_call(
        kernel,
        out_shape=jax.ShapeDtypeStruct((B, S, D), embeddings.dtype),
        grid_spec=pltpu.PrefetchScalarGridSpec(
            num_scalar_prefetch=0,
            grid=(B // block_b,),
            in_specs=[
                pl.BlockSpec((block_b, S, D), per_b3),   # embeddings
                pl.BlockSpec((block_b, 1, S), per_b3),   # per-key mask
                pl.BlockSpec((D, 3 * D), fixed2),        # fused QKV weight
                pl.BlockSpec((1, 3 * D), fixed2),        # fused QKV bias
                pl.BlockSpec((heads, dk, D), fixed3),    # concat proj weight (per head)
                pl.BlockSpec((1, D), fixed2),            # concat proj bias
                pl.BlockSpec((1, D), fixed2),            # layernorm gamma
                pl.BlockSpec((1, D), fixed2),            # layernorm beta
                pl.BlockSpec((D, F), fixed2),            # FFN fc1 weight
                pl.BlockSpec((1, F), fixed2),            # FFN fc1 bias
                pl.BlockSpec((F, D), fixed2),            # FFN fc2 weight
                pl.BlockSpec((1, D), fixed2),            # FFN fc2 bias
            ],
            out_specs=pl.BlockSpec((block_b, S, D), per_b3),
        ),
        compiler_params=pltpu.CompilerParams(
            dimension_semantics=("parallel",)),
    )(embeddings, mask_k, w_qkv, b_qkv, wc_h, bc, gamma, beta, w1, b1, w2, b2)


# ---------------------------------------------------------------------------
# Pure-JAX reference (mirrors the PyTorch EncoderLayer forward, eval mode).
# ---------------------------------------------------------------------------
def _reference(x, mask, params, heads, eps=1e-5):
    B, S, D = x.shape
    dk = D // heads
    (wq, bq, wk, bk, wv, bv, wc, bc, gamma, beta, w1, b1, w2, b2) = params

    def ln(t):
        mu = t.mean(-1, keepdims=True)
        var = ((t - mu) ** 2).mean(-1, keepdims=True)
        return (t - mu) / jnp.sqrt(var + eps) * gamma + beta

    q = (x @ wq + bq).reshape(B, S, heads, dk).transpose(0, 2, 1, 3)
    k = (x @ wk + bk).reshape(B, S, heads, dk).transpose(0, 2, 1, 3)
    v = (x @ wv + bv).reshape(B, S, heads, dk).transpose(0, 2, 1, 3)
    scores = jnp.einsum("bhqd,bhkd->bhqk", q, k) / math.sqrt(dk)
    scores = jnp.where(mask.reshape(B, 1, 1, S) == 0, -1e9, scores)
    w = jax.nn.softmax(scores, axis=-1)
    ctx = jnp.einsum("bhqk,bhkd->bhqd", w, v)
    ctx = ctx.transpose(0, 2, 1, 3).reshape(B, S, D)
    interacted = ctx @ wc + bc
    h1 = ln(interacted + x)
    ff = jnp.maximum(h1 @ w1 + b1, 0.0) @ w2 + b2
    return ln(ff + h1)


if __name__ == "__main__":
    B, S, D, H = 2, 8, 32, 4
    FF_DIM = 2048  # FeedForward default middle_dim in the module (lane-dense)

    key = jax.random.PRNGKey(0)
    ks = jax.random.split(key, 16)

    def lin(kw, kb, fan_in, fan_out):
        bound = 1.0 / math.sqrt(fan_in)
        w = jax.random.uniform(kw, (fan_in, fan_out), jnp.float32, -bound, bound)
        b = jax.random.uniform(kb, (1, fan_out), jnp.float32, -bound, bound)
        return w, b

    wq, bq = lin(ks[0], ks[1], D, D)
    wk, bk = lin(ks[2], ks[3], D, D)
    wv, bv = lin(ks[4], ks[5], D, D)
    wc, bc = lin(ks[6], ks[7], D, D)
    gamma = 1.0 + 0.1 * jax.random.normal(ks[8], (1, D), jnp.float32)
    beta = 0.1 * jax.random.normal(ks[9], (1, D), jnp.float32)
    w1, b1 = lin(ks[10], ks[11], D, FF_DIM)
    w2, b2 = lin(ks[12], ks[13], FF_DIM, D)
    params = (wq, bq, wk, bk, wv, bv, wc, bc, gamma, beta, w1, b1, w2, b2)

    x = jax.random.normal(ks[14], (B, S, D), jnp.float32)

    # Mask (module layout (B, 1, 1, S)): batch 0 attends everywhere,
    # batch 1 cannot attend to the last two key positions.
    mask = jnp.ones((B, 1, 1, S), jnp.float32)
    mask = mask.at[1, :, :, S - 2:].set(0.0)

    out = encoder_layer(x, mask, params, H)
    out = jax.block_until_ready(out)

    with jax.default_matmul_precision("highest"):
        ref = _reference(x, mask, params, H)

    assert out.shape == (B, S, D)
    err = float(jnp.max(jnp.abs(out - ref)))
    assert jnp.allclose(out, ref, atol=1e-3, rtol=1e-3), f"mismatch vs reference (max |err|={err})"

    print("KERNEL_OK")
</pallas_src>

<mosaic_0001>
module attributes {stable_mosaic.version = 11 : i64} {
  func.func @_encoder_kernel(%arg0: i32, %arg1: memref<1x8x32xf32, #tpu.memory_space<vmem>>, %arg2: memref<1x1x8xf32, #tpu.memory_space<vmem>>, %arg3: memref<32x96xf32, #tpu.memory_space<vmem>>, %arg4: memref<1x96xf32, #tpu.memory_space<vmem>>, %arg5: memref<4x8x32xf32, #tpu.memory_space<vmem>>, %arg6: memref<1x32xf32, #tpu.memory_space<vmem>>, %arg7: memref<1x32xf32, #tpu.memory_space<vmem>>, %arg8: memref<1x32xf32, #tpu.memory_space<vmem>>, %arg9: memref<32x2048xf32, #tpu.memory_space<vmem>>, %arg10: memref<1x2048xf32, #tpu.memory_space<vmem>>, %arg11: memref<2048x32xf32, #tpu.memory_space<vmem>>, %arg12: memref<1x32xf32, #tpu.memory_space<vmem>>, %arg13: memref<1x8x32xf32, #tpu.memory_space<vmem>>) attributes {dimension_semantics = [#tpu.dimension_semantics<parallel>], iteration_bounds = array<i64: 2>, scalar_prefetch = 0 : i64, scratch_operands = 0 : i64, tpu.core_type = #tpu.core_type<tc>, window_params = [{transform_indices = @transform_0, window_bounds = array<i64: 1, 8, 32>}, {transform_indices = @transform_1, window_bounds = array<i64: 1, 1, 8>}, {pipeline_mode = #tpu.pipeline_mode<synchronous>, transform_indices = @transform_2, window_bounds = array<i64: 32, 96>}, {pipeline_mode = #tpu.pipeline_mode<synchronous>, transform_indices = @transform_3, window_bounds = array<i64: 1, 96>}, {pipeline_mode = #tpu.pipeline_mode<synchronous>, transform_indices = @transform_4, window_bounds = array<i64: 4, 8, 32>}, {pipeline_mode = #tpu.pipeline_mode<synchronous>, transform_indices = @transform_5, window_bounds = array<i64: 1, 32>}, {pipeline_mode = #tpu.pipeline_mode<synchronous>, transform_indices = @transform_6, window_bounds = array<i64: 1, 32>}, {pipeline_mode = #tpu.pipeline_mode<synchronous>, transform_indices = @transform_7, window_bounds = array<i64: 1, 32>}, {pipeline_mode = #tpu.pipeline_mode<synchronous>, transform_indices = @transform_8, window_bounds = array<i64: 32, 2048>}, {pipeline_mode = #tpu.pipeline_mode<synchronous>, transform_indices = @transform_9, window_bounds = array<i64: 1, 2048>}, {pipeline_mode = #tpu.pipeline_mode<synchronous>, transform_indices = @transform_10, window_bounds = array<i64: 2048, 32>}, {pipeline_mode = #tpu.pipeline_mode<synchronous>, transform_indices = @transform_11, window_bounds = array<i64: 1, 32>}, {transform_indices = @transform_12, window_bounds = array<i64: 1, 8, 32>}]} {
    %c0 = arith.constant 0 : index
    %c0_0 = arith.constant 0 : index
    %c0_1 = arith.constant 0 : index
    %0 = vector.load %arg1[%c0, %c0_0, %c0_1] : memref<1x8x32xf32, #tpu.memory_space<vmem>>, vector<1x8x32xf32>
    %1 = vector.shape_cast %0 : vector<1x8x32xf32> to vector<8x32xf32>
    %c0_2 = arith.constant 0 : index
    %c0_3 = arith.constant 0 : index
    %2 = vector.load %arg3[%c0_2, %c0_3] : memref<32x96xf32, #tpu.memory_space<vmem>>, vector<32x96xf32>
    %cst = arith.constant dense<0.000000e+00> : vector<8x96xf32>
    %3 = tpu.matmul %1, %2, %cst {dimension_numbers = #tpu.dot_dimension_numbers<[1], [0], [0], [1], [0, 0, 1, 1], [], []>} : vector<8x32xf32>, vector<32x96xf32>, vector<8x96xf32> -> vector<8x96xf32>
    %c0_4 = arith.constant 0 : index
    %c0_5 = arith.constant 0 : index
    %4 = vector.load %arg4[%c0_4, %c0_5] : memref<1x96xf32, #tpu.memory_space<vmem>>, vector<1x96xf32>
    %5 = vector.broadcast %4 : vector<1x96xf32> to vector<8x96xf32>
    %6 = arith.addf %3, %5 : vector<8x96xf32>
    %7 = vector.extract_strided_slice %6 {offsets = [0, 0], sizes = [8, 8], strides = [1, 1]} : vector<8x96xf32> to vector<8x8xf32>
    %8 = vector.extract_strided_slice %6 {offsets = [0, 8], sizes = [8, 8], strides = [1, 1]} : vector<8x96xf32> to vector<8x8xf32>
    %9 = vector.extract_strided_slice %6 {offsets = [0, 16], sizes = [8, 8], strides = [1, 1]} : vector<8x96xf32> to vector<8x8xf32>
    %10 = vector.extract_strided_slice %6 {offsets = [0, 24], sizes = [8, 8], strides = [1, 1]} : vector<8x96xf32> to vector<8x8xf32>
    %11 = vector.shape_cast %7 : vector<8x8xf32> to vector<1x8x8xf32>
    %12 = vector.shape_cast %8 : vector<8x8xf32> to vector<1x8x8xf32>
    %13 = vector.shape_cast %9 : vector<8x8xf32> to vector<1x8x8xf32>
    %14 = vector.shape_cast %10 : vector<8x8xf32> to vector<1x8x8xf32>
    %15 = tpu.concatenate %11, %12, %13, %14 in 0 : vector<1x8x8xf32>, vector<1x8x8xf32>, vector<1x8x8xf32>, vector<1x8x8xf32> -> vector<4x8x8xf32>
    %16 = vector.extract_strided_slice %6 {offsets = [0, 32], sizes = [8, 8], strides = [1, 1]} : vector<8x96xf32> to vector<8x8xf32>
    %17 = vector.extract_strided_slice %6 {offsets = [0, 40], sizes = [8, 8], strides = [1, 1]} : vector<8x96xf32> to vector<8x8xf32>
    %18 = vector.extract_strided_slice %6 {offsets = [0, 48], sizes = [8, 8], strides = [1, 1]} : vector<8x96xf32> to vector<8x8xf32>
    %19 = vector.extract_strided_slice %6 {offsets = [0, 56], sizes = [8, 8], strides = [1, 1]} : vector<8x96xf32> to vector<8x8xf32>
    %20 = vector.shape_cast %16 : vector<8x8xf32> to vector<1x8x8xf32>
    %21 = vector.shape_cast %17 : vector<8x8xf32> to vector<1x8x8xf32>
    %22 = vector.shape_cast %18 : vector<8x8xf32> to vector<1x8x8xf32>
    %23 = vector.shape_cast %19 : vector<8x8xf32> to vector<1x8x8xf32>
    %24 = tpu.concatenate %20, %21, %22, %23 in 0 : vector<1x8x8xf32>, vector<1x8x8xf32>, vector<1x8x8xf32>, vector<1x8x8xf32> -> vector<4x8x8xf32>
    %25 = vector.extract_strided_slice %6 {offsets = [0, 64], sizes = [8, 8], strides = [1, 1]} : vector<8x96xf32> to vector<8x8xf32>
    %26 = vector.extract_strided_slice %6 {offsets = [0, 72], sizes = [8, 8], strides = [1, 1]} : vector<8x96xf32> to vector<8x8xf32>
    %27 = vector.extract_strided_slice %6 {offsets = [0, 80], sizes = [8, 8], strides = [1, 1]} : vector<8x96xf32> to vector<8x8xf32>
    %28 = vector.extract_strided_slice %6 {offsets = [0, 88], sizes = [8, 8], strides = [1, 1]} : vector<8x96xf32> to vector<8x8xf32>
    %29 = vector.shape_cast %25 : vector<8x8xf32> to vector<1x8x8xf32>
    %30 = vector.shape_cast %26 : vector<8x8xf32> to vector<1x8x8xf32>
    %31 = vector.shape_cast %27 : vector<8x8xf32> to vector<1x8x8xf32>
    %32 = vector.shape_cast %28 : vector<8x8xf32> to vector<1x8x8xf32>
    %33 = tpu.concatenate %29, %30, %31, %32 in 0 : vector<1x8x8xf32>, vector<1x8x8xf32>, vector<1x8x8xf32>, vector<1x8x8xf32> -> vector<4x8x8xf32>
    %c0_6 = arith.constant 0 : index
    %c0_7 = arith.constant 0 : index
    %c0_8 = arith.constant 0 : index
    %34 = vector.load %arg2[%c0_6, %c0_7, %c0_8] : memref<1x1x8xf32, #tpu.memory_space<vmem>>, vector<1x1x8xf32>
    %cst_9 = arith.constant 0.000000e+00 : f32
    %35 = vector.broadcast %cst_9 : f32 to vector<1x1x8xf32>
    %36 = arith.cmpf oeq, %34, %35 : vector<1x1x8xf32>
    %cst_10 = arith.constant -1.000000e+09 : f32
    %cst_11 = arith.constant 0.000000e+00 : f32
    %37 = vector.broadcast %cst_10 : f32 to vector<1x1x8xf32>
    %38 = vector.broadcast %cst_11 : f32 to vector<1x1x8xf32>
    %39 = arith.select %36, %37, %38 : vector<1x1x8xi1>, vector<1x1x8xf32>
    %40 = vector.shape_cast %39 : vector<1x1x8xf32> to vector<1x8xf32>
    %41 = vector.shape_cast %39 : vector<1x1x8xf32> to vector<1x8xf32>
    %42 = vector.shape_cast %39 : vector<1x1x8xf32> to vector<1x8xf32>
    %43 = vector.shape_cast %39 : vector<1x1x8xf32> to vector<1x8xf32>
    %44 = vector.shape_cast %40 : vector<1x8xf32> to vector<1x1x8xf32>
    %45 = vector.shape_cast %41 : vector<1x8xf32> to vector<1x1x8xf32>
    %46 = vector.shape_cast %42 : vector<1x8xf32> to vector<1x1x8xf32>
    %47 = vector.shape_cast %43 : vector<1x8xf32> to vector<1x1x8xf32>
    %48 = tpu.concatenate %44, %45, %46, %47 in 0 : vector<1x1x8xf32>, vector<1x1x8xf32>, vector<1x1x8xf32>, vector<1x1x8xf32> -> vector<4x1x8xf32>
    "tpu.trace_start"() <{level = 10 : i32, message = "hqd,hkd->hqk"}> : () -> ()
    %cst_12 = arith.constant dense<0.000000e+00> : vector<4x8x8xf32>
    %49 = tpu.matmul %15, %24, %cst_12 {dimension_numbers = #tpu.dot_dimension_numbers<[2], [2], [1], [1], [0, 0, 0, 1, 1, 1], [0], [0]>} : vector<4x8x8xf32>, vector<4x8x8xf32>, vector<4x8x8xf32> -> vector<4x8x8xf32>
    "tpu.trace_stop"() : () -> ()
    %cst_13 = arith.constant 0.353553385 : f32
    %50 = vector.broadcast %cst_13 : f32 to vector<4x8x8xf32>
    %51 = arith.mulf %49, %50 : vector<4x8x8xf32>
    %52 = vector.broadcast %48 : vector<4x1x8xf32> to vector<4x8x8xf32>
    %53 = arith.addf %51, %52 : vector<4x8x8xf32>
    %cst_14 = arith.constant dense<0xFF800000> : vector<4x8xf32>
    %54 = vector.multi_reduction <maximumf>, %53, %cst_14 [2] : vector<4x8x8xf32> to vector<4x8xf32>
    %55 = vector.shape_cast %54 : vector<4x8xf32> to vector<4x8x1xf32>
    %56 = vector.broadcast %55 : vector<4x8x1xf32> to vector<4x8x8xf32>
    %57 = arith.subf %53, %56 : vector<4x8x8xf32>
    %58 = math.exp %57 : vector<4x8x8xf32>
    %cst_15 = arith.constant dense<0.000000e+00> : vector<4x8xf32>
    %59 = vector.multi_reduction <add>, %58, %cst_15 [2] : vector<4x8x8xf32> to vector<4x8xf32>
    %60 = vector.shape_cast %59 : vector<4x8xf32> to vector<4x8x1xf32>
    %61 = tpu.reciprocal %60 {approx = true} : vector<4x8x1xf32> -> vector<4x8x1xf32>
    %62 = vector.broadcast %61 : vector<4x8x1xf32> to vector<4x8x8xf32>
    %63 = arith.mulf %58, %62 : vector<4x8x8xf32>
    "tpu.trace_start"() <{level = 10 : i32, message = "hqk,hkd->hqd"}> : () -> ()
    %cst_16 = arith.constant dense<0.000000e+00> : vector<4x8x8xf32>
    %64 = tpu.matmul %63, %33, %cst_16 {dimension_numbers = #tpu.dot_dimension_numbers<[2], [1], [1], [2], [0, 0, 0, 1, 1, 2], [0], [0]>} : vector<4x8x8xf32>, vector<4x8x8xf32>, vector<4x8x8xf32> -> vector<4x8x8xf32>
    "tpu.trace_stop"() : () -> ()
    %c0_17 = arith.constant 0 : index
    %c0_18 = arith.constant 0 : index
    %c0_19 = arith.constant 0 : index
    %65 = vector.load %arg5[%c0_17, %c0_18, %c0_19] : memref<4x8x32xf32, #tpu.memory_space<vmem>>, vector<4x8x32xf32>
    %cst_20 = arith.constant dense<0.000000e+00> : vector<4x8x32xf32>
    %66 = tpu.matmul %64, %65, %cst_20 {dimension_numbers = #tpu.dot_dimension_numbers<[2], [1], [1], [2], [0, 0, 0, 1, 1, 2], [0], [0]>} : vector<4x8x8xf32>, vector<4x8x32xf32>, vector<4x8x32xf32> -> vector<4x8x32xf32>
    %67 = vector.extract_strided_slice %66 {offsets = [0, 0, 0], sizes = [1, 8, 32], strides = [1, 1, 1]} : vector<4x8x32xf32> to vector<1x8x32xf32>
    %68 = vector.shape_cast %67 : vector<1x8x32xf32> to vector<8x32xf32>
    %69 = vector.extract_strided_slice %66 {offsets = [1, 0, 0], sizes = [1, 8, 32], strides = [1, 1, 1]} : vector<4x8x32xf32> to vector<1x8x32xf32>
    %70 = vector.shape_cast %69 : vector<1x8x32xf32> to vector<8x32xf32>
    %71 = arith.addf %68, %70 : vector<8x32xf32>
    %72 = vector.extract_strided_slice %66 {offsets = [2, 0, 0], sizes = [1, 8, 32], strides = [1, 1, 1]} : vector<4x8x32xf32> to vector<1x8x32xf32>
    %73 = vector.shape_cast %72 : vector<1x8x32xf32> to vector<8x32xf32>
    %74 = arith.addf %71, %73 : vector<8x32xf32>
    %75 = vector.extract_strided_slice %66 {offsets = [3, 0, 0], sizes = [1, 8, 32], strides = [1, 1, 1]} : vector<4x8x32xf32> to vector<1x8x32xf32>
    %76 = vector.shape_cast %75 : vector<1x8x32xf32> to vector<8x32xf32>
    %77 = arith.addf %74, %76 : vector<8x32xf32>
    %c0_21 = arith.constant 0 : index
    %c0_22 = arith.constant 0 : index
    %78 = vector.load %arg6[%c0_21, %c0_22] : memref<1x32xf32, #tpu.memory_space<vmem>>, vector<1x32xf32>
    %79 = vector.broadcast %78 : vector<1x32xf32> to vector<8x32xf32>
    %80 = arith.addf %77, %79 : vector<8x32xf32>
    %c0_23 = arith.constant 0 : index
    %c0_24 = arith.constant 0 : index
    %81 = vector.load %arg7[%c0_23, %c0_24] : memref<1x32xf32, #tpu.memory_space<vmem>>, vector<1x32xf32>
    %c0_25 = arith.constant 0 : index
    %c0_26 = arith.constant 0 : index
    %82 = vector.load %arg8[%c0_25, %c0_26] : memref<1x32xf32, #tpu.memory_space<vmem>>, vector<1x32xf32>
    %83 = arith.addf %80, %1 : vector<8x32xf32>
    %cst_27 = arith.constant dense<0.000000e+00> : vector<8xf32>
    %84 = vector.multi_reduction <add>, %83, %cst_27 [1] : vector<8x32xf32> to vector<8xf32>
    %85 = vector.shape_cast %84 : vector<8xf32> to vector<8x1xf32>
    %cst_28 = arith.constant 3.200000e+01 : f32
    %86 = vector.broadcast %cst_28 : f32 to vector<8x1xf32>
    %87 = arith.divf %85, %86 : vector<8x1xf32>
    %88 = vector.broadcast %87 : vector<8x1xf32> to vector<8x32xf32>
    %89 = arith.subf %83, %88 : vector<8x32xf32>
    %90 = arith.mulf %89, %89 : vector<8x32xf32>
    %cst_29 = arith.constant dense<0.000000e+00> : vector<8xf32>
    %91 = vector.multi_reduction <add>, %90, %cst_29 [1] : vector<8x32xf32> to vector<8xf32>
    %92 = vector.shape_cast %91 : vector<8xf32> to vector<8x1xf32>
    %cst_30 = arith.constant 3.200000e+01 : f32
    %93 = vector.broadcast %cst_30 : f32 to vector<8x1xf32>
    %94 = arith.divf %92, %93 : vector<8x1xf32>
    %cst_31 = arith.constant 9.99999974E-6 : f32
    %95 = vector.broadcast %cst_31 : f32 to vector<8x1xf32>
    %96 = arith.addf %94, %95 : vector<8x1xf32>
    %97 = math.rsqrt %96 : vector<8x1xf32>
    %98 = vector.broadcast %97 : vector<8x1xf32> to vector<8x32xf32>
    %99 = arith.mulf %89, %98 : vector<8x32xf32>
    %100 = vector.broadcast %81 : vector<1x32xf32> to vector<8x32xf32>
    %101 = arith.mulf %99, %100 : vector<8x32xf32>
    %102 = vector.broadcast %82 : vector<1x32xf32> to vector<8x32xf32>
    %103 = arith.addf %101, %102 : vector<8x32xf32>
    %c0_32 = arith.constant 0 : index
    %c0_33 = arith.constant 0 : index
    %104 = vector.load %arg9[%c0_32, %c0_33] : memref<32x2048xf32, #tpu.memory_space<vmem>>, vector<32x2048xf32>
    %cst_34 = arith.constant dense<0.000000e+00> : vector<8x2048xf32>
    %105 = tpu.matmul %103, %104, %cst_34 {dimension_numbers = #tpu.dot_dimension_numbers<[1], [0], [0], [1], [0, 0, 1, 1], [], []>} : vector<8x32xf32>, vector<32x2048xf32>, vector<8x2048xf32> -> vector<8x2048xf32>
    %c0_35 = arith.constant 0 : index
    %c0_36 = arith.constant 0 : index
    %106 = vector.load %arg10[%c0_35, %c0_36] : memref<1x2048xf32, #tpu.memory_space<vmem>>, vector<1x2048xf32>
    %107 = vector.broadcast %106 : vector<1x2048xf32> to vector<8x2048xf32>
    %108 = arith.addf %105, %107 : vector<8x2048xf32>
    %cst_37 = arith.constant 0.000000e+00 : f32
    %109 = vector.broadcast %cst_37 : f32 to vector<8x2048xf32>
    %110 = arith.maximumf %108, %109 : vector<8x2048xf32>
    %c0_38 = arith.constant 0 : index
    %c0_39 = arith.constant 0 : index
    %111 = vector.load %arg11[%c0_38, %c0_39] : memref<2048x32xf32, #tpu.memory_space<vmem>>, vector<2048x32xf32>
    %cst_40 = arith.constant dense<0.000000e+00> : vector<8x32xf32>
    %112 = tpu.matmul %110, %111, %cst_40 {dimension_numbers = #tpu.dot_dimension_numbers<[1], [0], [0], [1], [0, 0, 1, 1], [], []>} : vector<8x2048xf32>, vector<2048x32xf32>, vector<8x32xf32> -> vector<8x32xf32>
    %c0_41 = arith.constant 0 : index
    %c0_42 = arith.constant 0 : index
    %113 = vector.load %arg12[%c0_41, %c0_42] : memref<1x32xf32, #tpu.memory_space<vmem>>, vector<1x32xf32>
    %114 = vector.broadcast %113 : vector<1x32xf32> to vector<8x32xf32>
    %115 = arith.addf %112, %114 : vector<8x32xf32>
    %116 = arith.addf %115, %103 : vector<8x32xf32>
    %cst_43 = arith.constant dense<0.000000e+00> : vector<8xf32>
    %117 = vector.multi_reduction <add>, %116, %cst_43 [1] : vector<8x32xf32> to vector<8xf32>
    %118 = vector.shape_cast %117 : vector<8xf32> to vector<8x1xf32>
    %cst_44 = arith.constant 3.200000e+01 : f32
    %119 = vector.broadcast %cst_44 : f32 to vector<8x1xf32>
    %120 = arith.divf %118, %119 : vector<8x1xf32>
    %121 = vector.broadcast %120 : vector<8x1xf32> to vector<8x32xf32>
    %122 = arith.subf %116, %121 : vector<8x32xf32>
    %123 = arith.mulf %122, %122 : vector<8x32xf32>
    %cst_45 = arith.constant dense<0.000000e+00> : vector<8xf32>
    %124 = vector.multi_reduction <add>, %123, %cst_45 [1] : vector<8x32xf32> to vector<8xf32>
    %125 = vector.shape_cast %124 : vector<8xf32> to vector<8x1xf32>
    %cst_46 = arith.constant 3.200000e+01 : f32
    %126 = vector.broadcast %cst_46 : f32 to vector<8x1xf32>
    %127 = arith.divf %125, %126 : vector<8x1xf32>
    %cst_47 = arith.constant 9.99999974E-6 : f32
    %128 = vector.broadcast %cst_47 : f32 to vector<8x1xf32>
    %129 = arith.addf %127, %128 : vector<8x1xf32>
    %130 = math.rsqrt %129 : vector<8x1xf32>
    %131 = vector.broadcast %130 : vector<8x1xf32> to vector<8x32xf32>
    %132 = arith.mulf %122, %131 : vector<8x32xf32>
    %133 = vector.broadcast %81 : vector<1x32xf32> to vector<8x32xf32>
    %134 = arith.mulf %132, %133 : vector<8x32xf32>
    %135 = vector.broadcast %82 : vector<1x32xf32> to vector<8x32xf32>
    %136 = arith.addf %134, %135 : vector<8x32xf32>
    %137 = vector.shape_cast %136 : vector<8x32xf32> to vector<1x8x32xf32>
    %c0_48 = arith.constant 0 : index
    %c0_49 = arith.constant 0 : index
    %c0_50 = arith.constant 0 : index
    %138 = vector.load %arg13[%c0_48, %c0_49, %c0_50] : memref<1x8x32xf32, #tpu.memory_space<vmem>>, vector<1x8x32xf32>
    tpu.vector_store %arg13[%c0_48, %c0_49, %c0_50], %137 {strides = array<i32>} : memref<1x8x32xf32, #tpu.memory_space<vmem>>, vector<1x8x32xf32>,
    return
  }
  func.func @transform_0(%arg0: i32) -> (i32, i32, i32) {
    %c0_i32 = arith.constant 0 : i32
    %c0_i32_0 = arith.constant 0 : i32
    %c0_i32_1 = arith.constant 0 : i32
    return %arg0, %c0_i32, %c0_i32_0 : i32, i32, i32
  }
  func.func @transform_1(%arg0: i32) -> (i32, i32, i32) {
    %c0_i32 = arith.constant 0 : i32
    %c0_i32_0 = arith.constant 0 : i32
    %c0_i32_1 = arith.constant 0 : i32
    return %arg0, %c0_i32, %c0_i32_0 : i32, i32, i32
  }
  func.func @transform_2(%arg0: i32) -> (i32, i32) {
    %c0_i32 = arith.constant 0 : i32
    %c0_i32_0 = arith.constant 0 : i32
    %c0_i32_1 = arith.constant 0 : i32
    return %c0_i32, %c0_i32_0 : i32, i32
  }
  func.func @transform_3(%arg0: i32) -> (i32, i32) {
    %c0_i32 = arith.constant 0 : i32
    %c0_i32_0 = arith.constant 0 : i32
    %c0_i32_1 = arith.constant 0 : i32
    return %c0_i32, %c0_i32_0 : i32, i32
  }
  func.func @transform_4(%arg0: i32) -> (i32, i32, i32) {
    %c0_i32 = arith.constant 0 : i32
    %c0_i32_0 = arith.constant 0 : i32
    %c0_i32_1 = arith.constant 0 : i32
    %c0_i32_2 = arith.constant 0 : i32
    return %c0_i32, %c0_i32_0, %c0_i32_1 : i32, i32, i32
  }
  func.func @transform_5(%arg0: i32) -> (i32, i32) {
    %c0_i32 = arith.constant 0 : i32
    %c0_i32_0 = arith.constant 0 : i32
    %c0_i32_1 = arith.constant 0 : i32
    return %c0_i32, %c0_i32_0 : i32, i32
  }
  func.func @transform_6(%arg0: i32) -> (i32, i32) {
    %c0_i32 = arith.constant 0 : i32
    %c0_i32_0 = arith.constant 0 : i32
    %c0_i32_1 = arith.constant 0 : i32
    return %c0_i32, %c0_i32_0 : i32, i32
  }
  func.func @transform_7(%arg0: i32) -> (i32, i32) {
    %c0_i32 = arith.constant 0 : i32
    %c0_i32_0 = arith.constant 0 : i32
    %c0_i32_1 = arith.constant 0 : i32
    return %c0_i32, %c0_i32_0 : i32, i32
  }
  func.func @transform_8(%arg0: i32) -> (i32, i32) {
    %c0_i32 = arith.constant 0 : i32
    %c0_i32_0 = arith.constant 0 : i32
    %c0_i32_1 = arith.constant 0 : i32
    return %c0_i32, %c0_i32_0 : i32, i32
  }
  func.func @transform_9(%arg0: i32) -> (i32, i32) {
    %c0_i32 = arith.constant 0 : i32
    %c0_i32_0 = arith.constant 0 : i32
    %c0_i32_1 = arith.constant 0 : i32
    return %c0_i32, %c0_i32_0 : i32, i32
  }
  func.func @transform_10(%arg0: i32) -> (i32, i32) {
    %c0_i32 = arith.constant 0 : i32
    %c0_i32_0 = arith.constant 0 : i32
    %c0_i32_1 = arith.constant 0 : i32
    return %c0_i32, %c0_i32_0 : i32, i32
  }
  func.func @transform_11(%arg0: i32) -> (i32, i32) {
    %c0_i32 = arith.constant 0 : i32
    %c0_i32_0 = arith.constant 0 : i32
    %c0_i32_1 = arith.constant 0 : i32
    return %c0_i32, %c0_i32_0 : i32, i32
  }
  func.func @transform_12(%arg0: i32) -> (i32, i32, i32) {
    %c0_i32 = arith.constant 0 : i32
    %c0_i32_0 = arith.constant 0 : i32
    %c0_i32_1 = arith.constant 0 : i32
    return %arg0, %c0_i32, %c0_i32_0 : i32, i32, i32
  }
}

</mosaic_0001>

<llo_original>
// kernel: tpu_custom_call.1
$region0: #{tpu_custom_call.1}
  #allocation0 [shape = 'u32[]', space=smem, size = 0x4, offset = 0x4, fixed_abs, tag = 'smem constant byte address 0x4 - core index']
  #allocation1 [shape = 'u32[144,128]{1,0:T(1,128)}', space=vmem, size = 0x12000, scoped, tag = 'internal scratch']
  %s0 = inlined_call_operand.vmem [shape: f32[2,8,32], index: 0, kind: input, shape index: {}]
  %s1 = inlined_call_operand.vmem [shape: f32[2,1,8], index: 1, kind: input, shape index: {}]
  %s2 = inlined_call_operand.vmem [shape: f32[32,96], index: 2, kind: input, shape index: {}]
  %s3 = inlined_call_operand.vmem [shape: f32[1,96], index: 3, kind: input, shape index: {}]
  %s4 = inlined_call_operand.vmem [shape: f32[4,8,32], index: 4, kind: input, shape index: {}]
  %s5 = inlined_call_operand.vmem [shape: f32[1,32], index: 5, kind: input, shape index: {}]
  %s6 = inlined_call_operand.vmem [shape: f32[1,32], index: 6, kind: input, shape index: {}]
  %s7 = inlined_call_operand.vmem [shape: f32[1,32], index: 7, kind: input, shape index: {}]
  %s8 = inlined_call_operand.vmem [shape: f32[32,2048], index: 8, kind: input, shape index: {}]
  %s9 = inlined_call_operand.vmem [shape: f32[1,2048], index: 9, kind: input, shape index: {}]
  %s10 = inlined_call_operand.vmem [shape: f32[2048,32], index: 10, kind: input, shape index: {}]
  %s11 = inlined_call_operand.vmem [shape: f32[1,32], index: 11, kind: input, shape index: {}]
  %s12 = inlined_call_operand.hbm [shape: f32[2,8,32], index: 12, kind: output, shape index: {}]
  %s13 = sld [smem:[#allocation0]]
  $region81: #{tpu_custom_call.1} parent=0
    _
  %s15 = ssub.s32 1, %s13
  %s16 = scalar_select 0, %s15, %s13
  $region1: #{tpu_custom_call.1} parent=0
    #allocation2 [shape = 'u8[8192]{0}', space=vmem, size = 0x2000, scoped, tag = 'output window, operand 0']
    #allocation3 [shape = 's32[2]{0}', space=sflag, size = 0x8, scoped, tag = 'scoped memory for tpu_custom_call.1']
    %17 = vsyncpa [#allocation3], 0
    %s18 = scalar_lea.sflag [#allocation3], 1
    %19 = vsyncpa %s18, 0
    loop: start=0, step=1, limit=4
    $region2: #{tpu_custom_call.1} parent=1 // loop_pre_header
      _
    $region3: #{tpu_custom_call.1} parent=1 // loop_header
      %s21 = sphi 0, %s25
      %p22 = scmp.ge.s32.totalorder %s21, 4
      %s31 = sphi 0, %s33
      %s34 = sphi 0, %s31
      %s35 = sphi 0, %s34
      %s51 = sphi 0, %s35
      %s57 = sphi 0, %s59
      %s60 = sphi 0, %s57
      %s61 = sphi 0, %s60
      %s77 = sphi 0, %s61
      %s81 = sphi 0, %s81
      %s83 = sphi 0, %s81
      %s84 = sphi 0, %s83
      %s98 = sphi 0, %s84
      %s102 = sphi 0, %s102
      %s104 = sphi 0, %s102
      %s105 = sphi 0, %s104
      %s119 = sphi 0, %s105
      %s123 = sphi 0, %s123
      %s125 = sphi 0, %s123
      %s126 = sphi 0, %s125
      %s140 = sphi 0, %s126
      %s144 = sphi 0, %s144
      %s146 = sphi 0, %s144
      %s147 = sphi 0, %s146
      %s161 = sphi 0, %s147
      %s165 = sphi 0, %s165
      %s167 = sphi 0, %s165
      %s168 = sphi 0, %s167
      %s182 = sphi 0, %s168
      %s186 = sphi 0, %s186
      %s188 = sphi 0, %s186
      %s189 = sphi 0, %s188
      %s203 = sphi 0, %s189
      %s207 = sphi 0, %s207
      %s209 = sphi 0, %s207
      %s210 = sphi 0, %s209
      %s224 = sphi 0, %s210
      %s228 = sphi 0, %s228
      %s230 = sphi 0, %s228
      %s231 = sphi 0, %s230
      %s245 = sphi 0, %s231
      %s249 = sphi 0, %s249
      %s251 = sphi 0, %s249
      %s252 = sphi 0, %s251
      %s266 = sphi 0, %s252
      %s270 = sphi 0, %s270
      %s272 = sphi 0, %s270
      %s273 = sphi 0, %s272
      %s287 = sphi 0, %s273
      %s293 = sphi 0, %s295
      %s296 = sphi 0, %s293
      %s297 = sphi 0, %s296
      %s313 = sphi 0, %s297
    $region4: #{tpu_custom_call.1} parent=1 // loop_header_branch
      %24 = sbr.rel (%p22) target = $region8
    $region5: #{tpu_custom_call.1} parent=1 // loop_body
      %s26 = ssub.s32 %s21, 1
      %s27 = ssub.s32 %s21, 2
      %s28 = sadd.s32 %s21, 1
      %s29 = ssub.s32 %s21, %s28
      %p30 = scmp.eq.s32.totalorder %s29, 0
      %s32 = sadd.s32 %s31, 1
      %s33 = scalar_select %p30, %s31, %s32
      %p36 = pneg %p30
      %p37 = scmp.eq.s32.totalorder %s21, 1
      %p38 = por %p36, %p37
      %p39 = scmp.ne.s32.totalorder %s31, %s34
      %p40 = scmp.eq.s32.totalorder %s21, 0
      %p41 = por %p39, %p40
      %p42 = scmp.ne.s32.totalorder %s31, %s34
      %p43 = scmp.eq.s32.totalorder %s26, 1
      %p44 = por %p42, %p43
      %p45 = scmp.ne.s32.totalorder %s34, %s35
      %p46 = scmp.eq.s32.totalorder %s26, 0
      %p47 = por %p45, %p46
      %p48 = scmp.ne.s32.totalorder %s34, %s35
      %p49 = scmp.eq.s32.totalorder %s27, 1
      %p50 = por %p48, %p49
      %p52 = scmp.ne.s32.totalorder %s35, %s51
      %p53 = scmp.eq.s32.totalorder %s27, 0
      %p54 = por %p52, %p53
      %s55 = ssub.s32 %s21, %s28
      %p56 = scmp.eq.s32.totalorder %s55, 0
      %s58 = sadd.s32 %s57, 1
      %s59 = scalar_select %p56, %s57, %s58
      %p62 = pneg %p56
      %p63 = scmp.eq.s32.totalorder %s21, 1
      %p64 = por %p62, %p63
      %p65 = scmp.ne.s32.totalorder %s57, %s60
      %p66 = scmp.eq.s32.totalorder %s21, 0
      %p67 = por %p65, %p66
      %p68 = scmp.ne.s32.totalorder %s57, %s60
      %p69 = scmp.eq.s32.totalorder %s26, 1
      %p70 = por %p68, %p69
      %p71 = scmp.ne.s32.totalorder %s60, %s61
      %p72 = scmp.eq.s32.totalorder %s26, 0
      %p73 = por %p71, %p72
      %p74 = scmp.ne.s32.totalorder %s60, %s61
      %p75 = scmp.eq.s32.totalorder %s27, 1
      %p76 = por %p74, %p75
      %p78 = scmp.ne.s32.totalorder %s61, %s77
      %p79 = scmp.eq.s32.totalorder %s27, 0
      %p80 = por %p78, %p79
      %s82 = sadd.s32 %s81, 1
      %p85 = scmp.eq.s32.totalorder %s21, 1
      %p86 = scmp.ne.s32.totalorder %s81, %s83
      %p87 = scmp.eq.s32.totalorder %s21, 0
      %p88 = por %p86, %p87
      %p89 = scmp.ne.s32.totalorder %s81, %s83
      %p90 = scmp.eq.s32.totalorder %s26, 1
      %p91 = por %p89, %p90
      %p92 = scmp.ne.s32.totalorder %s83, %s84
      %p93 = scmp.eq.s32.totalorder %s26, 0
      %p94 = por %p92, %p93
      %p95 = scmp.ne.s32.totalorder %s83, %s84
      %p96 = scmp.eq.s32.totalorder %s27, 1
      %p97 = por %p95, %p96
      %p99 = scmp.ne.s32.totalorder %s84, %s98
      %p100 = scmp.eq.s32.totalorder %s27, 0
      %p101 = por %p99, %p100
      %s103 = sadd.s32 %s102, 1
      %p106 = scmp.eq.s32.totalorder %s21, 1
      %p107 = scmp.ne.s32.totalorder %s102, %s104
      %p108 = scmp.eq.s32.totalorder %s21, 0
      %p109 = por %p107, %p108
      %p110 = scmp.ne.s32.totalorder %s102, %s104
      %p111 = scmp.eq.s32.totalorder %s26, 1
      %p112 = por %p110, %p111
      %p113 = scmp.ne.s32.totalorder %s104, %s105
      %p114 = scmp.eq.s32.totalorder %s26, 0
      %p115 = por %p113, %p114
      %p116 = scmp.ne.s32.totalorder %s104, %s105
      %p117 = scmp.eq.s32.totalorder %s27, 1
      %p118 = por %p116, %p117
      %p120 = scmp.ne.s32.totalorder %s105, %s119
      %p121 = scmp.eq.s32.totalorder %s27, 0
      %p122 = por %p120, %p121
      %s124 = sadd.s32 %s123, 1
      %p127 = scmp.eq.s32.totalorder %s21, 1
      %p128 = scmp.ne.s32.totalorder %s123, %s125
      %p129 = scmp.eq.s32.totalorder %s21, 0
      %p130 = por %p128, %p129
      %p131 = scmp.ne.s32.totalorder %s123, %s125
      %p132 = scmp.eq.s32.totalorder %s26, 1
      %p133 = por %p131, %p132
      %p134 = scmp.ne.s32.totalorder %s125, %s126
      %p135 = scmp.eq.s32.totalorder %s26, 0
      %p136 = por %p134, %p135
      %p137 = scmp.ne.s32.totalorder %s125, %s126
      %p138 = scmp.eq.s32.totalorder %s27, 1
      %p139 = por %p137, %p138
      %p141 = scmp.ne.s32.totalorder %s126, %s140
      %p142 = scmp.eq.s32.totalorder %s27, 0
      %p143 = por %p141, %p142
      %s145 = sadd.s32 %s144, 1
      %p148 = scmp.eq.s32.totalorder %s21, 1
      %p149 = scmp.ne.s32.totalorder %s144, %s146
      %p150 = scmp.eq.s32.totalorder %s21, 0
      %p151 = por %p149, %p150
      %p152 = scmp.ne.s32.totalorder %s144, %s146
      %p153 = scmp.eq.s32.totalorder %s26, 1
      %p154 = por %p152, %p153
      %p155 = scmp.ne.s32.totalorder %s146, %s147
      %p156 = scmp.eq.s32.totalorder %s26, 0
      %p157 = por %p155, %p156
      %p158 = scmp.ne.s32.totalorder %s146, %s147
      %p159 = scmp.eq.s32.totalorder %s27, 1
      %p160 = por %p158, %p159
      %p162 = scmp.ne.s32.totalorder %s147, %s161
      %p163 = scmp.eq.s32.totalorder %s27, 0
      %p164 = por %p162, %p163
      %s166 = sadd.s32 %s165, 1
      %p169 = scmp.eq.s32.totalorder %s21, 1
      %p170 = scmp.ne.s32.totalorder %s165, %s167
      %p171 = scmp.eq.s32.totalorder %s21, 0
      %p172 = por %p170, %p171
      %p173 = scmp.ne.s32.totalorder %s165, %s167
      %p174 = scmp.eq.s32.totalorder %s26, 1
      %p175 = por %p173, %p174
      %p176 = scmp.ne.s32.totalorder %s167, %s168
      %p177 = scmp.eq.s32.totalorder %s26, 0
      %p178 = por %p176, %p177
      %p179 = scmp.ne.s32.totalorder %s167, %s168
      %p180 = scmp.eq.s32.totalorder %s27, 1
      %p181 = por %p179, %p180
      %p183 = scmp.ne.s32.totalorder %s168, %s182
      %p184 = scmp.eq.s32.totalorder %s27, 0
      %p185 = por %p183, %p184
      %s187 = sadd.s32 %s186, 1
      %p190 = scmp.eq.s32.totalorder %s21, 1
      %p191 = scmp.ne.s32.totalorder %s186, %s188
      %p192 = scmp.eq.s32.totalorder %s21, 0
      %p193 = por %p191, %p192
      %p194 = scmp.ne.s32.totalorder %s186, %s188
      %p195 = scmp.eq.s32.totalorder %s26, 1
      %p196 = por %p194, %p195
      %p197 = scmp.ne.s32.totalorder %s188, %s189
      %p198 = scmp.eq.s32.totalorder %s26, 0
      %p199 = por %p197, %p198
      %p200 = scmp.ne.s32.totalorder %s188, %s189
      %p201 = scmp.eq.s32.totalorder %s27, 1
      %p202 = por %p200, %p201
      %p204 = scmp.ne.s32.totalorder %s189, %s203
      %p205 = scmp.eq.s32.totalorder %s27, 0
      %p206 = por %p204, %p205
      %s208 = sadd.s32 %s207, 1
      %p211 = scmp.eq.s32.totalorder %s21, 1
      %p212 = scmp.ne.s32.totalorder %s207, %s209
      %p213 = scmp.eq.s32.totalorder %s21, 0
      %p214 = por %p212, %p213
      %p215 = scmp.ne.s32.totalorder %s207, %s209
      %p216 = scmp.eq.s32.totalorder %s26, 1
      %p217 = por %p215, %p216
      %p218 = scmp.ne.s32.totalorder %s209, %s210
      %p219 = scmp.eq.s32.totalorder %s26, 0
      %p220 = por %p218, %p219
      %p221 = scmp.ne.s32.totalorder %s209, %s210
      %p222 = scmp.eq.s32.totalorder %s27, 1
      %p223 = por %p221, %p222
      %p225 = scmp.ne.s32.totalorder %s210, %s224
      %p226 = scmp.eq.s32.totalorder %s27, 0
      %p227 = por %p225, %p226
      %s229 = sadd.s32 %s228, 1
      %p232 = scmp.eq.s32.totalorder %s21, 1
      %p233 = scmp.ne.s32.totalorder %s228, %s230
      %p234 = scmp.eq.s32.totalorder %s21, 0
      %p235 = por %p233, %p234
      %p236 = scmp.ne.s32.totalorder %s228, %s230
      %p237 = scmp.eq.s32.totalorder %s26, 1
      %p238 = por %p236, %p237
      %p239 = scmp.ne.s32.totalorder %s230, %s231
      %p240 = scmp.eq.s32.totalorder %s26, 0
      %p241 = por %p239, %p240
      %p242 = scmp.ne.s32.totalorder %s230, %s231
      %p243 = scmp.eq.s32.totalorder %s27, 1
      %p244 = por %p242, %p243
      %p246 = scmp.ne.s32.totalorder %s231, %s245
      %p247 = scmp.eq.s32.totalorder %s27, 0
      %p248 = por %p246, %p247
      %s250 = sadd.s32 %s249, 1
      %p253 = scmp.eq.s32.totalorder %s21, 1
      %p254 = scmp.ne.s32.totalorder %s249, %s251
      %p255 = scmp.eq.s32.totalorder %s21, 0
      %p256 = por %p254, %p255
      %p257 = scmp.ne.s32.totalorder %s249, %s251
      %p258 = scmp.eq.s32.totalorder %s26, 1
      %p259 = por %p257, %p258
      %p260 = scmp.ne.s32.totalorder %s251, %s252
      %p261 = scmp.eq.s32.totalorder %s26, 0
      %p262 = por %p260, %p261
      %p263 = scmp.ne.s32.totalorder %s251, %s252
      %p264 = scmp.eq.s32.totalorder %s27, 1
      %p265 = por %p263, %p264
      %p267 = scmp.ne.s32.totalorder %s252, %s266
      %p268 = scmp.eq.s32.totalorder %s27, 0
      %p269 = por %p267, %p268
      %s271 = sadd.s32 %s270, 1
      %p274 = scmp.eq.s32.totalorder %s21, 1
      %p275 = scmp.ne.s32.totalorder %s270, %s272
      %p276 = scmp.eq.s32.totalorder %s21, 0
      %p277 = por %p275, %p276
      %p278 = scmp.ne.s32.totalorder %s270, %s272
      %p279 = scmp.eq.s32.totalorder %s26, 1
      %p280 = por %p278, %p279
      %p281 = scmp.ne.s32.totalorder %s272, %s273
      %p282 = scmp.eq.s32.totalorder %s26, 0
      %p283 = por %p281, %p282
      %p284 = scmp.ne.s32.totalorder %s272, %s273
      %p285 = scmp.eq.s32.totalorder %s27, 1
      %p286 = por %p284, %p285
      %p288 = scmp.ne.s32.totalorder %s273, %s287
      %p289 = scmp.eq.s32.totalorder %s27, 0
      %p290 = por %p288, %p289
      %s291 = ssub.s32 %s21, %s28
      %p292 = scmp.eq.s32.totalorder %s291, 0
      %s294 = sadd.s32 %s293, 1
      %s295 = scalar_select %p292, %s293, %s294
      %p298 = pneg %p292
      %p299 = scmp.eq.s32.totalorder %s21, 1
      %p300 = por %p298, %p299
      %p301 = scmp.ne.s32.totalorder %s293, %s296
      %p302 = scmp.eq.s32.totalorder %s21, 0
      %p303 = por %p301, %p302
      %p304 = scmp.ne.s32.totalorder %s293, %s296
      %p305 = scmp.eq.s32.totalorder %s26, 1
      %p306 = por %p304, %p305
      %p307 = scmp.ne.s32.totalorder %s296, %s297
      %p308 = scmp.eq.s32.totalorder %s26, 0
      %p309 = por %p307, %p308
      %p310 = scmp.ne.s32.totalorder %s296, %s297
      %p311 = scmp.eq.s32.totalorder %s27, 1
      %p312 = por %p310, %p311
      %p314 = scmp.ne.s32.totalorder %s297, %s313
      %p315 = scmp.eq.s32.totalorder %s27, 0
      %p316 = por %p314, %p315
      %p317 = scmp.le.s32.totalorder 1, %s21
      %p318 = scmp.lt.s32.totalorder %s21, 3
      %p319 = pnand %p317, %p318
      %p320 = pneg %p319
      // Predicated region
      $region9: #{tpu_custom_call.1} parent=5 // pred_check
        _
      $region10: #{tpu_custom_call.1} parent=5 // pred_check_branch
        %322 = sbr.rel (%p319) target = $region12
      $region11: #{tpu_custom_call.1} parent=5 // pred_region
        %s323 = ssub.s32 %s21, 1
        // Predicated region
        $region13: #{tpu_custom_call.1} parent=11 // pred_check
          %p324 = pneg %p94
        $region14: #{tpu_custom_call.1} parent=11 // pred_check_branch
          %326 = sbr.rel (%p324) target = $region16
        $region15: #{tpu_custom_call.1} parent=11 // pred_region
          _
        $region16: #{tpu_custom_call.1} parent=11 // pred_fallthru
          _
        // Predicated region
        $region17: #{tpu_custom_call.1} parent=11 // pred_check
          %p327 = pneg %p115
        $region18: #{tpu_custom_call.1} parent=11 // pred_check_branch
          %329 = sbr.rel (%p327) target = $region20
        $region19: #{tpu_custom_call.1} parent=11 // pred_region
          _
        $region20: #{tpu_custom_call.1} parent=11 // pred_fallthru
          _
        // Predicated region
        $region21: #{tpu_custom_call.1} parent=11 // pred_check
          %p330 = pneg %p136
        $region22: #{tpu_custom_call.1} parent=11 // pred_check_branch
          %332 = sbr.rel (%p330) target = $region24
        $region23: #{tpu_custom_call.1} parent=11 // pred_region
          _
        $region24: #{tpu_custom_call.1} parent=11 // pred_fallthru
          _
        // Predicated region
        $region25: #{tpu_custom_call.1} parent=11 // pred_check
          %p333 = pneg %p157
        $region26: #{tpu_custom_call.1} parent=11 // pred_check_branch
          %335 = sbr.rel (%p333) target = $region28
        $region27: #{tpu_custom_call.1} parent=11 // pred_region
          _
        $region28: #{tpu_custom_call.1} parent=11 // pred_fallthru
          _
        // Predicated region
        $region29: #{tpu_custom_call.1} parent=11 // pred_check
          %p336 = pneg %p178
        $region30: #{tpu_custom_call.1} parent=11 // pred_check_branch
          %338 = sbr.rel (%p336) target = $region32
        $region31: #{tpu_custom_call.1} parent=11 // pred_region
          _
        $region32: #{tpu_custom_call.1} parent=11 // pred_fallthru
          _
        // Predicated region
        $region33: #{tpu_custom_call.1} parent=11 // pred_check
          %p339 = pneg %p199
        $region34: #{tpu_custom_call.1} parent=11 // pred_check_branch
          %341 = sbr.rel (%p339) target = $region36
        $region35: #{tpu_custom_call.1} parent=11 // pred_region
          _
        $region36: #{tpu_custom_call.1} parent=11 // pred_fallthru
          _
        // Predicated region
        $region37: #{tpu_custom_call.1} parent=11 // pred_check
          %p342 = pneg %p220
        $region38: #{tpu_custom_call.1} parent=11 // pred_check_branch
          %344 = sbr.rel (%p342) target = $region40
        $region39: #{tpu_custom_call.1} parent=11 // pred_region
          _
        $region40: #{tpu_custom_call.1} parent=11 // pred_fallthru
          _
        // Predicated region
        $region41: #{tpu_custom_call.1} parent=11 // pred_check
          %p345 = pneg %p241
        $region42: #{tpu_custom_call.1} parent=11 // pred_check_branch
          %347 = sbr.rel (%p345) target = $region44
        $region43: #{tpu_custom_call.1} parent=11 // pred_region
          _
        $region44: #{tpu_custom_call.1} parent=11 // pred_fallthru
          _
        // Predicated region
        $region45: #{tpu_custom_call.1} parent=11 // pred_check
          %p348 = pneg %p262
        $region46: #{tpu_custom_call.1} parent=11 // pred_check_branch
          %350 = sbr.rel (%p348) target = $region48
        $region47: #{tpu_custom_call.1} parent=11 // pred_region
          _
        $region48: #{tpu_custom_call.1} parent=11 // pred_fallthru
          _
        // Predicated region
        $region49: #{tpu_custom_call.1} parent=11 // pred_check
          %p351 = pneg %p283
        $region50: #{tpu_custom_call.1} parent=11 // pred_check_branch
          %353 = sbr.rel (%p351) target = $region52
        $region51: #{tpu_custom_call.1} parent=11 // pred_region
          _
        $region52: #{tpu_custom_call.1} parent=11 // pred_fallthru
          _
      $region12: #{tpu_custom_call.1} parent=5 // pred_fallthru
        _
      %p354 = scmp.lt.s32.totalorder %s21, 2
      // Predicated region
      $region53: #{tpu_custom_call.1} parent=5 // pred_check
        %p355 = pneg %p354
      $region54: #{tpu_custom_call.1} parent=5 // pred_check_branch
        %357 = sbr.rel (%p355) target = $region56
      $region55: #{tpu_custom_call.1} parent=5 // pred_region
        // Predicated region
        $region57: #{tpu_custom_call.1} parent=55 // pred_check
          %p358 = pneg %p41
        $region58: #{tpu_custom_call.1} parent=55 // pred_check_branch
          %360 = sbr.rel (%p358) target = $region60
        $region59: #{tpu_custom_call.1} parent=55 // pred_region
          %p361 = scmp.lt.s32.totalorder %s21, 1
          %s362 = scalar_select %p361, %s21, 1
          %s363 = smul.addr %s362, 8
          %s364 = scalar_lea.vmem %s0, %s363
        $region60: #{tpu_custom_call.1} parent=55 // pred_fallthru
          _
        // Predicated region
        $region61: #{tpu_custom_call.1} parent=55 // pred_check
          %p365 = pneg %p67
        $region62: #{tpu_custom_call.1} parent=55 // pred_check_branch
          %367 = sbr.rel (%p365) target = $region64
        $region63: #{tpu_custom_call.1} parent=55 // pred_region
          %p368 = scmp.lt.s32.totalorder %s21, 1
          %s369 = scalar_select %p368, %s21, 1
          %s370 = scalar_lea.vmem %s1, %s369
        $region64: #{tpu_custom_call.1} parent=55 // pred_fallthru
          _
      $region56: #{tpu_custom_call.1} parent=5 // pred_fallthru
        _
      %p371 = scmp.le.s32.totalorder 1, %s21
      %p372 = scmp.lt.s32.totalorder %s21, 3
      %p373 = pnand %p371, %p372
      %p374 = pneg %p373
      // Predicated region
      $region65: #{tpu_custom_call.1} parent=5 // pred_check
        _
      $region66: #{tpu_custom_call.1} parent=5 // pred_check_branch
        %376 = sbr.rel (%p373) target = $region68
      $region67: #{tpu_custom_call.1} parent=5 // pred_region
        %s377 = ssub.s32 %s21, 1
        %p378 = scmp.lt.s32.totalorder %s26, 1
        %s379 = scalar_select %p378, %s26, 1
        %s380 = smul.addr %s379, 8
        %s381 = scalar_lea.vmem %s0, %s380
        %p382 = pneg %p47
        %p383 = pneg %p44
        %p384 = scmp.lt.s32.totalorder %s26, 1
        %s385 = scalar_select %p384, %s26, 1
        %s386 = scalar_lea.vmem %s1, %s385
        %p387 = pneg %p73
        %p388 = pneg %p70
        %p389 = pneg %p94
        %p390 = pneg %p91
        %p391 = pneg %p115
        %p392 = pneg %p112
        %p393 = pneg %p136
        %p394 = pneg %p133
        %p395 = pneg %p157
        %p396 = pneg %p154
        %p397 = pneg %p178
        %p398 = pneg %p175
        %p399 = pneg %p199
        %p400 = pneg %p196
        %p401 = pneg %p220
        %p402 = pneg %p217
        %p403 = pneg %p241
        %p404 = pneg %p238
        %p405 = pneg %p262
        %p406 = pneg %p259
        %p407 = pneg %p283
        %p408 = pneg %p280
        %p409 = pneg %p309
        %p410 = pneg %p306
        %s411 = sand.u32 %s296, 1
        %s412 = scalar_lea.sflag [#allocation3], %s411
        %s413 = sand.u32 %s296, 1
        %s414 = smul.addr %s413, 8
        %s415 = scalar_lea.vmem [#allocation2], %s414
        %p416 = scmp.lt.s32.totalorder %s26, 1
        %s417 = scalar_select %p416, %s26, 1
        %s418 = smul.addr %s417, 8
        %s419 = scalar_lea.vmem %s0, %s418
        %p420 = scmp.lt.s32.totalorder %s26, 1
        %s421 = scalar_select %p420, %s26, 1
        %s422 = scalar_lea.vmem %s1, %s421
        %v423 = vld [vmem:[%s419] sm:$0xff]
        %v424 = vld [vmem:[%s2] sm:$0xff]
        %v425 = vld [vmem:[%s2 + $0x8] sm:$0xff]
        %v426 = vld [vmem:[%s2 + $0x10] sm:$0xff]
        %v427 = vld [vmem:[%s2 + $0x18] sm:$0xff]
        %v428 = vld [vmem:[%s3] sm:$0x1]
        %v430 = vlaneseq
        %v431 = vshrl.u32 %v430, 7
        %v432 = vsub.s32 0, %v431
        %v433 = vrot.slane %v428, %v432
        %vm435 = vcmask 261120
        %v437 = vsel %vm435, %v423, 0
        %439 = vmatprep.subr.mxu0 0.0
        %440 = vmatpush1.msra.mxu0 0.0
        %441 = vmatprep.subr.mxu0 0.0
        %442 = vmatpush1.msra.mxu0 0.0
        %443 = vmatprep.subr.mxu0 0.0
        %444 = vmatpush1.msra.mxu0 0.0
        %445 = vmatprep.subr.mxu0 0.0
        %446 = vmatpush1.msra.mxu0 0.0
        %447 = vmatprep.subr.mxu0 0.0
        %448 = vmatpush1.msra.mxu0 0.0
        %449 = vmatprep.subr.mxu0 0.0
        %450 = vmatpush1.msra.mxu0 0.0
        %451 = vmatprep.subr.mxu0 0.0
        %452 = vmatpush1.msra.mxu0 0.0
        %453 = vmatprep.subr.mxu0 0.0
        %454 = vmatpush1.msra.mxu0 0.0
        %455 = vmatprep.subr.mxu0 0.0
        %456 = vmatpush1.msra.mxu0 0.0
        %457 = vmatprep.subr.mxu0 0.0
        %458 = vmatpush1.msra.mxu0 0.0
        %459 = vmatprep.subr.mxu0 0.0
        %460 = vmatpush1.msra.mxu0 0.0
        %461 = vmatprep.subr.mxu0 0.0
        %462 = vmatpush1.msra.mxu0 0.0
        %463 = vmatprep.subr.mxu0 0.0
        %464 = vmatpush1.msra.mxu0 %v427
        %465 = vmatprep.subr.mxu0 0.0
        %466 = vmatpush1.msra.mxu0 %v426
        %467 = vmatprep.subr.mxu0 0.0
        %468 = vmatpush1.msra.mxu0 %v425
        %469 = vmatprep.subr.mxu0 0.0
        %470 = vmatpush1.msra.mxu0 %v424
        %471 = vmatprep.subr.mxu0 0.0
        %472 = vmatpush2.msra.mxu0 0.0
        %473 = vmatprep.subr.mxu0 0.0
        %474 = vmatpush2.msra.mxu0 0.0
        %475 = vmatprep.subr.mxu0 0.0
        %476 = vmatpush2.msra.mxu0 0.0
        %477 = vmatprep.subr.mxu0 0.0
        %478 = vmatpush2.msra.mxu0 0.0
        %479 = vmatprep.subr.mxu0 0.0
        %480 = vmatpush2.msra.mxu0 0.0
        %481 = vmatprep.subr.mxu0 0.0
        %482 = vmatpush2.msra.mxu0 0.0
        %483 = vmatprep.subr.mxu0 0.0
        %484 = vmatpush2.msra.mxu0 0.0
        %485 = vmatprep.subr.mxu0 0.0
        %486 = vmatpush2.msra.mxu0 0.0
        %487 = vmatprep.subr.mxu0 0.0
        %488 = vmatpush2.msra.mxu0 0.0
        %489 = vmatprep.subr.mxu0 0.0
        %490 = vmatpush2.msra.mxu0 0.0
        %491 = vmatprep.subr.mxu0 0.0
        %492 = vmatpush2.msra.mxu0 0.0
        %493 = vmatprep.subr.mxu0 0.0
        %494 = vmatpush2.msra.mxu0 0.0
        %495 = vmatprep.subr.mxu0 0.0
        %496 = vmatpush2.msra.mxu0 0.0
        %497 = vmatprep.subr.mxu0 0.0
        %498 = vmatpush2.msra.mxu0 0.0
        %499 = vmatprep.subr.mxu0 0.0
        %500 = vmatpush2.msra.mxu0 0.0
        %501 = vmatprep.subr.mxu0 0.0
        %502 = vmatpush2.msra.mxu0 0.0
        %503 = vmatprep.mubr.f32.mxu0 0.0
        %504 = vmatmul.mubr.f32.gmra.mxu0 %v437
        %v505 = vpop.f32.mrf.mxu0
        %v506 = vadd.f32 %v433, %v505
        %v507 = vpop.f32.mrf.mxu0
        %508 = vdwg.mxu0
        %510 = vrot.lane.b32.xlu0 %v506, 120
        %v511 = vpop.permute.xlu0 %510
        %512 = vrot.lane.b32.xlu0 %v506, 112
        %v513 = vpop.permute.xlu0 %512
        %514 = vrot.lane.b32.xlu0 %v506, 104
        %v515 = vpop.permute.xlu0 %514
        %v516 = vld [vmem:[%s422] sm:$0x1]
        %vm517 = vcmp.eq.f32.partialorder %v516, 0.0
        %v518 = vsel %vm517, -1e+09, 0.0
        %519 = vrot.lane.b32.xlu0 %v506, 96
        %v520 = vpop.permute.xlu0 %519
        %vm521 = vcmask 64512
        %v522 = vsel %vm521, %v506, 0
        %v524 = vsel %vm521, %v520, 0
        %526 = vmatprep.subr.mxu0 0.0
        %527 = vmatpush1.xpose.msra.mxu0 0.0
        %528 = vmatprep.subr.mxu0 0.0
        %529 = vmatpush1.xpose.msra.mxu0 0.0
        %530 = vmatprep.subr.mxu0 0.0
        %531 = vmatpush1.xpose.msra.mxu0 0.0
        %532 = vmatprep.subr.mxu0 0.0
        %533 = vmatpush1.xpose.msra.mxu0 0.0
        %534 = vmatprep.subr.mxu0 0.0
        %535 = vmatpush1.xpose.msra.mxu0 0.0
        %536 = vmatprep.subr.mxu0 0.0
        %537 = vmatpush1.xpose.msra.mxu0 0.0
        %538 = vmatprep.subr.mxu0 0.0
        %539 = vmatpush1.xpose.msra.mxu0 0.0
        %540 = vmatprep.subr.mxu0 0.0
        %541 = vmatpush1.xpose.msra.mxu0 0.0
        %542 = vmatprep.subr.mxu0 0.0
        %543 = vmatpush1.xpose.msra.mxu0 0.0
        %544 = vmatprep.subr.mxu0 0.0
        %545 = vmatpush1.xpose.msra.mxu0 0.0
        %546 = vmatprep.subr.mxu0 0.0
        %547 = vmatpush1.xpose.msra.mxu0 0.0
        %548 = vmatprep.subr.mxu0 0.0
        %549 = vmatpush1.xpose.msra.mxu0 0.0
        %550 = vmatprep.subr.mxu0 0.0
        %551 = vmatpush1.xpose.msra.mxu0 0.0
        %552 = vmatprep.subr.mxu0 0.0
        %553 = vmatpush1.xpose.msra.mxu0 0.0
        %554 = vmatprep.subr.mxu0 0.0
        %555 = vmatpush1.xpose.msra.mxu0 0.0
        %556 = vmatprep.subr.mxu0 0.0
        %557 = vmatpush1.xpose.msra.mxu0 %v524
        %558 = vmatprep.subr.mxu0 0.0
        %559 = vmatpush2.xpose.msra.mxu0 0.0
        %560 = vmatprep.subr.mxu0 0.0
        %561 = vmatpush2.xpose.msra.mxu0 0.0
        %562 = vmatprep.subr.mxu0 0.0
        %563 = vmatpush2.xpose.msra.mxu0 0.0
        %564 = vmatprep.subr.mxu0 0.0
        %565 = vmatpush2.xpose.msra.mxu0 0.0
        %566 = vmatprep.subr.mxu0 0.0
        %567 = vmatpush2.xpose.msra.mxu0 0.0
        %568 = vmatprep.subr.mxu0 0.0
        %569 = vmatpush2.xpose.msra.mxu0 0.0
        %570 = vmatprep.subr.mxu0 0.0
        %571 = vmatpush2.xpose.msra.mxu0 0.0
        %572 = vmatprep.subr.mxu0 0.0
        %573 = vmatpush2.xpose.msra.mxu0 0.0
        %574 = vmatprep.subr.mxu0 0.0
        %575 = vmatpush2.xpose.msra.mxu0 0.0
        %576 = vmatprep.subr.mxu0 0.0
        %577 = vmatpush2.xpose.msra.mxu0 0.0
        %578 = vmatprep.subr.mxu0 0.0
        %579 = vmatpush2.xpose.msra.mxu0 0.0
        %580 = vmatprep.subr.mxu0 0.0
        %581 = vmatpush2.xpose.msra.mxu0 0.0
        %582 = vmatprep.subr.mxu0 0.0
        %583 = vmatpush2.xpose.msra.mxu0 0.0
        %584 = vmatprep.subr.mxu0 0.0
        %585 = vmatpush2.xpose.msra.mxu0 0.0
        %586 = vmatprep.subr.mxu0 0.0
        %587 = vmatpush2.xpose.msra.mxu0 0.0
        %588 = vmatprep.subr.mxu0 0.0
        %589 = vmatpush2.xpose.msra.mxu0 0.0
        %590 = vmatprep.mubr.f32.mxu0 0.0
        %591 = vmatmul.mubr.f32.gmra.mxu0 %v522
        %v592 = vpop.f32.mrf.mxu0
        %v593 = vadd.f32 0.0, %v592
        %v594 = vpop.f32.mrf.mxu0
        %595 = vdwg.mxu0
        %596 = vrot.lane.b32.xlu0 %v511, 96
        %v597 = vpop.permute.xlu0 %596
        %v598 = vsel %vm521, %v511, 0
        %v600 = vsel %vm521, %v597, 0
        %602 = vmatprep.subr.mxu0 0.0
        %603 = vmatpush1.xpose.msra.mxu0 0.0
        %604 = vmatprep.subr.mxu0 0.0
        %605 = vmatpush1.xpose.msra.mxu0 0.0
        %606 = vmatprep.subr.mxu0 0.0
        %607 = vmatpush1.xpose.msra.mxu0 0.0
        %608 = vmatprep.subr.mxu0 0.0
        %609 = vmatpush1.xpose.msra.mxu0 0.0
        %610 = vmatprep.subr.mxu0 0.0
        %611 = vmatpush1.xpose.msra.mxu0 0.0
        %612 = vmatprep.subr.mxu0 0.0
        %613 = vmatpush1.xpose.msra.mxu0 0.0
        %614 = vmatprep.subr.mxu0 0.0
        %615 = vmatpush1.xpose.msra.mxu0 0.0
        %616 = vmatprep.subr.mxu0 0.0
        %617 = vmatpush1.xpose.msra.mxu0 0.0
        %618 = vmatprep.subr.mxu0 0.0
        %619 = vmatpush1.xpose.msra.mxu0 0.0
        %620 = vmatprep.subr.mxu0 0.0
        %621 = vmatpush1.xpose.msra.mxu0 0.0
        %622 = vmatprep.subr.mxu0 0.0
        %623 = vmatpush1.xpose.msra.mxu0 0.0
        %624 = vmatprep.subr.mxu0 0.0
        %625 = vmatpush1.xpose.msra.mxu0 0.0
        %626 = vmatprep.subr.mxu0 0.0
        %627 = vmatpush1.xpose.msra.mxu0 0.0
        %628 = vmatprep.subr.mxu0 0.0
        %629 = vmatpush1.xpose.msra.mxu0 0.0
        %630 = vmatprep.subr.mxu0 0.0
        %631 = vmatpush1.xpose.msra.mxu0 0.0
        %632 = vmatprep.subr.mxu0 0.0
        %633 = vmatpush1.xpose.msra.mxu0 %v600
        %634 = vmatprep.subr.mxu0 0.0
        %635 = vmatpush2.xpose.msra.mxu0 0.0
        %636 = vmatprep.subr.mxu0 0.0
        %637 = vmatpush2.xpose.msra.mxu0 0.0
        %638 = vmatprep.subr.mxu0 0.0
        %639 = vmatpush2.xpose.msra.mxu0 0.0
        %640 = vmatprep.subr.mxu0 0.0
        %641 = vmatpush2.xpose.msra.mxu0 0.0
        %642 = vmatprep.subr.mxu0 0.0
        %643 = vmatpush2.xpose.msra.mxu0 0.0
        %644 = vmatprep.subr.mxu0 0.0
        %645 = vmatpush2.xpose.msra.mxu0 0.0
        %646 = vmatprep.subr.mxu0 0.0
        %647 = vmatpush2.xpose.msra.mxu0 0.0
        %648 = vmatprep.subr.mxu0 0.0
        %649 = vmatpush2.xpose.msra.mxu0 0.0
        %650 = vmatprep.subr.mxu0 0.0
        %651 = vmatpush2.xpose.msra.mxu0 0.0
        %652 = vmatprep.subr.mxu0 0.0
        %653 = vmatpush2.xpose.msra.mxu0 0.0
        %654 = vmatprep.subr.mxu0 0.0
        %655 = vmatpush2.xpose.msra.mxu0 0.0
        %656 = vmatprep.subr.mxu0 0.0
        %657 = vmatpush2.xpose.msra.mxu0 0.0
        %658 = vmatprep.subr.mxu0 0.0
        %659 = vmatpush2.xpose.msra.mxu0 0.0
        %660 = vmatprep.subr.mxu0 0.0
        %661 = vmatpush2.xpose.msra.mxu0 0.0
        %662 = vmatprep.subr.mxu0 0.0
        %663 = vmatpush2.xpose.msra.mxu0 0.0
        %664 = vmatprep.subr.mxu0 0.0
        %665 = vmatpush2.xpose.msra.mxu0 0.0
        %666 = vmatprep.mubr.f32.mxu0 0.0
        %667 = vmatmul.mubr.f32.gmra.mxu0 %v598
        %v668 = vpop.f32.mrf.mxu0
        %v669 = vadd.f32 0.0, %v668
        %v670 = vpop.f32.mrf.mxu0
        %671 = vdwg.mxu0
        %672 = vrot.lane.b32.xlu0 %v513, 96
        %v673 = vpop.permute.xlu0 %672
        %v674 = vsel %vm521, %v513, 0
        %v676 = vsel %vm521, %v673, 0
        %678 = vmatprep.subr.mxu0 0.0
        %679 = vmatpush1.xpose.msra.mxu0 0.0
        %680 = vmatprep.subr.mxu0 0.0
        %681 = vmatpush1.xpose.msra.mxu0 0.0
        %682 = vmatprep.subr.mxu0 0.0
        %683 = vmatpush1.xpose.msra.mxu0 0.0
        %684 = vmatprep.subr.mxu0 0.0
        %685 = vmatpush1.xpose.msra.mxu0 0.0
        %686 = vmatprep.subr.mxu0 0.0
        %687 = vmatpush1.xpose.msra.mxu0 0.0
        %688 = vmatprep.subr.mxu0 0.0
        %689 = vmatpush1.xpose.msra.mxu0 0.0
        %690 = vmatprep.subr.mxu0 0.0
        %691 = vmatpush1.xpose.msra.mxu0 0.0
        %692 = vmatprep.subr.mxu0 0.0
        %693 = vmatpush1.xpose.msra.mxu0 0.0
        %694 = vmatprep.subr.mxu0 0.0
        %695 = vmatpush1.xpose.msra.mxu0 0.0
        %696 = vmatprep.subr.mxu0 0.0
        %697 = vmatpush1.xpose.msra.mxu0 0.0
        %698 = vmatprep.subr.mxu0 0.0
        %699 = vmatpush1.xpose.msra.mxu0 0.0
        %700 = vmatprep.subr.mxu0 0.0
        %701 = vmatpush1.xpose.msra.mxu0 0.0
        %702 = vmatprep.subr.mxu0 0.0
        %703 = vmatpush1.xpose.msra.mxu0 0.0
        %704 = vmatprep.subr.mxu0 0.0
        %705 = vmatpush1.xpose.msra.mxu0 0.0
        %706 = vmatprep.subr.mxu0 0.0
        %707 = vmatpush1.xpose.msra.mxu0 0.0
        %708 = vmatprep.subr.mxu0 0.0
        %709 = vmatpush1.xpose.msra.mxu0 %v676
        %710 = vmatprep.subr.mxu0 0.0
        %711 = vmatpush2.xpose.msra.mxu0 0.0
        %712 = vmatprep.subr.mxu0 0.0
        %713 = vmatpush2.xpose.msra.mxu0 0.0
        %714 = vmatprep.subr.mxu0 0.0
        %715 = vmatpush2.xpose.msra.mxu0 0.0
        %716 = vmatprep.subr.mxu0 0.0
        %717 = vmatpush2.xpose.msra.mxu0 0.0
        %718 = vmatprep.subr.mxu0 0.0
        %719 = vmatpush2.xpose.msra.mxu0 0.0
        %720 = vmatprep.subr.mxu0 0.0
        %721 = vmatpush2.xpose.msra.mxu0 0.0
        %722 = vmatprep.subr.mxu0 0.0
        %723 = vmatpush2.xpose.msra.mxu0 0.0
        %724 = vmatprep.subr.mxu0 0.0
        %725 = vmatpush2.xpose.msra.mxu0 0.0
        %726 = vmatprep.subr.mxu0 0.0
        %727 = vmatpush2.xpose.msra.mxu0 0.0
        %728 = vmatprep.subr.mxu0 0.0
        %729 = vmatpush2.xpose.msra.mxu0 0.0
        %730 = vmatprep.subr.mxu0 0.0
        %731 = vmatpush2.xpose.msra.mxu0 0.0
        %732 = vmatprep.subr.mxu0 0.0
        %733 = vmatpush2.xpose.msra.mxu0 0.0
        %734 = vmatprep.subr.mxu0 0.0
        %735 = vmatpush2.xpose.msra.mxu0 0.0
        %736 = vmatprep.subr.mxu0 0.0
        %737 = vmatpush2.xpose.msra.mxu0 0.0
        %738 = vmatprep.subr.mxu0 0.0
        %739 = vmatpush2.xpose.msra.mxu0 0.0
        %740 = vmatprep.subr.mxu0 0.0
        %741 = vmatpush2.xpose.msra.mxu0 0.0
        %742 = vmatprep.mubr.f32.mxu0 0.0
        %743 = vmatmul.mubr.f32.gmra.mxu0 %v674
        %v744 = vpop.f32.mrf.mxu0
        %v745 = vadd.f32 0.0, %v744
        %v746 = vpop.f32.mrf.mxu0
        %747 = vdwg.mxu0
        %748 = vrot.lane.b32.xlu0 %v515, 96
        %v749 = vpop.permute.xlu0 %748
        %v750 = vsel %vm521, %v515, 0
        %v752 = vsel %vm521, %v749, 0
        %754 = vmatprep.subr.mxu0 0.0
        %755 = vmatpush1.xpose.msra.mxu0 0.0
        %756 = vmatprep.subr.mxu0 0.0
        %757 = vmatpush1.xpose.msra.mxu0 0.0
        %758 = vmatprep.subr.mxu0 0.0
        %759 = vmatpush1.xpose.msra.mxu0 0.0
        %760 = vmatprep.subr.mxu0 0.0
        %761 = vmatpush1.xpose.msra.mxu0 0.0
        %762 = vmatprep.subr.mxu0 0.0
        %763 = vmatpush1.xpose.msra.mxu0 0.0
        %764 = vmatprep.subr.mxu0 0.0
        %765 = vmatpush1.xpose.msra.mxu0 0.0
        %766 = vmatprep.subr.mxu0 0.0
        %767 = vmatpush1.xpose.msra.mxu0 0.0
        %768 = vmatprep.subr.mxu0 0.0
        %769 = vmatpush1.xpose.msra.mxu0 0.0
        %770 = vmatprep.subr.mxu0 0.0
        %771 = vmatpush1.xpose.msra.mxu0 0.0
        %772 = vmatprep.subr.mxu0 0.0
        %773 = vmatpush1.xpose.msra.mxu0 0.0
        %774 = vmatprep.subr.mxu0 0.0
        %775 = vmatpush1.xpose.msra.mxu0 0.0
        %776 = vmatprep.subr.mxu0 0.0
        %777 = vmatpush1.xpose.msra.mxu0 0.0
        %778 = vmatprep.subr.mxu0 0.0
        %779 = vmatpush1.xpose.msra.mxu0 0.0
        %780 = vmatprep.subr.mxu0 0.0
        %781 = vmatpush1.xpose.msra.mxu0 0.0
        %782 = vmatprep.subr.mxu0 0.0
        %783 = vmatpush1.xpose.msra.mxu0 0.0
        %784 = vmatprep.subr.mxu0 0.0
        %785 = vmatpush1.xpose.msra.mxu0 %v752
        %786 = vmatprep.subr.mxu0 0.0
        %787 = vmatpush2.xpose.msra.mxu0 0.0
        %788 = vmatprep.subr.mxu0 0.0
        %789 = vmatpush2.xpose.msra.mxu0 0.0
        %790 = vmatprep.subr.mxu0 0.0
        %791 = vmatpush2.xpose.msra.mxu0 0.0
        %792 = vmatprep.subr.mxu0 0.0
        %793 = vmatpush2.xpose.msra.mxu0 0.0
        %794 = vmatprep.subr.mxu0 0.0
        %795 = vmatpush2.xpose.msra.mxu0 0.0
        %796 = vmatprep.subr.mxu0 0.0
        %797 = vmatpush2.xpose.msra.mxu0 0.0
        %798 = vmatprep.subr.mxu0 0.0
        %799 = vmatpush2.xpose.msra.mxu0 0.0
        %800 = vmatprep.subr.mxu0 0.0
        %801 = vmatpush2.xpose.msra.mxu0 0.0
        %802 = vmatprep.subr.mxu0 0.0
        %803 = vmatpush2.xpose.msra.mxu0 0.0
        %804 = vmatprep.subr.mxu0 0.0
        %805 = vmatpush2.xpose.msra.mxu0 0.0
        %806 = vmatprep.subr.mxu0 0.0
        %807 = vmatpush2.xpose.msra.mxu0 0.0
        %808 = vmatprep.subr.mxu0 0.0
        %809 = vmatpush2.xpose.msra.mxu0 0.0
        %810 = vmatprep.subr.mxu0 0.0
        %811 = vmatpush2.xpose.msra.mxu0 0.0
        %812 = vmatprep.subr.mxu0 0.0
        %813 = vmatpush2.xpose.msra.mxu0 0.0
        %814 = vmatprep.subr.mxu0 0.0
        %815 = vmatpush2.xpose.msra.mxu0 0.0
        %816 = vmatprep.subr.mxu0 0.0
        %817 = vmatpush2.xpose.msra.mxu0 0.0
        %818 = vmatprep.mubr.f32.mxu0 0.0
        %819 = vmatmul.mubr.f32.gmra.mxu0 %v750
        %v820 = vpop.f32.mrf.mxu0
        %v821 = vadd.f32 0.0, %v820
        %v822 = vpop.f32.mrf.mxu0
        %823 = vdwg.mxu0
        %v824 = vmul.f32 %v593, 0.35355338
        %v825 = vmul.f32 %v669, 0.35355338
        %v826 = vmul.f32 %v745, 0.35355338
        %v827 = vmul.f32 %v821, 0.35355338
        %v829 = vlaneseq
        %v830 = vshrl.u32 %v829, 7
        %v831 = vsub.s32 0, %v830
        %v832 = vrot.slane %v518, %v831
        %v834 = vadd.f32 %v824, %v832
        %v835 = vadd.f32 %v825, %v832
        %v836 = vadd.f32 %v826, %v832
        %v837 = vadd.f32 %v827, %v832
        %v838 = vsel %vm521, %v834, -inf
        %839 = vmax.xlane.f32.xlu0 %v838
        %v840 = vpop.xlane.xlu0 %839
        %v841 = vsel %vm521, %v835, -inf
        %842 = vmax.xlane.f32.xlu0 %v841
        %v843 = vpop.xlane.xlu0 %842
        %v844 = vsel %vm521, %v836, -inf
        %845 = vmax.xlane.f32.xlu0 %v844
        %v846 = vpop.xlane.xlu0 %845
        %v847 = vsel %vm521, %v837, -inf
        %848 = vmax.xlane.f32.xlu0 %v847
        %v849 = vpop.xlane.xlu0 %848
        %v850 = vsub.f32 %v834, %v840
        %v851 = vsub.f32 %v835, %v843
        %v852 = vsub.f32 %v836, %v846
        %v853 = vsub.f32 %v837, %v849
        %v854 = vmul.f32 %v850, 1.442695
        %v855 = vpow.pop %v854
        %v856 = vmul.f32 %v851, 1.442695
        %v857 = vpow.pop %v856
        %v858 = vmul.f32 %v852, 1.442695
        %v859 = vpow.pop %v858
        %v860 = vmul.f32 %v853, 1.442695
        %v861 = vpow.pop %v860
        %v862 = vsel %vm521, %v855, 0.0
        %863 = vadd.xlane.f32.xlu0 %v862
        %v864 = vpop.xlane.xlu0 %863
        %v865 = vsel %vm521, %v857, 0.0
        %866 = vadd.xlane.f32.xlu0 %v865
        %v867 = vpop.xlane.xlu0 %866
        %v868 = vsel %vm521, %v859, 0.0
        %869 = vadd.xlane.f32.xlu0 %v868
        %v870 = vpop.xlane.xlu0 %869
        %v871 = vsel %vm521, %v861, 0.0
        %872 = vadd.xlane.f32.xlu0 %v871
        %v873 = vpop.xlane.xlu0 %872
        %v874 = vrcp.pop %v864
        %v875 = vrcp.pop %v867
        %v876 = vrcp.pop %v870
        %v877 = vrcp.pop %v873
        %v878 = vmul.f32 %v855, %v874
        %v879 = vmul.f32 %v857, %v875
        %v880 = vmul.f32 %v859, %v876
        %v881 = vmul.f32 %v861, %v877
        %882 = vrot.lane.b32.xlu0 %v506, 64
        %v883 = vpop.permute.xlu0 %882
        %v886 = vsel %vm521, %v878, 0
        %888 = vmatprep.subr.mxu0 0.0
        %889 = vmatpush1.msra.mxu0 0.0
        %890 = vmatprep.subr.mxu0 0.0
        %891 = vmatpush1.msra.mxu0 0.0
        %892 = vmatprep.subr.mxu0 0.0
        %893 = vmatpush1.msra.mxu0 0.0
        %894 = vmatprep.subr.mxu0 0.0
        %895 = vmatpush1.msra.mxu0 0.0
        %896 = vmatprep.subr.mxu0 0.0
        %897 = vmatpush1.msra.mxu0 0.0
        %898 = vmatprep.subr.mxu0 0.0
        %899 = vmatpush1.msra.mxu0 0.0
        %900 = vmatprep.subr.mxu0 0.0
        %901 = vmatpush1.msra.mxu0 0.0
        %902 = vmatprep.subr.mxu0 0.0
        %903 = vmatpush1.msra.mxu0 0.0
        %904 = vmatprep.subr.mxu0 0.0
        %905 = vmatpush1.msra.mxu0 0.0
        %906 = vmatprep.subr.mxu0 0.0
        %907 = vmatpush1.msra.mxu0 0.0
        %908 = vmatprep.subr.mxu0 0.0
        %909 = vmatpush1.msra.mxu0 0.0
        %910 = vmatprep.subr.mxu0 0.0
        %911 = vmatpush1.msra.mxu0 0.0
        %912 = vmatprep.subr.mxu0 0.0
        %913 = vmatpush1.msra.mxu0 0.0
        %914 = vmatprep.subr.mxu0 0.0
        %915 = vmatpush1.msra.mxu0 0.0
        %916 = vmatprep.subr.mxu0 0.0
        %917 = vmatpush1.msra.mxu0 0.0
        %918 = vmatprep.subr.mxu0 0.0
        %919 = vmatpush1.msra.mxu0 %v883
        %920 = vmatprep.subr.mxu0 0.0
        %921 = vmatpush2.msra.mxu0 0.0
        %922 = vmatprep.subr.mxu0 0.0
        %923 = vmatpush2.msra.mxu0 0.0
        %924 = vmatprep.subr.mxu0 0.0
        %925 = vmatpush2.msra.mxu0 0.0
        %926 = vmatprep.subr.mxu0 0.0
        %927 = vmatpush2.msra.mxu0 0.0
        %928 = vmatprep.subr.mxu0 0.0
        %929 = vmatpush2.msra.mxu0 0.0
        %930 = vmatprep.subr.mxu0 0.0
        %931 = vmatpush2.msra.mxu0 0.0
        %932 = vmatprep.subr.mxu0 0.0
        %933 = vmatpush2.msra.mxu0 0.0
        %934 = vmatprep.subr.mxu0 0.0
        %935 = vmatpush2.msra.mxu0 0.0
        %936 = vmatprep.subr.mxu0 0.0
        %937 = vmatpush2.msra.mxu0 0.0
        %938 = vmatprep.subr.mxu0 0.0
        %939 = vmatpush2.msra.mxu0 0.0
        %940 = vmatprep.subr.mxu0 0.0
        %941 = vmatpush2.msra.mxu0 0.0
        %942 = vmatprep.subr.mxu0 0.0
        %943 = vmatpush2.msra.mxu0 0.0
        %944 = vmatprep.subr.mxu0 0.0
        %945 = vmatpush2.msra.mxu0 0.0
        %946 = vmatprep.subr.mxu0 0.0
        %947 = vmatpush2.msra.mxu0 0.0
        %948 = vmatprep.subr.mxu0 0.0
        %949 = vmatpush2.msra.mxu0 0.0
        %950 = vmatprep.subr.mxu0 0.0
        %951 = vmatpush2.msra.mxu0 0.0
        %952 = vmatprep.mubr.f32.mxu0 0.0
        %953 = vmatmul.mubr.f32.gmra.mxu0 %v886
        %v954 = vpop.f32.mrf.mxu0
        %v955 = vadd.f32 0.0, %v954
        %v956 = vpop.f32.mrf.mxu0
        %957 = vdwg.mxu0
        %958 = vrot.lane.b32.xlu0 %v511, 64
        %v959 = vpop.permute.xlu0 %958
        %v962 = vsel %vm521, %v879, 0
        %964 = vmatprep.subr.mxu0 0.0
        %965 = vmatpush1.msra.mxu0 0.0
        %966 = vmatprep.subr.mxu0 0.0
        %967 = vmatpush1.msra.mxu0 0.0
        %968 = vmatprep.subr.mxu0 0.0
        %969 = vmatpush1.msra.mxu0 0.0
        %970 = vmatprep.subr.mxu0 0.0
        %971 = vmatpush1.msra.mxu0 0.0
        %972 = vmatprep.subr.mxu0 0.0
        %973 = vmatpush1.msra.mxu0 0.0
        %974 = vmatprep.subr.mxu0 0.0
        %975 = vmatpush1.msra.mxu0 0.0
        %976 = vmatprep.subr.mxu0 0.0
        %977 = vmatpush1.msra.mxu0 0.0
        %978 = vmatprep.subr.mxu0 0.0
        %979 = vmatpush1.msra.mxu0 0.0
        %980 = vmatprep.subr.mxu0 0.0
        %981 = vmatpush1.msra.mxu0 0.0
        %982 = vmatprep.subr.mxu0 0.0
        %983 = vmatpush1.msra.mxu0 0.0
        %984 = vmatprep.subr.mxu0 0.0
        %985 = vmatpush1.msra.mxu0 0.0
        %986 = vmatprep.subr.mxu0 0.0
        %987 = vmatpush1.msra.mxu0 0.0
        %988 = vmatprep.subr.mxu0 0.0
        %989 = vmatpush1.msra.mxu0 0.0
        %990 = vmatprep.subr.mxu0 0.0
        %991 = vmatpush1.msra.mxu0 0.0
        %992 = vmatprep.subr.mxu0 0.0
        %993 = vmatpush1.msra.mxu0 0.0
        %994 = vmatprep.subr.mxu0 0.0
        %995 = vmatpush1.msra.mxu0 %v959
        %996 = vmatprep.subr.mxu0 0.0
        %997 = vmatpush2.msra.mxu0 0.0
        %998 = vmatprep.subr.mxu0 0.0
        %999 = vmatpush2.msra.mxu0 0.0
        %1000 = vmatprep.subr.mxu0 0.0
        %1001 = vmatpush2.msra.mxu0 0.0
        %1002 = vmatprep.subr.mxu0 0.0
        %1003 = vmatpush2.msra.mxu0 0.0
        %1004 = vmatprep.subr.mxu0 0.0
        %1005 = vmatpush2.msra.mxu0 0.0
        %1006 = vmatprep.subr.mxu0 0.0
        %1007 = vmatpush2.msra.mxu0 0.0
        %1008 = vmatprep.subr.mxu0 0.0
        %1009 = vmatpush2.msra.mxu0 0.0
        %1010 = vmatprep.subr.mxu0 0.0
        %1011 = vmatpush2.msra.mxu0 0.0
        %1012 = vmatprep.subr.mxu0 0.0
        %1013 = vmatpush2.msra.mxu0 0.0
        %1014 = vmatprep.subr.mxu0 0.0
        %1015 = vmatpush2.msra.mxu0 0.0
        %1016 = vmatprep.subr.mxu0 0.0
        %1017 = vmatpush2.msra.mxu0 0.0
        %1018 = vmatprep.subr.mxu0 0.0
        %1019 = vmatpush2.msra.mxu0 0.0
        %1020 = vmatprep.subr.mxu0 0.0
        %1021 = vmatpush2.msra.mxu0 0.0
        %1022 = vmatprep.subr.mxu0 0.0
        %1023 = vmatpush2.msra.mxu0 0.0
        %1024 = vmatprep.subr.mxu0 0.0
        %1025 = vmatpush2.msra.mxu0 0.0
        %1026 = vmatprep.subr.mxu0 0.0
        %1027 = vmatpush2.msra.mxu0 0.0
        %1028 = vmatprep.mubr.f32.mxu0 0.0
        %1029 = vmatmul.mubr.f32.gmra.mxu0 %v962
        %v1030 = vpop.f32.mrf.mxu0
        %v1031 = vadd.f32 0.0, %v1030
        %v1032 = vpop.f32.mrf.mxu0
        %1033 = vdwg.mxu0
        %1034 = vrot.lane.b32.xlu0 %v513, 64
        %v1035 = vpop.permute.xlu0 %1034
        %v1038 = vsel %vm521, %v880, 0
        %1040 = vmatprep.subr.mxu0 0.0
        %1041 = vmatpush1.msra.mxu0 0.0
        %1042 = vmatprep.subr.mxu0 0.0
        %1043 = vmatpush1.msra.mxu0 0.0
        %1044 = vmatprep.subr.mxu0 0.0
        %1045 = vmatpush1.msra.mxu0 0.0
        %1046 = vmatprep.subr.mxu0 0.0
        %1047 = vmatpush1.msra.mxu0 0.0
        %1048 = vmatprep.subr.mxu0 0.0
        %1049 = vmatpush1.msra.mxu0 0.0
        %1050 = vmatprep.subr.mxu0 0.0
        %1051 = vmatpush1.msra.mxu0 0.0
        %1052 = vmatprep.subr.mxu0 0.0
        %1053 = vmatpush1.msra.mxu0 0.0
        %1054 = vmatprep.subr.mxu0 0.0
        %1055 = vmatpush1.msra.mxu0 0.0
        %1056 = vmatprep.subr.mxu0 0.0
        %1057 = vmatpush1.msra.mxu0 0.0
        %1058 = vmatprep.subr.mxu0 0.0
        %1059 = vmatpush1.msra.mxu0 0.0
        %1060 = vmatprep.subr.mxu0 0.0
        %1061 = vmatpush1.msra.mxu0 0.0
        %1062 = vmatprep.subr.mxu0 0.0
        %1063 = vmatpush1.msra.mxu0 0.0
        %1064 = vmatprep.subr.mxu0 0.0
        %1065 = vmatpush1.msra.mxu0 0.0
        %1066 = vmatprep.subr.mxu0 0.0
        %1067 = vmatpush1.msra.mxu0 0.0
        %1068 = vmatprep.subr.mxu0 0.0
        %1069 = vmatpush1.msra.mxu0 0.0
        %1070 = vmatprep.subr.mxu0 0.0
        %1071 = vmatpush1.msra.mxu0 %v1035
        %1072 = vmatprep.subr.mxu0 0.0
        %1073 = vmatpush2.msra.mxu0 0.0
        %1074 = vmatprep.subr.mxu0 0.0
        %1075 = vmatpush2.msra.mxu0 0.0
        %1076 = vmatprep.subr.mxu0 0.0
        %1077 = vmatpush2.msra.mxu0 0.0
        %1078 = vmatprep.subr.mxu0 0.0
        %1079 = vmatpush2.msra.mxu0 0.0
        %1080 = vmatprep.subr.mxu0 0.0
        %1081 = vmatpush2.msra.mxu0 0.0
        %1082 = vmatprep.subr.mxu0 0.0
        %1083 = vmatpush2.msra.mxu0 0.0
        %1084 = vmatprep.subr.mxu0 0.0
        %1085 = vmatpush2.msra.mxu0 0.0
        %1086 = vmatprep.subr.mxu0 0.0
        %1087 = vmatpush2.msra.mxu0 0.0
        %1088 = vmatprep.subr.mxu0 0.0
        %1089 = vmatpush2.msra.mxu0 0.0
        %1090 = vmatprep.subr.mxu0 0.0
        %1091 = vmatpush2.msra.mxu0 0.0
        %1092 = vmatprep.subr.mxu0 0.0
        %1093 = vmatpush2.msra.mxu0 0.0
        %1094 = vmatprep.subr.mxu0 0.0
        %1095 = vmatpush2.msra.mxu0 0.0
        %1096 = vmatprep.subr.mxu0 0.0
        %1097 = vmatpush2.msra.mxu0 0.0
        %1098 = vmatprep.subr.mxu0 0.0
        %1099 = vmatpush2.msra.mxu0 0.0
        %1100 = vmatprep.subr.mxu0 0.0
        %1101 = vmatpush2.msra.mxu0 0.0
        %1102 = vmatprep.subr.mxu0 0.0
        %1103 = vmatpush2.msra.mxu0 0.0
        %1104 = vmatprep.mubr.f32.mxu0 0.0
        %1105 = vmatmul.mubr.f32.gmra.mxu0 %v1038
        %v1106 = vpop.f32.mrf.mxu0
        %v1107 = vadd.f32 0.0, %v1106
        %v1108 = vpop.f32.mrf.mxu0
        %1109 = vdwg.mxu0
        %1110 = vrot.lane.b32.xlu0 %v515, 64
        %v1111 = vpop.permute.xlu0 %1110
        %v1114 = vsel %vm521, %v881, 0
        %1116 = vmatprep.subr.mxu0 0.0
        %1117 = vmatpush1.msra.mxu0 0.0
        %1118 = vmatprep.subr.mxu0 0.0
        %1119 = vmatpush1.msra.mxu0 0.0
        %1120 = vmatprep.subr.mxu0 0.0
        %1121 = vmatpush1.msra.mxu0 0.0
        %1122 = vmatprep.subr.mxu0 0.0
        %1123 = vmatpush1.msra.mxu0 0.0
        %1124 = vmatprep.subr.mxu0 0.0
        %1125 = vmatpush1.msra.mxu0 0.0
        %1126 = vmatprep.subr.mxu0 0.0
        %1127 = vmatpush1.msra.mxu0 0.0
        %1128 = vmatprep.subr.mxu0 0.0
        %1129 = vmatpush1.msra.mxu0 0.0
        %1130 = vmatprep.subr.mxu0 0.0
        %1131 = vmatpush1.msra.mxu0 0.0
        %1132 = vmatprep.subr.mxu0 0.0
        %1133 = vmatpush1.msra.mxu0 0.0
        %1134 = vmatprep.subr.mxu0 0.0
        %1135 = vmatpush1.msra.mxu0 0.0
        %1136 = vmatprep.subr.mxu0 0.0
        %1137 = vmatpush1.msra.mxu0 0.0
        %1138 = vmatprep.subr.mxu0 0.0
        %1139 = vmatpush1.msra.mxu0 0.0
        %1140 = vmatprep.subr.mxu0 0.0
        %1141 = vmatpush1.msra.mxu0 0.0
        %1142 = vmatprep.subr.mxu0 0.0
        %1143 = vmatpush1.msra.mxu0 0.0
        %1144 = vmatprep.subr.mxu0 0.0
        %1145 = vmatpush1.msra.mxu0 0.0
        %1146 = vmatprep.subr.mxu0 0.0
        %1147 = vmatpush1.msra.mxu0 %v1111
        %1148 = vmatprep.subr.mxu0 0.0
        %1149 = vmatpush2.msra.mxu0 0.0
        %1150 = vmatprep.subr.mxu0 0.0
        %1151 = vmatpush2.msra.mxu0 0.0
        %1152 = vmatprep.subr.mxu0 0.0
        %1153 = vmatpush2.msra.mxu0 0.0
        %1154 = vmatprep.subr.mxu0 0.0
        %1155 = vmatpush2.msra.mxu0 0.0
        %1156 = vmatprep.subr.mxu0 0.0
        %1157 = vmatpush2.msra.mxu0 0.0
        %1158 = vmatprep.subr.mxu0 0.0
        %1159 = vmatpush2.msra.mxu0 0.0
        %1160 = vmatprep.subr.mxu0 0.0
        %1161 = vmatpush2.msra.mxu0 0.0
        %1162 = vmatprep.subr.mxu0 0.0
        %1163 = vmatpush2.msra.mxu0 0.0
        %1164 = vmatprep.subr.mxu0 0.0
        %1165 = vmatpush2.msra.mxu0 0.0
        %1166 = vmatprep.subr.mxu0 0.0
        %1167 = vmatpush2.msra.mxu0 0.0
        %1168 = vmatprep.subr.mxu0 0.0
        %1169 = vmatpush2.msra.mxu0 0.0
        %1170 = vmatprep.subr.mxu0 0.0
        %1171 = vmatpush2.msra.mxu0 0.0
        %1172 = vmatprep.subr.mxu0 0.0
        %1173 = vmatpush2.msra.mxu0 0.0
        %1174 = vmatprep.subr.mxu0 0.0
        %1175 = vmatpush2.msra.mxu0 0.0
        %1176 = vmatprep.subr.mxu0 0.0
        %1177 = vmatpush2.msra.mxu0 0.0
        %1178 = vmatprep.subr.mxu0 0.0
        %1179 = vmatpush2.msra.mxu0 0.0
        %1180 = vmatprep.mubr.f32.mxu0 0.0
        %1181 = vmatmul.mubr.f32.gmra.mxu0 %v1114
        %v1182 = vpop.f32.mrf.mxu0
        %v1183 = vadd.f32 0.0, %v1182
        %v1184 = vpop.f32.mrf.mxu0
        %1185 = vdwg.mxu0
        %v1186 = vld [vmem:[%s4] sm:$0xff]
        %v1187 = vld [vmem:[%s4 + $0x8] sm:$0xff]
        %v1188 = vld [vmem:[%s4 + $0x10] sm:$0xff]
        %v1189 = vld [vmem:[%s4 + $0x18] sm:$0xff]
        %v1191 = vsel %vm521, %v955, 0
        %1193 = vmatprep.subr.mxu0 0.0
        %1194 = vmatpush1.msra.mxu0 0.0
        %1195 = vmatprep.subr.mxu0 0.0
        %1196 = vmatpush1.msra.mxu0 0.0
        %1197 = vmatprep.subr.mxu0 0.0
        %1198 = vmatpush1.msra.mxu0 0.0
        %1199 = vmatprep.subr.mxu0 0.0
        %1200 = vmatpush1.msra.mxu0 0.0
        %1201 = vmatprep.subr.mxu0 0.0
        %1202 = vmatpush1.msra.mxu0 0.0
        %1203 = vmatprep.subr.mxu0 0.0
        %1204 = vmatpush1.msra.mxu0 0.0
        %1205 = vmatprep.subr.mxu0 0.0
        %1206 = vmatpush1.msra.mxu0 0.0
        %1207 = vmatprep.subr.mxu0 0.0
        %1208 = vmatpush1.msra.mxu0 0.0
        %1209 = vmatprep.subr.mxu0 0.0
        %1210 = vmatpush1.msra.mxu0 0.0
        %1211 = vmatprep.subr.mxu0 0.0
        %1212 = vmatpush1.msra.mxu0 0.0
        %1213 = vmatprep.subr.mxu0 0.0
        %1214 = vmatpush1.msra.mxu0 0.0
        %1215 = vmatprep.subr.mxu0 0.0
        %1216 = vmatpush1.msra.mxu0 0.0
        %1217 = vmatprep.subr.mxu0 0.0
        %1218 = vmatpush1.msra.mxu0 0.0
        %1219 = vmatprep.subr.mxu0 0.0
        %1220 = vmatpush1.msra.mxu0 0.0
        %1221 = vmatprep.subr.mxu0 0.0
        %1222 = vmatpush1.msra.mxu0 0.0
        %1223 = vmatprep.subr.mxu0 0.0
        %1224 = vmatpush1.msra.mxu0 %v1186
        %1225 = vmatprep.subr.mxu0 0.0
        %1226 = vmatpush2.msra.mxu0 0.0
        %1227 = vmatprep.subr.mxu0 0.0
        %1228 = vmatpush2.msra.mxu0 0.0
        %1229 = vmatprep.subr.mxu0 0.0
        %1230 = vmatpush2.msra.mxu0 0.0
        %1231 = vmatprep.subr.mxu0 0.0
        %1232 = vmatpush2.msra.mxu0 0.0
        %1233 = vmatprep.subr.mxu0 0.0
        %1234 = vmatpush2.msra.mxu0 0.0
        %1235 = vmatprep.subr.mxu0 0.0
        %1236 = vmatpush2.msra.mxu0 0.0
        %1237 = vmatprep.subr.mxu0 0.0
        %1238 = vmatpush2.msra.mxu0 0.0
        %1239 = vmatprep.subr.mxu0 0.0
        %1240 = vmatpush2.msra.mxu0 0.0
        %1241 = vmatprep.subr.mxu0 0.0
        %1242 = vmatpush2.msra.mxu0 0.0
        %1243 = vmatprep.subr.mxu0 0.0
        %1244 = vmatpush2.msra.mxu0 0.0
        %1245 = vmatprep.subr.mxu0 0.0
        %1246 = vmatpush2.msra.mxu0 0.0
        %1247 = vmatprep.subr.mxu0 0.0
        %1248 = vmatpush2.msra.mxu0 0.0
        %1249 = vmatprep.subr.mxu0 0.0
        %1250 = vmatpush2.msra.mxu0 0.0
        %1251 = vmatprep.subr.mxu0 0.0
        %1252 = vmatpush2.msra.mxu0 0.0
        %1253 = vmatprep.subr.mxu0 0.0
        %1254 = vmatpush2.msra.mxu0 0.0
        %1255 = vmatprep.subr.mxu0 0.0
        %1256 = vmatpush2.msra.mxu0 0.0
        %1257 = vmatprep.mubr.f32.mxu0 0.0
        %1258 = vmatmul.mubr.f32.gmra.mxu0 %v1191
        %v1259 = vpop.f32.mrf.mxu0
        %v1260 = vadd.f32 0.0, %v1259
        %v1261 = vpop.f32.mrf.mxu0
        %1262 = vdwg.mxu0
        %v1264 = vsel %vm521, %v1031, 0
        %1266 = vmatprep.subr.mxu0 0.0
        %1267 = vmatpush1.msra.mxu0 0.0
        %1268 = vmatprep.subr.mxu0 0.0
        %1269 = vmatpush1.msra.mxu0 0.0
        %1270 = vmatprep.subr.mxu0 0.0
        %1271 = vmatpush1.msra.mxu0 0.0
        %1272 = vmatprep.subr.mxu0 0.0
        %1273 = vmatpush1.msra.mxu0 0.0
        %1274 = vmatprep.subr.mxu0 0.0
        %1275 = vmatpush1.msra.mxu0 0.0
        %1276 = vmatprep.subr.mxu0 0.0
        %1277 = vmatpush1.msra.mxu0 0.0
        %1278 = vmatprep.subr.mxu0 0.0
        %1279 = vmatpush1.msra.mxu0 0.0
        %1280 = vmatprep.subr.mxu0 0.0
        %1281 = vmatpush1.msra.mxu0 0.0
        %1282 = vmatprep.subr.mxu0 0.0
        %1283 = vmatpush1.msra.mxu0 0.0
        %1284 = vmatprep.subr.mxu0 0.0
        %1285 = vmatpush1.msra.mxu0 0.0
        %1286 = vmatprep.subr.mxu0 0.0
        %1287 = vmatpush1.msra.mxu0 0.0
        %1288 = vmatprep.subr.mxu0 0.0
        %1289 = vmatpush1.msra.mxu0 0.0
        %1290 = vmatprep.subr.mxu0 0.0
        %1291 = vmatpush1.msra.mxu0 0.0
        %1292 = vmatprep.subr.mxu0 0.0
        %1293 = vmatpush1.msra.mxu0 0.0
        %1294 = vmatprep.subr.mxu0 0.0
        %1295 = vmatpush1.msra.mxu0 0.0
        %1296 = vmatprep.subr.mxu0 0.0
        %1297 = vmatpush1.msra.mxu0 %v1187
        %1298 = vmatprep.subr.mxu0 0.0
        %1299 = vmatpush2.msra.mxu0 0.0
        %1300 = vmatprep.subr.mxu0 0.0
        %1301 = vmatpush2.msra.mxu0 0.0
        %1302 = vmatprep.subr.mxu0 0.0
        %1303 = vmatpush2.msra.mxu0 0.0
        %1304 = vmatprep.subr.mxu0 0.0
        %1305 = vmatpush2.msra.mxu0 0.0
        %1306 = vmatprep.subr.mxu0 0.0
        %1307 = vmatpush2.msra.mxu0 0.0
        %1308 = vmatprep.subr.mxu0 0.0
        %1309 = vmatpush2.msra.mxu0 0.0
        %1310 = vmatprep.subr.mxu0 0.0
        %1311 = vmatpush2.msra.mxu0 0.0
        %1312 = vmatprep.subr.mxu0 0.0
        %1313 = vmatpush2.msra.mxu0 0.0
        %1314 = vmatprep.subr.mxu0 0.0
        %1315 = vmatpush2.msra.mxu0 0.0
        %1316 = vmatprep.subr.mxu0 0.0
        %1317 = vmatpush2.msra.mxu0 0.0
        %1318 = vmatprep.subr.mxu0 0.0
        %1319 = vmatpush2.msra.mxu0 0.0
        %1320 = vmatprep.subr.mxu0 0.0
        %1321 = vmatpush2.msra.mxu0 0.0
        %1322 = vmatprep.subr.mxu0 0.0
        %1323 = vmatpush2.msra.mxu0 0.0
        %1324 = vmatprep.subr.mxu0 0.0
        %1325 = vmatpush2.msra.mxu0 0.0
        %1326 = vmatprep.subr.mxu0 0.0
        %1327 = vmatpush2.msra.mxu0 0.0
        %1328 = vmatprep.subr.mxu0 0.0
        %1329 = vmatpush2.msra.mxu0 0.0
        %1330 = vmatprep.mubr.f32.mxu0 0.0
        %1331 = vmatmul.mubr.f32.gmra.mxu0 %v1264
        %v1332 = vpop.f32.mrf.mxu0
        %v1333 = vadd.f32 0.0, %v1332
        %v1334 = vpop.f32.mrf.mxu0
        %1335 = vdwg.mxu0
        %v1337 = vsel %vm521, %v1107, 0
        %1339 = vmatprep.subr.mxu0 0.0
        %1340 = vmatpush1.msra.mxu0 0.0
        %1341 = vmatprep.subr.mxu0 0.0
        %1342 = vmatpush1.msra.mxu0 0.0
        %1343 = vmatprep.subr.mxu0 0.0
        %1344 = vmatpush1.msra.mxu0 0.0
        %1345 = vmatprep.subr.mxu0 0.0
        %1346 = vmatpush1.msra.mxu0 0.0
        %1347 = vmatprep.subr.mxu0 0.0
        %1348 = vmatpush1.msra.mxu0 0.0
        %1349 = vmatprep.subr.mxu0 0.0
        %1350 = vmatpush1.msra.mxu0 0.0
        %1351 = vmatprep.subr.mxu0 0.0
        %1352 = vmatpush1.msra.mxu0 0.0
        %1353 = vmatprep.subr.mxu0 0.0
        %1354 = vmatpush1.msra.mxu0 0.0
        %1355 = vmatprep.subr.mxu0 0.0
        %1356 = vmatpush1.msra.mxu0 0.0
        %1357 = vmatprep.subr.mxu0 0.0
        %1358 = vmatpush1.msra.mxu0 0.0
        %1359 = vmatprep.subr.mxu0 0.0
        %1360 = vmatpush1.msra.mxu0 0.0
        %1361 = vmatprep.subr.mxu0 0.0
        %1362 = vmatpush1.msra.mxu0 0.0
        %1363 = vmatprep.subr.mxu0 0.0
        %1364 = vmatpush1.msra.mxu0 0.0
        %1365 = vmatprep.subr.mxu0 0.0
        %1366 = vmatpush1.msra.mxu0 0.0
        %1367 = vmatprep.subr.mxu0 0.0
        %1368 = vmatpush1.msra.mxu0 0.0
        %1369 = vmatprep.subr.mxu0 0.0
        %1370 = vmatpush1.msra.mxu0 %v1188
        %1371 = vmatprep.subr.mxu0 0.0
        %1372 = vmatpush2.msra.mxu0 0.0
        %1373 = vmatprep.subr.mxu0 0.0
        %1374 = vmatpush2.msra.mxu0 0.0
        %1375 = vmatprep.subr.mxu0 0.0
        %1376 = vmatpush2.msra.mxu0 0.0
        %1377 = vmatprep.subr.mxu0 0.0
        %1378 = vmatpush2.msra.mxu0 0.0
        %1379 = vmatprep.subr.mxu0 0.0
        %1380 = vmatpush2.msra.mxu0 0.0
        %1381 = vmatprep.subr.mxu0 0.0
        %1382 = vmatpush2.msra.mxu0 0.0
        %1383 = vmatprep.subr.mxu0 0.0
        %1384 = vmatpush2.msra.mxu0 0.0
        %1385 = vmatprep.subr.mxu0 0.0
        %1386 = vmatpush2.msra.mxu0 0.0
        %1387 = vmatprep.subr.mxu0 0.0
        %1388 = vmatpush2.msra.mxu0 0.0
        %1389 = vmatprep.subr.mxu0 0.0
        %1390 = vmatpush2.msra.mxu0 0.0
        %1391 = vmatprep.subr.mxu0 0.0
        %1392 = vmatpush2.msra.mxu0 0.0
        %1393 = vmatprep.subr.mxu0 0.0
        %1394 = vmatpush2.msra.mxu0 0.0
        %1395 = vmatprep.subr.mxu0 0.0
        %1396 = vmatpush2.msra.mxu0 0.0
        %1397 = vmatprep.subr.mxu0 0.0
        %1398 = vmatpush2.msra.mxu0 0.0
        %1399 = vmatprep.subr.mxu0 0.0
        %1400 = vmatpush2.msra.mxu0 0.0
        %1401 = vmatprep.subr.mxu0 0.0
        %1402 = vmatpush2.msra.mxu0 0.0
        %1403 = vmatprep.mubr.f32.mxu0 0.0
        %1404 = vmatmul.mubr.f32.gmra.mxu0 %v1337
        %v1405 = vpop.f32.mrf.mxu0
        %v1406 = vadd.f32 0.0, %v1405
        %v1407 = vpop.f32.mrf.mxu0
        %1408 = vdwg.mxu0
        %v1410 = vsel %vm521, %v1183, 0
        %1412 = vmatprep.subr.mxu0 0.0
        %1413 = vmatpush1.msra.mxu0 0.0
        %1414 = vmatprep.subr.mxu0 0.0
        %1415 = vmatpush1.msra.mxu0 0.0
        %1416 = vmatprep.subr.mxu0 0.0
        %1417 = vmatpush1.msra.mxu0 0.0
        %1418 = vmatprep.subr.mxu0 0.0
        %1419 = vmatpush1.msra.mxu0 0.0
        %1420 = vmatprep.subr.mxu0 0.0
        %1421 = vmatpush1.msra.mxu0 0.0
        %1422 = vmatprep.subr.mxu0 0.0
        %1423 = vmatpush1.msra.mxu0 0.0
        %1424 = vmatprep.subr.mxu0 0.0
        %1425 = vmatpush1.msra.mxu0 0.0
        %1426 = vmatprep.subr.mxu0 0.0
        %1427 = vmatpush1.msra.mxu0 0.0
        %1428 = vmatprep.subr.mxu0 0.0
        %1429 = vmatpush1.msra.mxu0 0.0
        %1430 = vmatprep.subr.mxu0 0.0
        %1431 = vmatpush1.msra.mxu0 0.0
        %1432 = vmatprep.subr.mxu0 0.0
        %1433 = vmatpush1.msra.mxu0 0.0
        %1434 = vmatprep.subr.mxu0 0.0
        %1435 = vmatpush1.msra.mxu0 0.0
        %1436 = vmatprep.subr.mxu0 0.0
        %1437 = vmatpush1.msra.mxu0 0.0
        %1438 = vmatprep.subr.mxu0 0.0
        %1439 = vmatpush1.msra.mxu0 0.0
        %1440 = vmatprep.subr.mxu0 0.0
        %1441 = vmatpush1.msra.mxu0 0.0
        %1442 = vmatprep.subr.mxu0 0.0
        %1443 = vmatpush1.msra.mxu0 %v1189
        %1444 = vmatprep.subr.mxu0 0.0
        %1445 = vmatpush2.msra.mxu0 0.0
        %1446 = vmatprep.subr.mxu0 0.0
        %1447 = vmatpush2.msra.mxu0 0.0
        %1448 = vmatprep.subr.mxu0 0.0
        %1449 = vmatpush2.msra.mxu0 0.0
        %1450 = vmatprep.subr.mxu0 0.0
        %1451 = vmatpush2.msra.mxu0 0.0
        %1452 = vmatprep.subr.mxu0 0.0
        %1453 = vmatpush2.msra.mxu0 0.0
        %1454 = vmatprep.subr.mxu0 0.0
        %1455 = vmatpush2.msra.mxu0 0.0
        %1456 = vmatprep.subr.mxu0 0.0
        %1457 = vmatpush2.msra.mxu0 0.0
        %1458 = vmatprep.subr.mxu0 0.0
        %1459 = vmatpush2.msra.mxu0 0.0
        %1460 = vmatprep.subr.mxu0 0.0
        %1461 = vmatpush2.msra.mxu0 0.0
        %1462 = vmatprep.subr.mxu0 0.0
        %1463 = vmatpush2.msra.mxu0 0.0
        %1464 = vmatprep.subr.mxu0 0.0
        %1465 = vmatpush2.msra.mxu0 0.0
        %1466 = vmatprep.subr.mxu0 0.0
        %1467 = vmatpush2.msra.mxu0 0.0
        %1468 = vmatprep.subr.mxu0 0.0
        %1469 = vmatpush2.msra.mxu0 0.0
        %1470 = vmatprep.subr.mxu0 0.0
        %1471 = vmatpush2.msra.mxu0 0.0
        %1472 = vmatprep.subr.mxu0 0.0
        %1473 = vmatpush2.msra.mxu0 0.0
        %1474 = vmatprep.subr.mxu0 0.0
        %1475 = vmatpush2.msra.mxu0 0.0
        %1476 = vmatprep.mubr.f32.mxu0 0.0
        %1477 = vmatmul.mubr.f32.gmra.mxu0 %v1410
        %v1478 = vpop.f32.mrf.mxu0
        %v1479 = vadd.f32 0.0, %v1478
        %v1480 = vpop.f32.mrf.mxu0
        %1481 = vdwg.mxu0
        %v1482 = vadd.f32 %v1260, %v1333
        %v1483 = vadd.f32 %v1482, %v1406
        %v1484 = vadd.f32 %v1483, %v1479
        %v1485 = vld [vmem:[%s5] sm:$0x1]
        %v1487 = vlaneseq
        %v1488 = vshrl.u32 %v1487, 7
        %v1489 = vsub.s32 0, %v1488
        %v1490 = vrot.slane %v1485, %v1489
        %v1492 = vadd.f32 %v1484, %v1490
        %v1493 = vld [vmem:[%s6] sm:$0x1]
        %v1494 = vld [vmem:[%s7] sm:$0x1]
        %v1495 = vadd.f32 %v1492, %v423
        %v1496 = vsel %vm435, %v1495, 0.0
        %1497 = vadd.xlane.f32.xlu0 %v1496
        %v1498 = vpop.xlane.xlu0 %1497
        %v1499 = vrcp.pop 32.0
        %v1500 = vmul.f32 %v1498, %v1499
        %v1501 = vsub.f32 %v1495, %v1500
        %v1502 = vmul.f32 %v1501, %v1501
        %v1503 = vsel %vm435, %v1502, 0.0
        %1504 = vadd.xlane.f32.xlu0 %v1503
        %v1505 = vpop.xlane.xlu0 %1504
        %v1506 = vmul.f32 %v1505, %v1499
        %v1507 = vadd.f32 %v1506, 1e-05
        %v1508 = vrsqrt.pop %v1507
        %v1509 = vmul.f32 %v1501, %v1508
        %v1511 = vlaneseq
        %v1512 = vshrl.u32 %v1511, 7
        %v1513 = vsub.s32 0, %v1512
        %v1514 = vrot.slane %v1493, %v1513
        %v1516 = vmul.f32 %v1509, %v1514
        %v1518 = vlaneseq
        %v1519 = vshrl.u32 %v1518, 7
        %v1520 = vsub.s32 0, %v1519
        %v1521 = vrot.slane %v1494, %v1520
        %v1523 = vadd.f32 %v1516, %v1521
        %v1524 = vld [vmem:[%s8] sm:$0xff]
        %v1525 = vld [vmem:[%s8 + $0x8] sm:$0xff]
        %v1526 = vld [vmem:[%s8 + $0x10] sm:$0xff]
        %v1527 = vld [vmem:[%s8 + $0x18] sm:$0xff]
        %v1528 = vld [vmem:[%s8 + $0x20] sm:$0xff]
        %v1529 = vld [vmem:[%s8 + $0x28] sm:$0xff]
        %v1530 = vld [vmem:[%s8 + $0x30] sm:$0xff]
        %v1531 = vld [vmem:[%s8 + $0x38] sm:$0xff]
        %v1532 = vld [vmem:[%s8 + $0x40] sm:$0xff]
        %v1533 = vld [vmem:[%s8 + $0x48] sm:$0xff]
        %v1534 = vld [vmem:[%s8 + $0x50] sm:$0xff]
        %v1535 = vld [vmem:[%s8 + $0x58] sm:$0xff]
        %v1536 = vld [vmem:[%s8 + $0x60] sm:$0xff]
        %v1537 = vld [vmem:[%s8 + $0x68] sm:$0xff]
        %v1538 = vld [vmem:[%s8 + $0x70] sm:$0xff]
        %v1539 = vld [vmem:[%s8 + $0x78] sm:$0xff]
        %v1540 = vld [vmem:[%s8 + $0x80] sm:$0xff]
        %v1541 = vld [vmem:[%s8 + $0x88] sm:$0xff]
        %v1542 = vld [vmem:[%s8 + $0x90] sm:$0xff]
        %v1543 = vld [vmem:[%s8 + $0x98] sm:$0xff]
        %v1544 = vld [vmem:[%s8 + $0xa0] sm:$0xff]
        %v1545 = vld [vmem:[%s8 + $0xa8] sm:$0xff]
        %v1546 = vld [vmem:[%s8 + $0xb0] sm:$0xff]
        %v1547 = vld [vmem:[%s8 + $0xb8] sm:$0xff]
        %v1548 = vld [vmem:[%s8 + $0xc0] sm:$0xff]
        %v1549 = vld [vmem:[%s8 + $0xc8] sm:$0xff]
        %v1550 = vld [vmem:[%s8 + $0xd0] sm:$0xff]
        %v1551 = vld [vmem:[%s8 + $0xd8] sm:$0xff]
        %v1552 = vld [vmem:[%s8 + $0xe0] sm:$0xff]
        %v1553 = vld [vmem:[%s8 + $0xe8] sm:$0xff]
        %v1554 = vld [vmem:[%s8 + $0xf0] sm:$0xff]
        %v1555 = vld [vmem:[%s8 + $0xf8] sm:$0xff]
        %v1556 = vld [vmem:[%s8 + $0x100] sm:$0xff]
        %v1557 = vld [vmem:[%s8 + $0x108] sm:$0xff]
        %v1558 = vld [vmem:[%s8 + $0x110] sm:$0xff]
        %v1559 = vld [vmem:[%s8 + $0x118] sm:$0xff]
        %v1560 = vld [vmem:[%s8 + $0x120] sm:$0xff]
        %v1561 = vld [vmem:[%s8 + $0x128] sm:$0xff]
        %v1562 = vld [vmem:[%s8 + $0x130] sm:$0xff]
        %v1563 = vld [vmem:[%s8 + $0x138] sm:$0xff]
        %v1564 = vld [vmem:[%s8 + $0x140] sm:$0xff]
        %v1565 = vld [vmem:[%s8 + $0x148] sm:$0xff]
        %v1566 = vld [vmem:[%s8 + $0x150] sm:$0xff]
        %v1567 = vld [vmem:[%s8 + $0x158] sm:$0xff]
        %v1568 = vld [vmem:[%s8 + $0x160] sm:$0xff]
        %v1569 = vld [vmem:[%s8 + $0x168] sm:$0xff]
        %v1570 = vld [vmem:[%s8 + $0x170] sm:$0xff]
        %v1571 = vld [vmem:[%s8 + $0x178] sm:$0xff]
        %v1572 = vld [vmem:[%s8 + $0x180] sm:$0xff]
        %v1573 = vld [vmem:[%s8 + $0x188] sm:$0xff]
        %v1574 = vld [vmem:[%s8 + $0x190] sm:$0xff]
        %v1575 = vld [vmem:[%s8 + $0x198] sm:$0xff]
        %v1576 = vld [vmem:[%s8 + $0x1a0] sm:$0xff]
        %v1577 = vld [vmem:[%s8 + $0x1a8] sm:$0xff]
        %v1578 = vld [vmem:[%s8 + $0x1b0] sm:$0xff]
        %v1579 = vld [vmem:[%s8 + $0x1b8] sm:$0xff]
        %v1580 = vld [vmem:[%s8 + $0x1c0] sm:$0xff]
        %v1581 = vld [vmem:[%s8 + $0x1c8] sm:$0xff]
        %v1582 = vld [vmem:[%s8 + $0x1d0] sm:$0xff]
        %v1583 = vld [vmem:[%s8 + $0x1d8] sm:$0xff]
        %v1584 = vld [vmem:[%s8 + $0x1e0] sm:$0xff]
        %v1585 = vld [vmem:[%s8 + $0x1e8] sm:$0xff]
        %v1586 = vld [vmem:[%s8 + $0x1f0] sm:$0xff]
        %v1587 = vld [vmem:[%s8 + $0x1f8] sm:$0xff]
        %v1588 = vld [vmem:[%s9] sm:$0xff]
        %v1589 = vld [vmem:[%s9 + $0x8] sm:$0xff]
        %v1592 = vlaneseq
        %v1593 = vshrl.u32 %v1592, 7
        %v1594 = vsub.s32 0, %v1593
        %v1595 = vrot.slane %v1588, %v1594
        %v1596 = vlaneseq
        %v1597 = vshrl.u32 %v1596, 7
        %v1598 = vsub.s32 1, %v1597
        %v1599 = vrot.slane %v1588, %v1598
        %v1600 = vlaneseq
        %v1601 = vshrl.u32 %v1600, 7
        %v1602 = vsub.s32 2, %v1601
        %v1603 = vrot.slane %v1588, %v1602
        %v1604 = vlaneseq
        %v1605 = vshrl.u32 %v1604, 7
        %v1606 = vsub.s32 3, %v1605
        %v1607 = vrot.slane %v1588, %v1606
        %v1608 = vlaneseq
        %v1609 = vshrl.u32 %v1608, 7
        %v1610 = vsub.s32 4, %v1609
        %v1611 = vrot.slane %v1588, %v1610
        %v1612 = vlaneseq
        %v1613 = vshrl.u32 %v1612, 7
        %v1614 = vsub.s32 5, %v1613
        %v1615 = vrot.slane %v1588, %v1614
        %v1616 = vlaneseq
        %v1617 = vshrl.u32 %v1616, 7
        %v1618 = vsub.s32 6, %v1617
        %v1619 = vrot.slane %v1588, %v1618
        %v1620 = vlaneseq
        %v1621 = vshrl.u32 %v1620, 7
        %v1622 = vsub.s32 7, %v1621
        %v1623 = vrot.slane %v1588, %v1622
        %v1624 = vlaneseq
        %v1625 = vshrl.u32 %v1624, 7
        %v1626 = vsub.s32 0, %v1625
        %v1627 = vrot.slane %v1589, %v1626
        %v1628 = vlaneseq
        %v1629 = vshrl.u32 %v1628, 7
        %v1630 = vsub.s32 1, %v1629
        %v1631 = vrot.slane %v1589, %v1630
        %v1632 = vlaneseq
        %v1633 = vshrl.u32 %v1632, 7
        %v1634 = vsub.s32 2, %v1633
        %v1635 = vrot.slane %v1589, %v1634
        %v1636 = vlaneseq
        %v1637 = vshrl.u32 %v1636, 7
        %v1638 = vsub.s32 3, %v1637
        %v1639 = vrot.slane %v1589, %v1638
        %v1640 = vlaneseq
        %v1641 = vshrl.u32 %v1640, 7
        %v1642 = vsub.s32 4, %v1641
        %v1643 = vrot.slane %v1589, %v1642
        %v1644 = vlaneseq
        %v1645 = vshrl.u32 %v1644, 7
        %v1646 = vsub.s32 5, %v1645
        %v1647 = vrot.slane %v1589, %v1646
        %v1648 = vlaneseq
        %v1649 = vshrl.u32 %v1648, 7
        %v1650 = vsub.s32 6, %v1649
        %v1651 = vrot.slane %v1589, %v1650
        %v1652 = vlaneseq
        %v1653 = vshrl.u32 %v1652, 7
        %v1654 = vsub.s32 7, %v1653
        %v1655 = vrot.slane %v1589, %v1654
        %v1673 = vsel %vm435, %v1523, 0
        %1675 = vmatprep.subr.mxu0 0.0
        %1676 = vmatpush1.msra.mxu0 0.0
        %1677 = vmatprep.subr.mxu0 0.0
        %1678 = vmatpush1.msra.mxu0 0.0
        %1679 = vmatprep.subr.mxu0 0.0
        %1680 = vmatpush1.msra.mxu0 0.0
        %1681 = vmatprep.subr.mxu0 0.0
        %1682 = vmatpush1.msra.mxu0 0.0
        %1683 = vmatprep.subr.mxu0 0.0
        %1684 = vmatpush1.msra.mxu0 0.0
        %1685 = vmatprep.subr.mxu0 0.0
        %1686 = vmatpush1.msra.mxu0 0.0
        %1687 = vmatprep.subr.mxu0 0.0
        %1688 = vmatpush1.msra.mxu0 0.0
        %1689 = vmatprep.subr.mxu0 0.0
        %1690 = vmatpush1.msra.mxu0 0.0
        %1691 = vmatprep.subr.mxu0 0.0
        %1692 = vmatpush1.msra.mxu0 0.0
        %1693 = vmatprep.subr.mxu0 0.0
        %1694 = vmatpush1.msra.mxu0 0.0
        %1695 = vmatprep.subr.mxu0 0.0
        %1696 = vmatpush1.msra.mxu0 0.0
        %1697 = vmatprep.subr.mxu0 0.0
        %1698 = vmatpush1.msra.mxu0 0.0
        %1699 = vmatprep.subr.mxu0 %v1573
        %1700 = vmatpush1.msra.mxu0 %v1572
        %1701 = vmatprep.subr.mxu0 %v1557
        %1702 = vmatpush1.msra.mxu0 %v1556
        %1703 = vmatprep.subr.mxu0 %v1541
        %1704 = vmatpush1.msra.mxu0 %v1540
        %1705 = vmatprep.subr.mxu0 %v1525
        %1706 = vmatpush1.msra.mxu0 %v1524
        %1707 = vmatprep.subr.mxu0 0.0
        %1708 = vmatpush2.msra.mxu0 0.0
        %1709 = vmatprep.subr.mxu0 0.0
        %1710 = vmatpush2.msra.mxu0 0.0
        %1711 = vmatprep.subr.mxu0 0.0
        %1712 = vmatpush2.msra.mxu0 0.0
        %1713 = vmatprep.subr.mxu0 0.0
        %1714 = vmatpush2.msra.mxu0 0.0
        %1715 = vmatprep.subr.mxu0 0.0
        %1716 = vmatpush2.msra.mxu0 0.0
        %1717 = vmatprep.subr.mxu0 0.0
        %1718 = vmatpush2.msra.mxu0 0.0
        %1719 = vmatprep.subr.mxu0 0.0
        %1720 = vmatpush2.msra.mxu0 0.0
        %1721 = vmatprep.subr.mxu0 0.0
        %1722 = vmatpush2.msra.mxu0 0.0
        %1723 = vmatprep.subr.mxu0 0.0
        %1724 = vmatpush2.msra.mxu0 0.0
        %1725 = vmatprep.subr.mxu0 0.0
        %1726 = vmatpush2.msra.mxu0 0.0
        %1727 = vmatprep.subr.mxu0 0.0
        %1728 = vmatpush2.msra.mxu0 0.0
        %1729 = vmatprep.subr.mxu0 0.0
        %1730 = vmatpush2.msra.mxu0 0.0
        %1731 = vmatprep.subr.mxu0 0.0
        %1732 = vmatpush2.msra.mxu0 0.0
        %1733 = vmatprep.subr.mxu0 0.0
        %1734 = vmatpush2.msra.mxu0 0.0
        %1735 = vmatprep.subr.mxu0 0.0
        %1736 = vmatpush2.msra.mxu0 0.0
        %1737 = vmatprep.subr.mxu0 0.0
        %1738 = vmatpush2.msra.mxu0 0.0
        %1739 = vmatprep.mubr.f32.mxu0 0.0
        %1740 = vmatmul.mubr.f32.gmra.mxu0 %v1673
        %v1741 = vpop.f32.mrf.mxu0
        %v1742 = vadd.f32 %v1595, %v1741
        %v1743 = vpop.f32.mrf.mxu0
        %v1744 = vadd.f32 %v1599, %v1743
        %1745 = vdwg.mxu0
        %1746 = vmatprep.subr.mxu0 0.0
        %1747 = vmatpush1.msra.mxu0 0.0
        %1748 = vmatprep.subr.mxu0 0.0
        %1749 = vmatpush1.msra.mxu0 0.0
        %1750 = vmatprep.subr.mxu0 0.0
        %1751 = vmatpush1.msra.mxu0 0.0
        %1752 = vmatprep.subr.mxu0 0.0
        %1753 = vmatpush1.msra.mxu0 0.0
        %1754 = vmatprep.subr.mxu0 0.0
        %1755 = vmatpush1.msra.mxu0 0.0
        %1756 = vmatprep.subr.mxu0 0.0
        %1757 = vmatpush1.msra.mxu0 0.0
        %1758 = vmatprep.subr.mxu0 0.0
        %1759 = vmatpush1.msra.mxu0 0.0
        %1760 = vmatprep.subr.mxu0 0.0
        %1761 = vmatpush1.msra.mxu0 0.0
        %1762 = vmatprep.subr.mxu0 0.0
        %1763 = vmatpush1.msra.mxu0 0.0
        %1764 = vmatprep.subr.mxu0 0.0
        %1765 = vmatpush1.msra.mxu0 0.0
        %1766 = vmatprep.subr.mxu0 0.0
        %1767 = vmatpush1.msra.mxu0 0.0
        %1768 = vmatprep.subr.mxu0 0.0
        %1769 = vmatpush1.msra.mxu0 0.0
        %1770 = vmatprep.subr.mxu0 %v1575
        %1771 = vmatpush1.msra.mxu0 %v1574
        %1772 = vmatprep.subr.mxu0 %v1559
        %1773 = vmatpush1.msra.mxu0 %v1558
        %1774 = vmatprep.subr.mxu0 %v1543
        %1775 = vmatpush1.msra.mxu0 %v1542
        %1776 = vmatprep.subr.mxu0 %v1527
        %1777 = vmatpush1.msra.mxu0 %v1526
        %1778 = vmatprep.subr.mxu0 0.0
        %1779 = vmatpush2.msra.mxu0 0.0
        %1780 = vmatprep.subr.mxu0 0.0
        %1781 = vmatpush2.msra.mxu0 0.0
        %1782 = vmatprep.subr.mxu0 0.0
        %1783 = vmatpush2.msra.mxu0 0.0
        %1784 = vmatprep.subr.mxu0 0.0
        %1785 = vmatpush2.msra.mxu0 0.0
        %1786 = vmatprep.subr.mxu0 0.0
        %1787 = vmatpush2.msra.mxu0 0.0
        %1788 = vmatprep.subr.mxu0 0.0
        %1789 = vmatpush2.msra.mxu0 0.0
        %1790 = vmatprep.subr.mxu0 0.0
        %1791 = vmatpush2.msra.mxu0 0.0
        %1792 = vmatprep.subr.mxu0 0.0
        %1793 = vmatpush2.msra.mxu0 0.0
        %1794 = vmatprep.subr.mxu0 0.0
        %1795 = vmatpush2.msra.mxu0 0.0
        %1796 = vmatprep.subr.mxu0 0.0
        %1797 = vmatpush2.msra.mxu0 0.0
        %1798 = vmatprep.subr.mxu0 0.0
        %1799 = vmatpush2.msra.mxu0 0.0
        %1800 = vmatprep.subr.mxu0 0.0
        %1801 = vmatpush2.msra.mxu0 0.0
        %1802 = vmatprep.subr.mxu0 0.0
        %1803 = vmatpush2.msra.mxu0 0.0
        %1804 = vmatprep.subr.mxu0 0.0
        %1805 = vmatpush2.msra.mxu0 0.0
        %1806 = vmatprep.subr.mxu0 0.0
        %1807 = vmatpush2.msra.mxu0 0.0
        %1808 = vmatprep.subr.mxu0 0.0
        %1809 = vmatpush2.msra.mxu0 0.0
        %1810 = vmatprep.mubr.f32.mxu0 0.0
        %1811 = vmatmul.mubr.f32.gmra.mxu0 %v1673
        %v1812 = vpop.f32.mrf.mxu0
        %v1813 = vadd.f32 %v1603, %v1812
        %v1814 = vpop.f32.mrf.mxu0
        %v1815 = vadd.f32 %v1607, %v1814
        %1816 = vdwg.mxu0
        %1817 = vmatprep.subr.mxu0 0.0
        %1818 = vmatpush1.msra.mxu0 0.0
        %1819 = vmatprep.subr.mxu0 0.0
        %1820 = vmatpush1.msra.mxu0 0.0
        %1821 = vmatprep.subr.mxu0 0.0
        %1822 = vmatpush1.msra.mxu0 0.0
        %1823 = vmatprep.subr.mxu0 0.0
        %1824 = vmatpush1.msra.mxu0 0.0
        %1825 = vmatprep.subr.mxu0 0.0
        %1826 = vmatpush1.msra.mxu0 0.0
        %1827 = vmatprep.subr.mxu0 0.0
        %1828 = vmatpush1.msra.mxu0 0.0
        %1829 = vmatprep.subr.mxu0 0.0
        %1830 = vmatpush1.msra.mxu0 0.0
        %1831 = vmatprep.subr.mxu0 0.0
        %1832 = vmatpush1.msra.mxu0 0.0
        %1833 = vmatprep.subr.mxu0 0.0
        %1834 = vmatpush1.msra.mxu0 0.0
        %1835 = vmatprep.subr.mxu0 0.0
        %1836 = vmatpush1.msra.mxu0 0.0
        %1837 = vmatprep.subr.mxu0 0.0
        %1838 = vmatpush1.msra.mxu0 0.0
        %1839 = vmatprep.subr.mxu0 0.0
        %1840 = vmatpush1.msra.mxu0 0.0
        %1841 = vmatprep.subr.mxu0 %v1577
        %1842 = vmatpush1.msra.mxu0 %v1576
        %1843 = vmatprep.subr.mxu0 %v1561
        %1844 = vmatpush1.msra.mxu0 %v1560
        %1845 = vmatprep.subr.mxu0 %v1545
        %1846 = vmatpush1.msra.mxu0 %v1544
        %1847 = vmatprep.subr.mxu0 %v1529
        %1848 = vmatpush1.msra.mxu0 %v1528
        %1849 = vmatprep.subr.mxu0 0.0
        %1850 = vmatpush2.msra.mxu0 0.0
        %1851 = vmatprep.subr.mxu0 0.0
        %1852 = vmatpush2.msra.mxu0 0.0
        %1853 = vmatprep.subr.mxu0 0.0
        %1854 = vmatpush2.msra.mxu0 0.0
        %1855 = vmatprep.subr.mxu0 0.0
        %1856 = vmatpush2.msra.mxu0 0.0
        %1857 = vmatprep.subr.mxu0 0.0
        %1858 = vmatpush2.msra.mxu0 0.0
        %1859 = vmatprep.subr.mxu0 0.0
        %1860 = vmatpush2.msra.mxu0 0.0
        %1861 = vmatprep.subr.mxu0 0.0
        %1862 = vmatpush2.msra.mxu0 0.0
        %1863 = vmatprep.subr.mxu0 0.0
        %1864 = vmatpush2.msra.mxu0 0.0
        %1865 = vmatprep.subr.mxu0 0.0
        %1866 = vmatpush2.msra.mxu0 0.0
        %1867 = vmatprep.subr.mxu0 0.0
        %1868 = vmatpush2.msra.mxu0 0.0
        %1869 = vmatprep.subr.mxu0 0.0
        %1870 = vmatpush2.msra.mxu0 0.0
        %1871 = vmatprep.subr.mxu0 0.0
        %1872 = vmatpush2.msra.mxu0 0.0
        %1873 = vmatprep.subr.mxu0 0.0
        %1874 = vmatpush2.msra.mxu0 0.0
        %1875 = vmatprep.subr.mxu0 0.0
        %1876 = vmatpush2.msra.mxu0 0.0
        %1877 = vmatprep.subr.mxu0 0.0
        %1878 = vmatpush2.msra.mxu0 0.0
        %1879 = vmatprep.subr.mxu0 0.0
        %1880 = vmatpush2.msra.mxu0 0.0
        %1881 = vmatprep.mubr.f32.mxu0 0.0
        %1882 = vmatmul.mubr.f32.gmra.mxu0 %v1673
        %v1883 = vpop.f32.mrf.mxu0
        %v1884 = vadd.f32 %v1611, %v1883
        %v1885 = vpop.f32.mrf.mxu0
        %v1886 = vadd.f32 %v1615, %v1885
        %1887 = vdwg.mxu0
        %1888 = vmatprep.subr.mxu0 0.0
        %1889 = vmatpush1.msra.mxu0 0.0
        %1890 = vmatprep.subr.mxu0 0.0
        %1891 = vmatpush1.msra.mxu0 0.0
        %1892 = vmatprep.subr.mxu0 0.0
        %1893 = vmatpush1.msra.mxu0 0.0
        %1894 = vmatprep.subr.mxu0 0.0
        %1895 = vmatpush1.msra.mxu0 0.0
        %1896 = vmatprep.subr.mxu0 0.0
        %1897 = vmatpush1.msra.mxu0 0.0
        %1898 = vmatprep.subr.mxu0 0.0
        %1899 = vmatpush1.msra.mxu0 0.0
        %1900 = vmatprep.subr.mxu0 0.0
        %1901 = vmatpush1.msra.mxu0 0.0
        %1902 = vmatprep.subr.mxu0 0.0
        %1903 = vmatpush1.msra.mxu0 0.0
        %1904 = vmatprep.subr.mxu0 0.0
        %1905 = vmatpush1.msra.mxu0 0.0
        %1906 = vmatprep.subr.mxu0 0.0
        %1907 = vmatpush1.msra.mxu0 0.0
        %1908 = vmatprep.subr.mxu0 0.0
        %1909 = vmatpush1.msra.mxu0 0.0
        %1910 = vmatprep.subr.mxu0 0.0
        %1911 = vmatpush1.msra.mxu0 0.0
        %1912 = vmatprep.subr.mxu0 %v1579
        %1913 = vmatpush1.msra.mxu0 %v1578
        %1914 = vmatprep.subr.mxu0 %v1563
        %1915 = vmatpush1.msra.mxu0 %v1562
        %1916 = vmatprep.subr.mxu0 %v1547
        %1917 = vmatpush1.msra.mxu0 %v1546
        %1918 = vmatprep.subr.mxu0 %v1531
        %1919 = vmatpush1.msra.mxu0 %v1530
        %1920 = vmatprep.subr.mxu0 0.0
        %1921 = vmatpush2.msra.mxu0 0.0
        %1922 = vmatprep.subr.mxu0 0.0
        %1923 = vmatpush2.msra.mxu0 0.0
        %1924 = vmatprep.subr.mxu0 0.0
        %1925 = vmatpush2.msra.mxu0 0.0
        %1926 = vmatprep.subr.mxu0 0.0
        %1927 = vmatpush2.msra.mxu0 0.0
        %1928 = vmatprep.subr.mxu0 0.0
        %1929 = vmatpush2.msra.mxu0 0.0
        %1930 = vmatprep.subr.mxu0 0.0
        %1931 = vmatpush2.msra.mxu0 0.0
        %1932 = vmatprep.subr.mxu0 0.0
        %1933 = vmatpush2.msra.mxu0 0.0
        %1934 = vmatprep.subr.mxu0 0.0
        %1935 = vmatpush2.msra.mxu0 0.0
        %1936 = vmatprep.subr.mxu0 0.0
        %1937 = vmatpush2.msra.mxu0 0.0
        %1938 = vmatprep.subr.mxu0 0.0
        %1939 = vmatpush2.msra.mxu0 0.0
        %1940 = vmatprep.subr.mxu0 0.0
        %1941 = vmatpush2.msra.mxu0 0.0
        %1942 = vmatprep.subr.mxu0 0.0
        %1943 = vmatpush2.msra.mxu0 0.0
        %1944 = vmatprep.subr.mxu0 0.0
        %1945 = vmatpush2.msra.mxu0 0.0
        %1946 = vmatprep.subr.mxu0 0.0
        %1947 = vmatpush2.msra.mxu0 0.0
        %1948 = vmatprep.subr.mxu0 0.0
        %1949 = vmatpush2.msra.mxu0 0.0
        %1950 = vmatprep.subr.mxu0 0.0
        %1951 = vmatpush2.msra.mxu0 0.0
        %1952 = vmatprep.mubr.f32.mxu0 0.0
        %1953 = vmatmul.mubr.f32.gmra.mxu0 %v1673
        %v1954 = vpop.f32.mrf.mxu0
        %v1955 = vadd.f32 %v1619, %v1954
        %v1956 = vpop.f32.mrf.mxu0
        %v1957 = vadd.f32 %v1623, %v1956
        %1958 = vdwg.mxu0
        %1959 = vmatprep.subr.mxu0 0.0
        %1960 = vmatpush1.msra.mxu0 0.0
        %1961 = vmatprep.subr.mxu0 0.0
        %1962 = vmatpush1.msra.mxu0 0.0
        %1963 = vmatprep.subr.mxu0 0.0
        %1964 = vmatpush1.msra.mxu0 0.0
        %1965 = vmatprep.subr.mxu0 0.0
        %1966 = vmatpush1.msra.mxu0 0.0
        %1967 = vmatprep.subr.mxu0 0.0
        %1968 = vmatpush1.msra.mxu0 0.0
        %1969 = vmatprep.subr.mxu0 0.0
        %1970 = vmatpush1.msra.mxu0 0.0
        %1971 = vmatprep.subr.mxu0 0.0
        %1972 = vmatpush1.msra.mxu0 0.0
        %1973 = vmatprep.subr.mxu0 0.0
        %1974 = vmatpush1.msra.mxu0 0.0
        %1975 = vmatprep.subr.mxu0 0.0
        %1976 = vmatpush1.msra.mxu0 0.0
        %1977 = vmatprep.subr.mxu0 0.0
        %1978 = vmatpush1.msra.mxu0 0.0
        %1979 = vmatprep.subr.mxu0 0.0
        %1980 = vmatpush1.msra.mxu0 0.0
        %1981 = vmatprep.subr.mxu0 0.0
        %1982 = vmatpush1.msra.mxu0 0.0
        %1983 = vmatprep.subr.mxu0 %v1581
        %1984 = vmatpush1.msra.mxu0 %v1580
        %1985 = vmatprep.subr.mxu0 %v1565
        %1986 = vmatpush1.msra.mxu0 %v1564
        %1987 = vmatprep.subr.mxu0 %v1549
        %1988 = vmatpush1.msra.mxu0 %v1548
        %1989 = vmatprep.subr.mxu0 %v1533
        %1990 = vmatpush1.msra.mxu0 %v1532
        %1991 = vmatprep.subr.mxu0 0.0
        %1992 = vmatpush2.msra.mxu0 0.0
        %1993 = vmatprep.subr.mxu0 0.0
        %1994 = vmatpush2.msra.mxu0 0.0
        %1995 = vmatprep.subr.mxu0 0.0
        %1996 = vmatpush2.msra.mxu0 0.0
        %1997 = vmatprep.subr.mxu0 0.0
        %1998 = vmatpush2.msra.mxu0 0.0
        %1999 = vmatprep.subr.mxu0 0.0
        %2000 = vmatpush2.msra.mxu0 0.0
        %2001 = vmatprep.subr.mxu0 0.0
        %2002 = vmatpush2.msra.mxu0 0.0
        %2003 = vmatprep.subr.mxu0 0.0
        %2004 = vmatpush2.msra.mxu0 0.0
        %2005 = vmatprep.subr.mxu0 0.0
        %2006 = vmatpush2.msra.mxu0 0.0
        %2007 = vmatprep.subr.mxu0 0.0
        %2008 = vmatpush2.msra.mxu0 0.0
        %2009 = vmatprep.subr.mxu0 0.0
        %2010 = vmatpush2.msra.mxu0 0.0
        %2011 = vmatprep.subr.mxu0 0.0
        %2012 = vmatpush2.msra.mxu0 0.0
        %2013 = vmatprep.subr.mxu0 0.0
        %2014 = vmatpush2.msra.mxu0 0.0
        %2015 = vmatprep.subr.mxu0 0.0
        %2016 = vmatpush2.msra.mxu0 0.0
        %2017 = vmatprep.subr.mxu0 0.0
        %2018 = vmatpush2.msra.mxu0 0.0
        %2019 = vmatprep.subr.mxu0 0.0
        %2020 = vmatpush2.msra.mxu0 0.0
        %2021 = vmatprep.subr.mxu0 0.0
        %2022 = vmatpush2.msra.mxu0 0.0
        %2023 = vmatprep.mubr.f32.mxu0 0.0
        %2024 = vmatmul.mubr.f32.gmra.mxu0 %v1673
        %v2025 = vpop.f32.mrf.mxu0
        %v2026 = vadd.f32 %v1627, %v2025
        %v2027 = vpop.f32.mrf.mxu0
        %v2028 = vadd.f32 %v1631, %v2027
        %2029 = vdwg.mxu0
        %2030 = vmatprep.subr.mxu0 0.0
        %2031 = vmatpush1.msra.mxu0 0.0
        %2032 = vmatprep.subr.mxu0 0.0
        %2033 = vmatpush1.msra.mxu0 0.0
        %2034 = vmatprep.subr.mxu0 0.0
        %2035 = vmatpush1.msra.mxu0 0.0
        %2036 = vmatprep.subr.mxu0 0.0
        %2037 = vmatpush1.msra.mxu0 0.0
        %2038 = vmatprep.subr.mxu0 0.0
        %2039 = vmatpush1.msra.mxu0 0.0
        %2040 = vmatprep.subr.mxu0 0.0
        %2041 = vmatpush1.msra.mxu0 0.0
        %2042 = vmatprep.subr.mxu0 0.0
        %2043 = vmatpush1.msra.mxu0 0.0
        %2044 = vmatprep.subr.mxu0 0.0
        %2045 = vmatpush1.msra.mxu0 0.0
        %2046 = vmatprep.subr.mxu0 0.0
        %2047 = vmatpush1.msra.mxu0 0.0
        %2048 = vmatprep.subr.mxu0 0.0
        %2049 = vmatpush1.msra.mxu0 0.0
        %2050 = vmatprep.subr.mxu0 0.0
        %2051 = vmatpush1.msra.mxu0 0.0
        %2052 = vmatprep.subr.mxu0 0.0
        %2053 = vmatpush1.msra.mxu0 0.0
        %2054 = vmatprep.subr.mxu0 %v1583
        %2055 = vmatpush1.msra.mxu0 %v1582
        %2056 = vmatprep.subr.mxu0 %v1567
        %2057 = vmatpush1.msra.mxu0 %v1566
        %2058 = vmatprep.subr.mxu0 %v1551
        %2059 = vmatpush1.msra.mxu0 %v1550
        %2060 = vmatprep.subr.mxu0 %v1535
        %2061 = vmatpush1.msra.mxu0 %v1534
        %2062 = vmatprep.subr.mxu0 0.0
        %2063 = vmatpush2.msra.mxu0 0.0
        %2064 = vmatprep.subr.mxu0 0.0
        %2065 = vmatpush2.msra.mxu0 0.0
        %2066 = vmatprep.subr.mxu0 0.0
        %2067 = vmatpush2.msra.mxu0 0.0
        %2068 = vmatprep.subr.mxu0 0.0
        %2069 = vmatpush2.msra.mxu0 0.0
        %2070 = vmatprep.subr.mxu0 0.0
        %2071 = vmatpush2.msra.mxu0 0.0
        %2072 = vmatprep.subr.mxu0 0.0
        %2073 = vmatpush2.msra.mxu0 0.0
        %2074 = vmatprep.subr.mxu0 0.0
        %2075 = vmatpush2.msra.mxu0 0.0
        %2076 = vmatprep.subr.mxu0 0.0
        %2077 = vmatpush2.msra.mxu0 0.0
        %2078 = vmatprep.subr.mxu0 0.0
        %2079 = vmatpush2.msra.mxu0 0.0
        %2080 = vmatprep.subr.mxu0 0.0
        %2081 = vmatpush2.msra.mxu0 0.0
        %2082 = vmatprep.subr.mxu0 0.0
        %2083 = vmatpush2.msra.mxu0 0.0
        %2084 = vmatprep.subr.mxu0 0.0
        %2085 = vmatpush2.msra.mxu0 0.0
        %2086 = vmatprep.subr.mxu0 0.0
        %2087 = vmatpush2.msra.mxu0 0.0
        %2088 = vmatprep.subr.mxu0 0.0
        %2089 = vmatpush2.msra.mxu0 0.0
        %2090 = vmatprep.subr.mxu0 0.0
        %2091 = vmatpush2.msra.mxu0 0.0
        %2092 = vmatprep.subr.mxu0 0.0
        %2093 = vmatpush2.msra.mxu0 0.0
        %2094 = vmatprep.mubr.f32.mxu0 0.0
        %2095 = vmatmul.mubr.f32.gmra.mxu0 %v1673
        %v2096 = vpop.f32.mrf.mxu0
        %v2097 = vadd.f32 %v1635, %v2096
        %v2098 = vpop.f32.mrf.mxu0
        %v2099 = vadd.f32 %v1639, %v2098
        %2100 = vdwg.mxu0
        %2101 = vmatprep.subr.mxu0 0.0
        %2102 = vmatpush1.msra.mxu0 0.0
        %2103 = vmatprep.subr.mxu0 0.0
        %2104 = vmatpush1.msra.mxu0 0.0
        %2105 = vmatprep.subr.mxu0 0.0
        %2106 = vmatpush1.msra.mxu0 0.0
        %2107 = vmatprep.subr.mxu0 0.0
        %2108 = vmatpush1.msra.mxu0 0.0
        %2109 = vmatprep.subr.mxu0 0.0
        %2110 = vmatpush1.msra.mxu0 0.0
        %2111 = vmatprep.subr.mxu0 0.0
        %2112 = vmatpush1.msra.mxu0 0.0
        %2113 = vmatprep.subr.mxu0 0.0
        %2114 = vmatpush1.msra.mxu0 0.0
        %2115 = vmatprep.subr.mxu0 0.0
        %2116 = vmatpush1.msra.mxu0 0.0
        %2117 = vmatprep.subr.mxu0 0.0
        %2118 = vmatpush1.msra.mxu0 0.0
        %2119 = vmatprep.subr.mxu0 0.0
        %2120 = vmatpush1.msra.mxu0 0.0
        %2121 = vmatprep.subr.mxu0 0.0
        %2122 = vmatpush1.msra.mxu0 0.0
        %2123 = vmatprep.subr.mxu0 0.0
        %2124 = vmatpush1.msra.mxu0 0.0
        %2125 = vmatprep.subr.mxu0 %v1585
        %2126 = vmatpush1.msra.mxu0 %v1584
        %2127 = vmatprep.subr.mxu0 %v1569
        %2128 = vmatpush1.msra.mxu0 %v1568
        %2129 = vmatprep.subr.mxu0 %v1553
        %2130 = vmatpush1.msra.mxu0 %v1552
        %2131 = vmatprep.subr.mxu0 %v1537
        %2132 = vmatpush1.msra.mxu0 %v1536
        %2133 = vmatprep.subr.mxu0 0.0
        %2134 = vmatpush2.msra.mxu0 0.0
        %2135 = vmatprep.subr.mxu0 0.0
        %2136 = vmatpush2.msra.mxu0 0.0
        %2137 = vmatprep.subr.mxu0 0.0
        %2138 = vmatpush2.msra.mxu0 0.0
        %2139 = vmatprep.subr.mxu0 0.0
        %2140 = vmatpush2.msra.mxu0 0.0
        %2141 = vmatprep.subr.mxu0 0.0
        %2142 = vmatpush2.msra.mxu0 0.0
        %2143 = vmatprep.subr.mxu0 0.0
        %2144 = vmatpush2.msra.mxu0 0.0
        %2145 = vmatprep.subr.mxu0 0.0
        %2146 = vmatpush2.msra.mxu0 0.0
        %2147 = vmatprep.subr.mxu0 0.0
        %2148 = vmatpush2.msra.mxu0 0.0
        %2149 = vmatprep.subr.mxu0 0.0
        %2150 = vmatpush2.msra.mxu0 0.0
        %2151 = vmatprep.subr.mxu0 0.0
        %2152 = vmatpush2.msra.mxu0 0.0
        %2153 = vmatprep.subr.mxu0 0.0
        %2154 = vmatpush2.msra.mxu0 0.0
        %2155 = vmatprep.subr.mxu0 0.0
        %2156 = vmatpush2.msra.mxu0 0.0
        %2157 = vmatprep.subr.mxu0 0.0
        %2158 = vmatpush2.msra.mxu0 0.0
        %2159 = vmatprep.subr.mxu0 0.0
        %2160 = vmatpush2.msra.mxu0 0.0
        %2161 = vmatprep.subr.mxu0 0.0
        %2162 = vmatpush2.msra.mxu0 0.0
        %2163 = vmatprep.subr.mxu0 0.0
        %2164 = vmatpush2.msra.mxu0 0.0
        %2165 = vmatprep.mubr.f32.mxu0 0.0
        %2166 = vmatmul.mubr.f32.gmra.mxu0 %v1673
        %v2167 = vpop.f32.mrf.mxu0
        %v2168 = vadd.f32 %v1643, %v2167
        %v2169 = vpop.f32.mrf.mxu0
        %v2170 = vadd.f32 %v1647, %v2169
        %2171 = vdwg.mxu0
        %2172 = vmatprep.subr.mxu0 0.0
        %2173 = vmatpush1.msra.mxu0 0.0
        %2174 = vmatprep.subr.mxu0 0.0
        %2175 = vmatpush1.msra.mxu0 0.0
        %2176 = vmatprep.subr.mxu0 0.0
        %2177 = vmatpush1.msra.mxu0 0.0
        %2178 = vmatprep.subr.mxu0 0.0
        %2179 = vmatpush1.msra.mxu0 0.0
        %2180 = vmatprep.subr.mxu0 0.0
        %2181 = vmatpush1.msra.mxu0 0.0
        %2182 = vmatprep.subr.mxu0 0.0
        %2183 = vmatpush1.msra.mxu0 0.0
        %2184 = vmatprep.subr.mxu0 0.0
        %2185 = vmatpush1.msra.mxu0 0.0
        %2186 = vmatprep.subr.mxu0 0.0
        %2187 = vmatpush1.msra.mxu0 0.0
        %2188 = vmatprep.subr.mxu0 0.0
        %2189 = vmatpush1.msra.mxu0 0.0
        %2190 = vmatprep.subr.mxu0 0.0
        %2191 = vmatpush1.msra.mxu0 0.0
        %2192 = vmatprep.subr.mxu0 0.0
        %2193 = vmatpush1.msra.mxu0 0.0
        %2194 = vmatprep.subr.mxu0 0.0
        %2195 = vmatpush1.msra.mxu0 0.0
        %2196 = vmatprep.subr.mxu0 %v1587
        %2197 = vmatpush1.msra.mxu0 %v1586
        %2198 = vmatprep.subr.mxu0 %v1571
        %2199 = vmatpush1.msra.mxu0 %v1570
        %2200 = vmatprep.subr.mxu0 %v1555
        %2201 = vmatpush1.msra.mxu0 %v1554
        %2202 = vmatprep.subr.mxu0 %v1539
        %2203 = vmatpush1.msra.mxu0 %v1538
        %2204 = vmatprep.subr.mxu0 0.0
        %2205 = vmatpush2.msra.mxu0 0.0
        %2206 = vmatprep.subr.mxu0 0.0
        %2207 = vmatpush2.msra.mxu0 0.0
        %2208 = vmatprep.subr.mxu0 0.0
        %2209 = vmatpush2.msra.mxu0 0.0
        %2210 = vmatprep.subr.mxu0 0.0
        %2211 = vmatpush2.msra.mxu0 0.0
        %2212 = vmatprep.subr.mxu0 0.0
        %2213 = vmatpush2.msra.mxu0 0.0
        %2214 = vmatprep.subr.mxu0 0.0
        %2215 = vmatpush2.msra.mxu0 0.0
        %2216 = vmatprep.subr.mxu0 0.0
        %2217 = vmatpush2.msra.mxu0 0.0
        %2218 = vmatprep.subr.mxu0 0.0
        %2219 = vmatpush2.msra.mxu0 0.0
        %2220 = vmatprep.subr.mxu0 0.0
        %2221 = vmatpush2.msra.mxu0 0.0
        %2222 = vmatprep.subr.mxu0 0.0
        %2223 = vmatpush2.msra.mxu0 0.0
        %2224 = vmatprep.subr.mxu0 0.0
        %2225 = vmatpush2.msra.mxu0 0.0
        %2226 = vmatprep.subr.mxu0 0.0
        %2227 = vmatpush2.msra.mxu0 0.0
        %2228 = vmatprep.subr.mxu0 0.0
        %2229 = vmatpush2.msra.mxu0 0.0
        %2230 = vmatprep.subr.mxu0 0.0
        %2231 = vmatpush2.msra.mxu0 0.0
        %2232 = vmatprep.subr.mxu0 0.0
        %2233 = vmatpush2.msra.mxu0 0.0
        %2234 = vmatprep.subr.mxu0 0.0
        %2235 = vmatpush2.msra.mxu0 0.0
        %2236 = vmatprep.mubr.f32.mxu0 0.0
        %2237 = vmatmul.mubr.f32.gmra.mxu0 %v1673
        %v2238 = vpop.f32.mrf.mxu0
        %v2239 = vadd.f32 %v1651, %v2238
        %v2240 = vpop.f32.mrf.mxu0
        %v2241 = vadd.f32 %v1655, %v2240
        %2242 = vdwg.mxu0
        %v2243 = vmax.f32 %v1742, 0.0
        %v2244 = vmax.f32 %v1744, 0.0
        %v2245 = vmax.f32 %v1813, 0.0
        %v2246 = vmax.f32 %v1815, 0.0
        %v2247 = vmax.f32 %v1884, 0.0
        %v2248 = vmax.f32 %v1886, 0.0
        %v2249 = vmax.f32 %v1955, 0.0
        %v2250 = vmax.f32 %v1957, 0.0
        %v2251 = vmax.f32 %v2026, 0.0
        %v2252 = vmax.f32 %v2028, 0.0
        %v2253 = vmax.f32 %v2097, 0.0
        %v2254 = vmax.f32 %v2099, 0.0
        %v2255 = vmax.f32 %v2168, 0.0
        %v2256 = vmax.f32 %v2170, 0.0
        %v2257 = vmax.f32 %v2239, 0.0
        %v2258 = vmax.f32 %v2241, 0.0
        %v2259 = vld [vmem:[%s10] sm:$0xff]
        %v2260 = vld [vmem:[%s10 + $0x8] sm:$0xff]
        %v2261 = vld [vmem:[%s10 + $0x10] sm:$0xff]
        %v2262 = vld [vmem:[%s10 + $0x18] sm:$0xff]
        %v2263 = vld [vmem:[%s10 + $0x20] sm:$0xff]
        %v2264 = vld [vmem:[%s10 + $0x28] sm:$0xff]
        %v2265 = vld [vmem:[%s10 + $0x30] sm:$0xff]
        %v2266 = vld [vmem:[%s10 + $0x38] sm:$0xff]
        %v2267 = vld [vmem:[%s10 + $0x40] sm:$0xff]
        %v2268 = vld [vmem:[%s10 + $0x48] sm:$0xff]
        %v2269 = vld [vmem:[%s10 + $0x50] sm:$0xff]
        %v2270 = vld [vmem:[%s10 + $0x58] sm:$0xff]
        %v2271 = vld [vmem:[%s10 + $0x60] sm:$0xff]
        %v2272 = vld [vmem:[%s10 + $0x68] sm:$0xff]
        %v2273 = vld [vmem:[%s10 + $0x70] sm:$0xff]
        %v2274 = vld [vmem:[%s10 + $0x78] sm:$0xff]
        %v2275 = vld [vmem:[%s10 + $0x80] sm:$0xff]
        %v2276 = vld [vmem:[%s10 + $0x88] sm:$0xff]
        %v2277 = vld [vmem:[%s10 + $0x90] sm:$0xff]
        %v2278 = vld [vmem:[%s10 + $0x98] sm:$0xff]
        %v2279 = vld [vmem:[%s10 + $0xa0] sm:$0xff]
        %v2280 = vld [vmem:[%s10 + $0xa8] sm:$0xff]
        %v2281 = vld [vmem:[%s10 + $0xb0] sm:$0xff]
        %v2282 = vld [vmem:[%s10 + $0xb8] sm:$0xff]
        %v2283 = vld [vmem:[%s10 + $0xc0] sm:$0xff]
        %v2284 = vld [vmem:[%s10 + $0xc8] sm:$0xff]
        %v2285 = vld [vmem:[%s10 + $0xd0] sm:$0xff]
        %v2286 = vld [vmem:[%s10 + $0xd8] sm:$0xff]
        %v2287 = vld [vmem:[%s10 + $0xe0] sm:$0xff]
        %v2288 = vld [vmem:[%s10 + $0xe8] sm:$0xff]
        %v2289 = vld [vmem:[%s10 + $0xf0] sm:$0xff]
        %v2290 = vld [vmem:[%s10 + $0xf8] sm:$0xff]
        %v2291 = vld [vmem:[%s10 + $0x100] sm:$0xff]
        %v2292 = vld [vmem:[%s10 + $0x108] sm:$0xff]
        %v2293 = vld [vmem:[%s10 + $0x110] sm:$0xff]
        %v2294 = vld [vmem:[%s10 + $0x118] sm:$0xff]
        %v2295 = vld [vmem:[%s10 + $0x120] sm:$0xff]
        %v2296 = vld [vmem:[%s10 + $0x128] sm:$0xff]
        %v2297 = vld [vmem:[%s10 + $0x130] sm:$0xff]
        %v2298 = vld [vmem:[%s10 + $0x138] sm:$0xff]
        %v2299 = vld [vmem:[%s10 + $0x140] sm:$0xff]
        %v2300 = vld [vmem:[%s10 + $0x148] sm:$0xff]
        %v2301 = vld [vmem:[%s10 + $0x150] sm:$0xff]
        %v2302 = vld [vmem:[%s10 + $0x158] sm:$0xff]
        %v2303 = vld [vmem:[%s10 + $0x160] sm:$0xff]
        %v2304 = vld [vmem:[%s10 + $0x168] sm:$0xff]
        %v2305 = vld [vmem:[%s10 + $0x170] sm:$0xff]
        %v2306 = vld [vmem:[%s10 + $0x178] sm:$0xff]
        %v2307 = vld [vmem:[%s10 + $0x180] sm:$0xff]
        %v2308 = vld [vmem:[%s10 + $0x188] sm:$0xff]
        %v2309 = vld [vmem:[%s10 + $0x190] sm:$0xff]
        %v2310 = vld [vmem:[%s10 + $0x198] sm:$0xff]
        %v2311 = vld [vmem:[%s10 + $0x1a0] sm:$0xff]
        %v2312 = vld [vmem:[%s10 + $0x1a8] sm:$0xff]
        %v2313 = vld [vmem:[%s10 + $0x1b0] sm:$0xff]
        %v2314 = vld [vmem:[%s10 + $0x1b8] sm:$0xff]
        %v2315 = vld [vmem:[%s10 + $0x1c0] sm:$0xff]
        %v2316 = vld [vmem:[%s10 + $0x1c8] sm:$0xff]
        %v2317 = vld [vmem:[%s10 + $0x1d0] sm:$0xff]
        %v2318 = vld [vmem:[%s10 + $0x1d8] sm:$0xff]
        %v2319 = vld [vmem:[%s10 + $0x1e0] sm:$0xff]
        %v2320 = vld [vmem:[%s10 + $0x1e8] sm:$0xff]
        %v2321 = vld [vmem:[%s10 + $0x1f0] sm:$0xff]
        %v2322 = vld [vmem:[%s10 + $0x1f8] sm:$0xff]
        %v2323 = vld [vmem:[%s10 + $0x200] sm:$0xff]
        %v2324 = vld [vmem:[%s10 + $0x208] sm:$0xff]
        %v2325 = vld [vmem:[%s10 + $0x210] sm:$0xff]
        %v2326 = vld [vmem:[%s10 + $0x218] sm:$0xff]
        %v2327 = vld [vmem:[%s10 + $0x220] sm:$0xff]
        %v2328 = vld [vmem:[%s10 + $0x228] sm:$0xff]
        %v2329 = vld [vmem:[%s10 + $0x230] sm:$0xff]
        %v2330 = vld [vmem:[%s10 + $0x238] sm:$0xff]
        %v2331 = vld [vmem:[%s10 + $0x240] sm:$0xff]
        %v2332 = vld [vmem:[%s10 + $0x248] sm:$0xff]
        %v2333 = vld [vmem:[%s10 + $0x250] sm:$0xff]
        %v2334 = vld [vmem:[%s10 + $0x258] sm:$0xff]
        %v2335 = vld [vmem:[%s10 + $0x260] sm:$0xff]
        %v2336 = vld [vmem:[%s10 + $0x268] sm:$0xff]
        %v2337 = vld [vmem:[%s10 + $0x270] sm:$0xff]
        %v2338 = vld [vmem:[%s10 + $0x278] sm:$0xff]
        %v2339 = vld [vmem:[%s10 + $0x280] sm:$0xff]
        %v2340 = vld [vmem:[%s10 + $0x288] sm:$0xff]
        %v2341 = vld [vmem:[%s10 + $0x290] sm:$0xff]
        %v2342 = vld [vmem:[%s10 + $0x298] sm:$0xff]
        %v2343 = vld [vmem:[%s10 + $0x2a0] sm:$0xff]
        %v2344 = vld [vmem:[%s10 + $0x2a8] sm:$0xff]
        %v2345 = vld [vmem:[%s10 + $0x2b0] sm:$0xff]
        %v2346 = vld [vmem:[%s10 + $0x2b8] sm:$0xff]
        %v2347 = vld [vmem:[%s10 + $0x2c0] sm:$0xff]
        %v2348 = vld [vmem:[%s10 + $0x2c8] sm:$0xff]
        %v2349 = vld [vmem:[%s10 + $0x2d0] sm:$0xff]
        %v2350 = vld [vmem:[%s10 + $0x2d8] sm:$0xff]
        %v2351 = vld [vmem:[%s10 + $0x2e0] sm:$0xff]
        %v2352 = vld [vmem:[%s10 + $0x2e8] sm:$0xff]
        %v2353 = vld [vmem:[%s10 + $0x2f0] sm:$0xff]
        %v2354 = vld [vmem:[%s10 + $0x2f8] sm:$0xff]
        %v2355 = vld [vmem:[%s10 + $0x300] sm:$0xff]
        %v2356 = vld [vmem:[%s10 + $0x308] sm:$0xff]
        %v2357 = vld [vmem:[%s10 + $0x310] sm:$0xff]
        %v2358 = vld [vmem:[%s10 + $0x318] sm:$0xff]
        %v2359 = vld [vmem:[%s10 + $0x320] sm:$0xff]
        %v2360 = vld [vmem:[%s10 + $0x328] sm:$0xff]
        %v2361 = vld [vmem:[%s10 + $0x330] sm:$0xff]
        %v2362 = vld [vmem:[%s10 + $0x338] sm:$0xff]
        %v2363 = vld [vmem:[%s10 + $0x340] sm:$0xff]
        %v2364 = vld [vmem:[%s10 + $0x348] sm:$0xff]
        %v2365 = vld [vmem:[%s10 + $0x350] sm:$0xff]
        %v2366 = vld [vmem:[%s10 + $0x358] sm:$0xff]
        %v2367 = vld [vmem:[%s10 + $0x360] sm:$0xff]
        %v2368 = vld [vmem:[%s10 + $0x368] sm:$0xff]
        %v2369 = vld [vmem:[%s10 + $0x370] sm:$0xff]
        %v2370 = vld [vmem:[%s10 + $0x378] sm:$0xff]
        %v2371 = vld [vmem:[%s10 + $0x380] sm:$0xff]
        %v2372 = vld [vmem:[%s10 + $0x388] sm:$0xff]
        %v2373 = vld [vmem:[%s10 + $0x390] sm:$0xff]
        %v2374 = vld [vmem:[%s10 + $0x398] sm:$0xff]
        %v2375 = vld [vmem:[%s10 + $0x3a0] sm:$0xff]
        %v2376 = vld [vmem:[%s10 + $0x3a8] sm:$0xff]
        %v2377 = vld [vmem:[%s10 + $0x3b0] sm:$0xff]
        %v2378 = vld [vmem:[%s10 + $0x3b8] sm:$0xff]
        %v2379 = vld [vmem:[%s10 + $0x3c0] sm:$0xff]
        %v2380 = vld [vmem:[%s10 + $0x3c8] sm:$0xff]
        %v2381 = vld [vmem:[%s10 + $0x3d0] sm:$0xff]
        %v2382 = vld [vmem:[%s10 + $0x3d8] sm:$0xff]
        %v2383 = vld [vmem:[%s10 + $0x3e0] sm:$0xff]
        %v2384 = vld [vmem:[%s10 + $0x3e8] sm:$0xff]
        %v2385 = vld [vmem:[%s10 + $0x3f0] sm:$0xff]
        %v2386 = vld [vmem:[%s10 + $0x3f8] sm:$0xff]
        %v2387 = vld [vmem:[%s10 + $0x400] sm:$0xff]
        %v2388 = vld [vmem:[%s10 + $0x408] sm:$0xff]
        %v2389 = vld [vmem:[%s10 + $0x410] sm:$0xff]
        %v2390 = vld [vmem:[%s10 + $0x418] sm:$0xff]
        %v2391 = vld [vmem:[%s10 + $0x420] sm:$0xff]
        %v2392 = vld [vmem:[%s10 + $0x428] sm:$0xff]
        %v2393 = vld [vmem:[%s10 + $0x430] sm:$0xff]
        %v2394 = vld [vmem:[%s10 + $0x438] sm:$0xff]
        %v2395 = vld [vmem:[%s10 + $0x440] sm:$0xff]
        %v2396 = vld [vmem:[%s10 + $0x448] sm:$0xff]
        %v2397 = vld [vmem:[%s10 + $0x450] sm:$0xff]
        %v2398 = vld [vmem:[%s10 + $0x458] sm:$0xff]
        %v2399 = vld [vmem:[%s10 + $0x460] sm:$0xff]
        %v2400 = vld [vmem:[%s10 + $0x468] sm:$0xff]
        %v2401 = vld [vmem:[%s10 + $0x470] sm:$0xff]
        %v2402 = vld [vmem:[%s10 + $0x478] sm:$0xff]
        %v2403 = vld [vmem:[%s10 + $0x480] sm:$0xff]
        %v2404 = vld [vmem:[%s10 + $0x488] sm:$0xff]
        %v2405 = vld [vmem:[%s10 + $0x490] sm:$0xff]
        %v2406 = vld [vmem:[%s10 + $0x498] sm:$0xff]
        %v2407 = vld [vmem:[%s10 + $0x4a0] sm:$0xff]
        %v2408 = vld [vmem:[%s10 + $0x4a8] sm:$0xff]
        %v2409 = vld [vmem:[%s10 + $0x4b0] sm:$0xff]
        %v2410 = vld [vmem:[%s10 + $0x4b8] sm:$0xff]
        %v2411 = vld [vmem:[%s10 + $0x4c0] sm:$0xff]
        %v2412 = vld [vmem:[%s10 + $0x4c8] sm:$0xff]
        %v2413 = vld [vmem:[%s10 + $0x4d0] sm:$0xff]
        %v2414 = vld [vmem:[%s10 + $0x4d8] sm:$0xff]
        %v2415 = vld [vmem:[%s10 + $0x4e0] sm:$0xff]
        %v2416 = vld [vmem:[%s10 + $0x4e8] sm:$0xff]
        %v2417 = vld [vmem:[%s10 + $0x4f0] sm:$0xff]
        %v2418 = vld [vmem:[%s10 + $0x4f8] sm:$0xff]
        %v2419 = vld [vmem:[%s10 + $0x500] sm:$0xff]
        %v2420 = vld [vmem:[%s10 + $0x508] sm:$0xff]
        %v2421 = vld [vmem:[%s10 + $0x510] sm:$0xff]
        %v2422 = vld [vmem:[%s10 + $0x518] sm:$0xff]
        %v2423 = vld [vmem:[%s10 + $0x520] sm:$0xff]
        %v2424 = vld [vmem:[%s10 + $0x528] sm:$0xff]
        %v2425 = vld [vmem:[%s10 + $0x530] sm:$0xff]
        %v2426 = vld [vmem:[%s10 + $0x538] sm:$0xff]
        %v2427 = vld [vmem:[%s10 + $0x540] sm:$0xff]
        %v2428 = vld [vmem:[%s10 + $0x548] sm:$0xff]
        %v2429 = vld [vmem:[%s10 + $0x550] sm:$0xff]
        %v2430 = vld [vmem:[%s10 + $0x558] sm:$0xff]
        %v2431 = vld [vmem:[%s10 + $0x560] sm:$0xff]
        %v2432 = vld [vmem:[%s10 + $0x568] sm:$0xff]
        %v2433 = vld [vmem:[%s10 + $0x570] sm:$0xff]
        %v2434 = vld [vmem:[%s10 + $0x578] sm:$0xff]
        %v2435 = vld [vmem:[%s10 + $0x580] sm:$0xff]
        %v2436 = vld [vmem:[%s10 + $0x588] sm:$0xff]
        %v2437 = vld [vmem:[%s10 + $0x590] sm:$0xff]
        %v2438 = vld [vmem:[%s10 + $0x598] sm:$0xff]
        %v2439 = vld [vmem:[%s10 + $0x5a0] sm:$0xff]
        %v2440 = vld [vmem:[%s10 + $0x5a8] sm:$0xff]
        %v2441 = vld [vmem:[%s10 + $0x5b0] sm:$0xff]
        %v2442 = vld [vmem:[%s10 + $0x5b8] sm:$0xff]
        %v2443 = vld [vmem:[%s10 + $0x5c0] sm:$0xff]
        %v2444 = vld [vmem:[%s10 + $0x5c8] sm:$0xff]
        %v2445 = vld [vmem:[%s10 + $0x5d0] sm:$0xff]
        %v2446 = vld [vmem:[%s10 + $0x5d8] sm:$0xff]
        %v2447 = vld [vmem:[%s10 + $0x5e0] sm:$0xff]
        %v2448 = vld [vmem:[%s10 + $0x5e8] sm:$0xff]
        %v2449 = vld [vmem:[%s10 + $0x5f0] sm:$0xff]
        %v2450 = vld [vmem:[%s10 + $0x5f8] sm:$0xff]
        %v2451 = vld [vmem:[%s10 + $0x600] sm:$0xff]
        %v2452 = vld [vmem:[%s10 + $0x608] sm:$0xff]
        %v2453 = vld [vmem:[%s10 + $0x610] sm:$0xff]
        %v2454 = vld [vmem:[%s10 + $0x618] sm:$0xff]
        %v2455 = vld [vmem:[%s10 + $0x620] sm:$0xff]
        %v2456 = vld [vmem:[%s10 + $0x628] sm:$0xff]
        %v2457 = vld [vmem:[%s10 + $0x630] sm:$0xff]
        %v2458 = vld [vmem:[%s10 + $0x638] sm:$0xff]
        %v2459 = vld [vmem:[%s10 + $0x640] sm:$0xff]
        %v2460 = vld [vmem:[%s10 + $0x648] sm:$0xff]
        %v2461 = vld [vmem:[%s10 + $0x650] sm:$0xff]
        %v2462 = vld [vmem:[%s10 + $0x658] sm:$0xff]
        %v2463 = vld [vmem:[%s10 + $0x660] sm:$0xff]
        %v2464 = vld [vmem:[%s10 + $0x668] sm:$0xff]
        %v2465 = vld [vmem:[%s10 + $0x670] sm:$0xff]
        %v2466 = vld [vmem:[%s10 + $0x678] sm:$0xff]
        %v2467 = vld [vmem:[%s10 + $0x680] sm:$0xff]
        %v2468 = vld [vmem:[%s10 + $0x688] sm:$0xff]
        %v2469 = vld [vmem:[%s10 + $0x690] sm:$0xff]
        %v2470 = vld [vmem:[%s10 + $0x698] sm:$0xff]
        %v2471 = vld [vmem:[%s10 + $0x6a0] sm:$0xff]
        %v2472 = vld [vmem:[%s10 + $0x6a8] sm:$0xff]
        %v2473 = vld [vmem:[%s10 + $0x6b0] sm:$0xff]
        %v2474 = vld [vmem:[%s10 + $0x6b8] sm:$0xff]
        %v2475 = vld [vmem:[%s10 + $0x6c0] sm:$0xff]
        %v2476 = vld [vmem:[%s10 + $0x6c8] sm:$0xff]
        %v2477 = vld [vmem:[%s10 + $0x6d0] sm:$0xff]
        %v2478 = vld [vmem:[%s10 + $0x6d8] sm:$0xff]
        %v2479 = vld [vmem:[%s10 + $0x6e0] sm:$0xff]
        %v2480 = vld [vmem:[%s10 + $0x6e8] sm:$0xff]
        %v2481 = vld [vmem:[%s10 + $0x6f0] sm:$0xff]
        %v2482 = vld [vmem:[%s10 + $0x6f8] sm:$0xff]
        %v2483 = vld [vmem:[%s10 + $0x700] sm:$0xff]
        %v2484 = vld [vmem:[%s10 + $0x708] sm:$0xff]
        %v2485 = vld [vmem:[%s10 + $0x710] sm:$0xff]
        %v2486 = vld [vmem:[%s10 + $0x718] sm:$0xff]
        %v2487 = vld [vmem:[%s10 + $0x720] sm:$0xff]
        %v2488 = vld [vmem:[%s10 + $0x728] sm:$0xff]
        %v2489 = vld [vmem:[%s10 + $0x730] sm:$0xff]
        %v2490 = vld [vmem:[%s10 + $0x738] sm:$0xff]
        %v2491 = vld [vmem:[%s10 + $0x740] sm:$0xff]
        %v2492 = vld [vmem:[%s10 + $0x748] sm:$0xff]
        %v2493 = vld [vmem:[%s10 + $0x750] sm:$0xff]
        %v2494 = vld [vmem:[%s10 + $0x758] sm:$0xff]
        %v2495 = vld [vmem:[%s10 + $0x760] sm:$0xff]
        %v2496 = vld [vmem:[%s10 + $0x768] sm:$0xff]
        %v2497 = vld [vmem:[%s10 + $0x770] sm:$0xff]
        %v2498 = vld [vmem:[%s10 + $0x778] sm:$0xff]
        %v2499 = vld [vmem:[%s10 + $0x780] sm:$0xff]
        %v2500 = vld [vmem:[%s10 + $0x788] sm:$0xff]
        %v2501 = vld [vmem:[%s10 + $0x790] sm:$0xff]
        %v2502 = vld [vmem:[%s10 + $0x798] sm:$0xff]
        %v2503 = vld [vmem:[%s10 + $0x7a0] sm:$0xff]
        %v2504 = vld [vmem:[%s10 + $0x7a8] sm:$0xff]
        %v2505 = vld [vmem:[%s10 + $0x7b0] sm:$0xff]
        %v2506 = vld [vmem:[%s10 + $0x7b8] sm:$0xff]
        %v2507 = vld [vmem:[%s10 + $0x7c0] sm:$0xff]
        %v2508 = vld [vmem:[%s10 + $0x7c8] sm:$0xff]
        %v2509 = vld [vmem:[%s10 + $0x7d0] sm:$0xff]
        %v2510 = vld [vmem:[%s10 + $0x7d8] sm:$0xff]
        %v2511 = vld [vmem:[%s10 + $0x7e0] sm:$0xff]
        %v2512 = vld [vmem:[%s10 + $0x7e8] sm:$0xff]
        %v2513 = vld [vmem:[%s10 + $0x7f0] sm:$0xff]
        %v2514 = vld [vmem:[%s10 + $0x7f8] sm:$0xff]
        %v2515 = vld [vmem:[%s11] sm:$0x1]
        %v2517 = vlaneseq
        %v2518 = vshrl.u32 %v2517, 7
        %v2519 = vsub.s32 0, %v2518
        %v2520 = vrot.slane %v2515, %v2519
        %2522 = vmatprep.subr.mxu0 0.0
        %2523 = vmatpush1.msra.mxu0 %v2274
        %2524 = vmatprep.subr.mxu0 0.0
        %2525 = vmatpush1.msra.mxu0 %v2273
        %2526 = vmatprep.subr.mxu0 0.0
        %2527 = vmatpush1.msra.mxu0 %v2272
        %2528 = vmatprep.subr.mxu0 0.0
        %2529 = vmatpush1.msra.mxu0 %v2271
        %2530 = vmatprep.subr.mxu0 0.0
        %2531 = vmatpush1.msra.mxu0 %v2270
        %2532 = vmatprep.subr.mxu0 0.0
        %2533 = vmatpush1.msra.mxu0 %v2269
        %2534 = vmatprep.subr.mxu0 0.0
        %2535 = vmatpush1.msra.mxu0 %v2268
        %2536 = vmatprep.subr.mxu0 0.0
        %2537 = vmatpush1.msra.mxu0 %v2267
        %2538 = vmatprep.subr.mxu0 0.0
        %2539 = vmatpush1.msra.mxu0 %v2266
        %2540 = vmatprep.subr.mxu0 0.0
        %2541 = vmatpush1.msra.mxu0 %v2265
        %2542 = vmatprep.subr.mxu0 0.0
        %2543 = vmatpush1.msra.mxu0 %v2264
        %2544 = vmatprep.subr.mxu0 0.0
        %2545 = vmatpush1.msra.mxu0 %v2263
        %2546 = vmatprep.subr.mxu0 0.0
        %2547 = vmatpush1.msra.mxu0 %v2262
        %2548 = vmatprep.subr.mxu0 0.0
        %2549 = vmatpush1.msra.mxu0 %v2261
        %2550 = vmatprep.subr.mxu0 0.0
        %2551 = vmatpush1.msra.mxu0 %v2260
        %2552 = vmatprep.subr.mxu0 0.0
        %2553 = vmatpush1.msra.mxu0 %v2259
        %2554 = vmatprep.subr.mxu0 0.0
        %2555 = vmatpush2.msra.mxu0 %v2290
        %2556 = vmatprep.subr.mxu0 0.0
        %2557 = vmatpush2.msra.mxu0 %v2289
        %2558 = vmatprep.subr.mxu0 0.0
        %2559 = vmatpush2.msra.mxu0 %v2288
        %2560 = vmatprep.subr.mxu0 0.0
        %2561 = vmatpush2.msra.mxu0 %v2287
        %2562 = vmatprep.subr.mxu0 0.0
        %2563 = vmatpush2.msra.mxu0 %v2286
        %2564 = vmatprep.subr.mxu0 0.0
        %2565 = vmatpush2.msra.mxu0 %v2285
        %2566 = vmatprep.subr.mxu0 0.0
        %2567 = vmatpush2.msra.mxu0 %v2284
        %2568 = vmatprep.subr.mxu0 0.0
        %2569 = vmatpush2.msra.mxu0 %v2283
        %2570 = vmatprep.subr.mxu0 0.0
        %2571 = vmatpush2.msra.mxu0 %v2282
        %2572 = vmatprep.subr.mxu0 0.0
        %2573 = vmatpush2.msra.mxu0 %v2281
        %2574 = vmatprep.subr.mxu0 0.0
        %2575 = vmatpush2.msra.mxu0 %v2280
        %2576 = vmatprep.subr.mxu0 0.0
        %2577 = vmatpush2.msra.mxu0 %v2279
        %2578 = vmatprep.subr.mxu0 0.0
        %2579 = vmatpush2.msra.mxu0 %v2278
        %2580 = vmatprep.subr.mxu0 0.0
        %2581 = vmatpush2.msra.mxu0 %v2277
        %2582 = vmatprep.subr.mxu0 0.0
        %2583 = vmatpush2.msra.mxu0 %v2276
        %2584 = vmatprep.subr.mxu0 0.0
        %2585 = vmatpush2.msra.mxu0 %v2275
        %2586 = vmatprep.mubr.f32.mxu0 %v2244
        %2587 = vmatmul.mubr.f32.gmra.mxu0 %v2243
        %v2588 = vpop.f32.mrf.mxu0
        %v2589 = vadd.f32 %v2520, %v2588
        %v2590 = vpop.f32.mrf.mxu0
        %2591 = vdwg.mxu0
        %2592 = vmatprep.subr.mxu0 0.0
        %2593 = vmatpush1.msra.mxu0 %v2306
        %2594 = vmatprep.subr.mxu0 0.0
        %2595 = vmatpush1.msra.mxu0 %v2305
        %2596 = vmatprep.subr.mxu0 0.0
        %2597 = vmatpush1.msra.mxu0 %v2304
        %2598 = vmatprep.subr.mxu0 0.0
        %2599 = vmatpush1.msra.mxu0 %v2303
        %2600 = vmatprep.subr.mxu0 0.0
        %2601 = vmatpush1.msra.mxu0 %v2302
        %2602 = vmatprep.subr.mxu0 0.0
        %2603 = vmatpush1.msra.mxu0 %v2301
        %2604 = vmatprep.subr.mxu0 0.0
        %2605 = vmatpush1.msra.mxu0 %v2300
        %2606 = vmatprep.subr.mxu0 0.0
        %2607 = vmatpush1.msra.mxu0 %v2299
        %2608 = vmatprep.subr.mxu0 0.0
        %2609 = vmatpush1.msra.mxu0 %v2298
        %2610 = vmatprep.subr.mxu0 0.0
        %2611 = vmatpush1.msra.mxu0 %v2297
        %2612 = vmatprep.subr.mxu0 0.0
        %2613 = vmatpush1.msra.mxu0 %v2296
        %2614 = vmatprep.subr.mxu0 0.0
        %2615 = vmatpush1.msra.mxu0 %v2295
        %2616 = vmatprep.subr.mxu0 0.0
        %2617 = vmatpush1.msra.mxu0 %v2294
        %2618 = vmatprep.subr.mxu0 0.0
        %2619 = vmatpush1.msra.mxu0 %v2293
        %2620 = vmatprep.subr.mxu0 0.0
        %2621 = vmatpush1.msra.mxu0 %v2292
        %2622 = vmatprep.subr.mxu0 0.0
        %2623 = vmatpush1.msra.mxu0 %v2291
        %2624 = vmatprep.subr.mxu0 0.0
        %2625 = vmatpush2.msra.mxu0 %v2322
        %2626 = vmatprep.subr.mxu0 0.0
        %2627 = vmatpush2.msra.mxu0 %v2321
        %2628 = vmatprep.subr.mxu0 0.0
        %2629 = vmatpush2.msra.mxu0 %v2320
        %2630 = vmatprep.subr.mxu0 0.0
        %2631 = vmatpush2.msra.mxu0 %v2319
        %2632 = vmatprep.subr.mxu0 0.0
        %2633 = vmatpush2.msra.mxu0 %v2318
        %2634 = vmatprep.subr.mxu0 0.0
        %2635 = vmatpush2.msra.mxu0 %v2317
        %2636 = vmatprep.subr.mxu0 0.0
        %2637 = vmatpush2.msra.mxu0 %v2316
        %2638 = vmatprep.subr.mxu0 0.0
        %2639 = vmatpush2.msra.mxu0 %v2315
        %2640 = vmatprep.subr.mxu0 0.0
        %2641 = vmatpush2.msra.mxu0 %v2314
        %2642 = vmatprep.subr.mxu0 0.0
        %2643 = vmatpush2.msra.mxu0 %v2313
        %2644 = vmatprep.subr.mxu0 0.0
        %2645 = vmatpush2.msra.mxu0 %v2312
        %2646 = vmatprep.subr.mxu0 0.0
        %2647 = vmatpush2.msra.mxu0 %v2311
        %2648 = vmatprep.subr.mxu0 0.0
        %2649 = vmatpush2.msra.mxu0 %v2310
        %2650 = vmatprep.subr.mxu0 0.0
        %2651 = vmatpush2.msra.mxu0 %v2309
        %2652 = vmatprep.subr.mxu0 0.0
        %2653 = vmatpush2.msra.mxu0 %v2308
        %2654 = vmatprep.subr.mxu0 0.0
        %2655 = vmatpush2.msra.mxu0 %v2307
        %2656 = vmatprep.mubr.f32.mxu0 %v2246
        %2657 = vmatmul.mubr.f32.gmra.mxu0 %v2245
        %v2658 = vpop.f32.mrf.mxu0
        %v2659 = vadd.f32 %v2589, %v2658
        %v2660 = vpop.f32.mrf.mxu0
        %2661 = vdwg.mxu0
        %2662 = vmatprep.subr.mxu0 0.0
        %2663 = vmatpush1.msra.mxu0 %v2338
        %2664 = vmatprep.subr.mxu0 0.0
        %2665 = vmatpush1.msra.mxu0 %v2337
        %2666 = vmatprep.subr.mxu0 0.0
        %2667 = vmatpush1.msra.mxu0 %v2336
        %2668 = vmatprep.subr.mxu0 0.0
        %2669 = vmatpush1.msra.mxu0 %v2335
        %2670 = vmatprep.subr.mxu0 0.0
        %2671 = vmatpush1.msra.mxu0 %v2334
        %2672 = vmatprep.subr.mxu0 0.0
        %2673 = vmatpush1.msra.mxu0 %v2333
        %2674 = vmatprep.subr.mxu0 0.0
        %2675 = vmatpush1.msra.mxu0 %v2332
        %2676 = vmatprep.subr.mxu0 0.0
        %2677 = vmatpush1.msra.mxu0 %v2331
        %2678 = vmatprep.subr.mxu0 0.0
        %2679 = vmatpush1.msra.mxu0 %v2330
        %2680 = vmatprep.subr.mxu0 0.0
        %2681 = vmatpush1.msra.mxu0 %v2329
        %2682 = vmatprep.subr.mxu0 0.0
        %2683 = vmatpush1.msra.mxu0 %v2328
        %2684 = vmatprep.subr.mxu0 0.0
        %2685 = vmatpush1.msra.mxu0 %v2327
        %2686 = vmatprep.subr.mxu0 0.0
        %2687 = vmatpush1.msra.mxu0 %v2326
        %2688 = vmatprep.subr.mxu0 0.0
        %2689 = vmatpush1.msra.mxu0 %v2325
        %2690 = vmatprep.subr.mxu0 0.0
        %2691 = vmatpush1.msra.mxu0 %v2324
        %2692 = vmatprep.subr.mxu0 0.0
        %2693 = vmatpush1.msra.mxu0 %v2323
        %2694 = vmatprep.subr.mxu0 0.0
        %2695 = vmatpush2.msra.mxu0 %v2354
        %2696 = vmatprep.subr.mxu0 0.0
        %2697 = vmatpush2.msra.mxu0 %v2353
        %2698 = vmatprep.subr.mxu0 0.0
        %2699 = vmatpush2.msra.mxu0 %v2352
        %2700 = vmatprep.subr.mxu0 0.0
        %2701 = vmatpush2.msra.mxu0 %v2351
        %2702 = vmatprep.subr.mxu0 0.0
        %2703 = vmatpush2.msra.mxu0 %v2350
        %2704 = vmatprep.subr.mxu0 0.0
        %2705 = vmatpush2.msra.mxu0 %v2349
        %2706 = vmatprep.subr.mxu0 0.0
        %2707 = vmatpush2.msra.mxu0 %v2348
        %2708 = vmatprep.subr.mxu0 0.0
        %2709 = vmatpush2.msra.mxu0 %v2347
        %2710 = vmatprep.subr.mxu0 0.0
        %2711 = vmatpush2.msra.mxu0 %v2346
        %2712 = vmatprep.subr.mxu0 0.0
        %2713 = vmatpush2.msra.mxu0 %v2345
        %2714 = vmatprep.subr.mxu0 0.0
        %2715 = vmatpush2.msra.mxu0 %v2344
        %2716 = vmatprep.subr.mxu0 0.0
        %2717 = vmatpush2.msra.mxu0 %v2343
        %2718 = vmatprep.subr.mxu0 0.0
        %2719 = vmatpush2.msra.mxu0 %v2342
        %2720 = vmatprep.subr.mxu0 0.0
        %2721 = vmatpush2.msra.mxu0 %v2341
        %2722 = vmatprep.subr.mxu0 0.0
        %2723 = vmatpush2.msra.mxu0 %v2340
        %2724 = vmatprep.subr.mxu0 0.0
        %2725 = vmatpush2.msra.mxu0 %v2339
        %2726 = vmatprep.mubr.f32.mxu0 %v2248
        %2727 = vmatmul.mubr.f32.gmra.mxu0 %v2247
        %v2728 = vpop.f32.mrf.mxu0
        %v2729 = vadd.f32 %v2659, %v2728
        %v2730 = vpop.f32.mrf.mxu0
        %2731 = vdwg.mxu0
        %2732 = vmatprep.subr.mxu0 0.0
        %2733 = vmatpush1.msra.mxu0 %v2370
        %2734 = vmatprep.subr.mxu0 0.0
        %2735 = vmatpush1.msra.mxu0 %v2369
        %2736 = vmatprep.subr.mxu0 0.0
        %2737 = vmatpush1.msra.mxu0 %v2368
        %2738 = vmatprep.subr.mxu0 0.0
        %2739 = vmatpush1.msra.mxu0 %v2367
        %2740 = vmatprep.subr.mxu0 0.0
        %2741 = vmatpush1.msra.mxu0 %v2366
        %2742 = vmatprep.subr.mxu0 0.0
        %2743 = vmatpush1.msra.mxu0 %v2365
        %2744 = vmatprep.subr.mxu0 0.0
        %2745 = vmatpush1.msra.mxu0 %v2364
        %2746 = vmatprep.subr.mxu0 0.0
        %2747 = vmatpush1.msra.mxu0 %v2363
        %2748 = vmatprep.subr.mxu0 0.0
        %2749 = vmatpush1.msra.mxu0 %v2362
        %2750 = vmatprep.subr.mxu0 0.0
        %2751 = vmatpush1.msra.mxu0 %v2361
        %2752 = vmatprep.subr.mxu0 0.0
        %2753 = vmatpush1.msra.mxu0 %v2360
        %2754 = vmatprep.subr.mxu0 0.0
        %2755 = vmatpush1.msra.mxu0 %v2359
        %2756 = vmatprep.subr.mxu0 0.0
        %2757 = vmatpush1.msra.mxu0 %v2358
        %2758 = vmatprep.subr.mxu0 0.0
        %2759 = vmatpush1.msra.mxu0 %v2357
        %2760 = vmatprep.subr.mxu0 0.0
        %2761 = vmatpush1.msra.mxu0 %v2356
        %2762 = vmatprep.subr.mxu0 0.0
        %2763 = vmatpush1.msra.mxu0 %v2355
        %2764 = vmatprep.subr.mxu0 0.0
        %2765 = vmatpush2.msra.mxu0 %v2386
        %2766 = vmatprep.subr.mxu0 0.0
        %2767 = vmatpush2.msra.mxu0 %v2385
        %2768 = vmatprep.subr.mxu0 0.0
        %2769 = vmatpush2.msra.mxu0 %v2384
        %2770 = vmatprep.subr.mxu0 0.0
        %2771 = vmatpush2.msra.mxu0 %v2383
        %2772 = vmatprep.subr.mxu0 0.0
        %2773 = vmatpush2.msra.mxu0 %v2382
        %2774 = vmatprep.subr.mxu0 0.0
        %2775 = vmatpush2.msra.mxu0 %v2381
        %2776 = vmatprep.subr.mxu0 0.0
        %2777 = vmatpush2.msra.mxu0 %v2380
        %2778 = vmatprep.subr.mxu0 0.0
        %2779 = vmatpush2.msra.mxu0 %v2379
        %2780 = vmatprep.subr.mxu0 0.0
        %2781 = vmatpush2.msra.mxu0 %v2378
        %2782 = vmatprep.subr.mxu0 0.0
        %2783 = vmatpush2.msra.mxu0 %v2377
        %2784 = vmatprep.subr.mxu0 0.0
        %2785 = vmatpush2.msra.mxu0 %v2376
        %2786 = vmatprep.subr.mxu0 0.0
        %2787 = vmatpush2.msra.mxu0 %v2375
        %2788 = vmatprep.subr.mxu0 0.0
        %2789 = vmatpush2.msra.mxu0 %v2374
        %2790 = vmatprep.subr.mxu0 0.0
        %2791 = vmatpush2.msra.mxu0 %v2373
        %2792 = vmatprep.subr.mxu0 0.0
        %2793 = vmatpush2.msra.mxu0 %v2372
        %2794 = vmatprep.subr.mxu0 0.0
        %2795 = vmatpush2.msra.mxu0 %v2371
        %2796 = vmatprep.mubr.f32.mxu0 %v2250
        %2797 = vmatmul.mubr.f32.gmra.mxu0 %v2249
        %v2798 = vpop.f32.mrf.mxu0
        %v2799 = vadd.f32 %v2729, %v2798
        %v2800 = vpop.f32.mrf.mxu0
        %2801 = vdwg.mxu0
        %2802 = vmatprep.subr.mxu0 0.0
        %2803 = vmatpush1.msra.mxu0 %v2402
        %2804 = vmatprep.subr.mxu0 0.0
        %2805 = vmatpush1.msra.mxu0 %v2401
        %2806 = vmatprep.subr.mxu0 0.0
        %2807 = vmatpush1.msra.mxu0 %v2400
        %2808 = vmatprep.subr.mxu0 0.0
        %2809 = vmatpush1.msra.mxu0 %v2399
        %2810 = vmatprep.subr.mxu0 0.0
        %2811 = vmatpush1.msra.mxu0 %v2398
        %2812 = vmatprep.subr.mxu0 0.0
        %2813 = vmatpush1.msra.mxu0 %v2397
        %2814 = vmatprep.subr.mxu0 0.0
        %2815 = vmatpush1.msra.mxu0 %v2396
        %2816 = vmatprep.subr.mxu0 0.0
        %2817 = vmatpush1.msra.mxu0 %v2395
        %2818 = vmatprep.subr.mxu0 0.0
        %2819 = vmatpush1.msra.mxu0 %v2394
        %2820 = vmatprep.subr.mxu0 0.0
        %2821 = vmatpush1.msra.mxu0 %v2393
        %2822 = vmatprep.subr.mxu0 0.0
        %2823 = vmatpush1.msra.mxu0 %v2392
        %2824 = vmatprep.subr.mxu0 0.0
        %2825 = vmatpush1.msra.mxu0 %v2391
        %2826 = vmatprep.subr.mxu0 0.0
        %2827 = vmatpush1.msra.mxu0 %v2390
        %2828 = vmatprep.subr.mxu0 0.0
        %2829 = vmatpush1.msra.mxu0 %v2389
        %2830 = vmatprep.subr.mxu0 0.0
        %2831 = vmatpush1.msra.mxu0 %v2388
        %2832 = vmatprep.subr.mxu0 0.0
        %2833 = vmatpush1.msra.mxu0 %v2387
        %2834 = vmatprep.subr.mxu0 0.0
        %2835 = vmatpush2.msra.mxu0 %v2418
        %2836 = vmatprep.subr.mxu0 0.0
        %2837 = vmatpush2.msra.mxu0 %v2417
        %2838 = vmatprep.subr.mxu0 0.0
        %2839 = vmatpush2.msra.mxu0 %v2416
        %2840 = vmatprep.subr.mxu0 0.0
        %2841 = vmatpush2.msra.mxu0 %v2415
        %2842 = vmatprep.subr.mxu0 0.0
        %2843 = vmatpush2.msra.mxu0 %v2414
        %2844 = vmatprep.subr.mxu0 0.0
        %2845 = vmatpush2.msra.mxu0 %v2413
        %2846 = vmatprep.subr.mxu0 0.0
        %2847 = vmatpush2.msra.mxu0 %v2412
        %2848 = vmatprep.subr.mxu0 0.0
        %2849 = vmatpush2.msra.mxu0 %v2411
        %2850 = vmatprep.subr.mxu0 0.0
        %2851 = vmatpush2.msra.mxu0 %v2410
        %2852 = vmatprep.subr.mxu0 0.0
        %2853 = vmatpush2.msra.mxu0 %v2409
        %2854 = vmatprep.subr.mxu0 0.0
        %2855 = vmatpush2.msra.mxu0 %v2408
        %2856 = vmatprep.subr.mxu0 0.0
        %2857 = vmatpush2.msra.mxu0 %v2407
        %2858 = vmatprep.subr.mxu0 0.0
        %2859 = vmatpush2.msra.mxu0 %v2406
        %2860 = vmatprep.subr.mxu0 0.0
        %2861 = vmatpush2.msra.mxu0 %v2405
        %2862 = vmatprep.subr.mxu0 0.0
        %2863 = vmatpush2.msra.mxu0 %v2404
        %2864 = vmatprep.subr.mxu0 0.0
        %2865 = vmatpush2.msra.mxu0 %v2403
        %2866 = vmatprep.mubr.f32.mxu0 %v2252
        %2867 = vmatmul.mubr.f32.gmra.mxu0 %v2251
        %v2868 = vpop.f32.mrf.mxu0
        %v2869 = vadd.f32 %v2799, %v2868
        %v2870 = vpop.f32.mrf.mxu0
        %2871 = vdwg.mxu0
        %2872 = vmatprep.subr.mxu0 0.0
        %2873 = vmatpush1.msra.mxu0 %v2434
        %2874 = vmatprep.subr.mxu0 0.0
        %2875 = vmatpush1.msra.mxu0 %v2433
        %2876 = vmatprep.subr.mxu0 0.0
        %2877 = vmatpush1.msra.mxu0 %v2432
        %2878 = vmatprep.subr.mxu0 0.0
        %2879 = vmatpush1.msra.mxu0 %v2431
        %2880 = vmatprep.subr.mxu0 0.0
        %2881 = vmatpush1.msra.mxu0 %v2430
        %2882 = vmatprep.subr.mxu0 0.0
        %2883 = vmatpush1.msra.mxu0 %v2429
        %2884 = vmatprep.subr.mxu0 0.0
        %2885 = vmatpush1.msra.mxu0 %v2428
        %2886 = vmatprep.subr.mxu0 0.0
        %2887 = vmatpush1.msra.mxu0 %v2427
        %2888 = vmatprep.subr.mxu0 0.0
        %2889 = vmatpush1.msra.mxu0 %v2426
        %2890 = vmatprep.subr.mxu0 0.0
        %2891 = vmatpush1.msra.mxu0 %v2425
        %2892 = vmatprep.subr.mxu0 0.0
        %2893 = vmatpush1.msra.mxu0 %v2424
        %2894 = vmatprep.subr.mxu0 0.0
        %2895 = vmatpush1.msra.mxu0 %v2423
        %2896 = vmatprep.subr.mxu0 0.0
        %2897 = vmatpush1.msra.mxu0 %v2422
        %2898 = vmatprep.subr.mxu0 0.0
        %2899 = vmatpush1.msra.mxu0 %v2421
        %2900 = vmatprep.subr.mxu0 0.0
        %2901 = vmatpush1.msra.mxu0 %v2420
        %2902 = vmatprep.subr.mxu0 0.0
        %2903 = vmatpush1.msra.mxu0 %v2419
        %2904 = vmatprep.subr.mxu0 0.0
        %2905 = vmatpush2.msra.mxu0 %v2450
        %2906 = vmatprep.subr.mxu0 0.0
        %2907 = vmatpush2.msra.mxu0 %v2449
        %2908 = vmatprep.subr.mxu0 0.0
        %2909 = vmatpush2.msra.mxu0 %v2448
        %2910 = vmatprep.subr.mxu0 0.0
        %2911 = vmatpush2.msra.mxu0 %v2447
        %2912 = vmatprep.subr.mxu0 0.0
        %2913 = vmatpush2.msra.mxu0 %v2446
        %2914 = vmatprep.subr.mxu0 0.0
        %2915 = vmatpush2.msra.mxu0 %v2445
        %2916 = vmatprep.subr.mxu0 0.0
        %2917 = vmatpush2.msra.mxu0 %v2444
        %2918 = vmatprep.subr.mxu0 0.0
        %2919 = vmatpush2.msra.mxu0 %v2443
        %2920 = vmatprep.subr.mxu0 0.0
        %2921 = vmatpush2.msra.mxu0 %v2442
        %2922 = vmatprep.subr.mxu0 0.0
        %2923 = vmatpush2.msra.mxu0 %v2441
        %2924 = vmatprep.subr.mxu0 0.0
        %2925 = vmatpush2.msra.mxu0 %v2440
        %2926 = vmatprep.subr.mxu0 0.0
        %2927 = vmatpush2.msra.mxu0 %v2439
        %2928 = vmatprep.subr.mxu0 0.0
        %2929 = vmatpush2.msra.mxu0 %v2438
        %2930 = vmatprep.subr.mxu0 0.0
        %2931 = vmatpush2.msra.mxu0 %v2437
        %2932 = vmatprep.subr.mxu0 0.0
        %2933 = vmatpush2.msra.mxu0 %v2436
        %2934 = vmatprep.subr.mxu0 0.0
        %2935 = vmatpush2.msra.mxu0 %v2435
        %2936 = vmatprep.mubr.f32.mxu0 %v2254
        %2937 = vmatmul.mubr.f32.gmra.mxu0 %v2253
        %v2938 = vpop.f32.mrf.mxu0
        %v2939 = vadd.f32 %v2869, %v2938
        %v2940 = vpop.f32.mrf.mxu0
        %2941 = vdwg.mxu0
        %2942 = vmatprep.subr.mxu0 0.0
        %2943 = vmatpush1.msra.mxu0 %v2466
        %2944 = vmatprep.subr.mxu0 0.0
        %2945 = vmatpush1.msra.mxu0 %v2465
        %2946 = vmatprep.subr.mxu0 0.0
        %2947 = vmatpush1.msra.mxu0 %v2464
        %2948 = vmatprep.subr.mxu0 0.0
        %2949 = vmatpush1.msra.mxu0 %v2463
        %2950 = vmatprep.subr.mxu0 0.0
        %2951 = vmatpush1.msra.mxu0 %v2462
        %2952 = vmatprep.subr.mxu0 0.0
        %2953 = vmatpush1.msra.mxu0 %v2461
        %2954 = vmatprep.subr.mxu0 0.0
        %2955 = vmatpush1.msra.mxu0 %v2460
        %2956 = vmatprep.subr.mxu0 0.0
        %2957 = vmatpush1.msra.mxu0 %v2459
        %2958 = vmatprep.subr.mxu0 0.0
        %2959 = vmatpush1.msra.mxu0 %v2458
        %2960 = vmatprep.subr.mxu0 0.0
        %2961 = vmatpush1.msra.mxu0 %v2457
        %2962 = vmatprep.subr.mxu0 0.0
        %2963 = vmatpush1.msra.mxu0 %v2456
        %2964 = vmatprep.subr.mxu0 0.0
        %2965 = vmatpush1.msra.mxu0 %v2455
        %2966 = vmatprep.subr.mxu0 0.0
        %2967 = vmatpush1.msra.mxu0 %v2454
        %2968 = vmatprep.subr.mxu0 0.0
        %2969 = vmatpush1.msra.mxu0 %v2453
        %2970 = vmatprep.subr.mxu0 0.0
        %2971 = vmatpush1.msra.mxu0 %v2452
        %2972 = vmatprep.subr.mxu0 0.0
        %2973 = vmatpush1.msra.mxu0 %v2451
        %2974 = vmatprep.subr.mxu0 0.0
        %2975 = vmatpush2.msra.mxu0 %v2482
        %2976 = vmatprep.subr.mxu0 0.0
        %2977 = vmatpush2.msra.mxu0 %v2481
        %2978 = vmatprep.subr.mxu0 0.0
        %2979 = vmatpush2.msra.mxu0 %v2480
        %2980 = vmatprep.subr.mxu0 0.0
        %2981 = vmatpush2.msra.mxu0 %v2479
        %2982 = vmatprep.subr.mxu0 0.0
        %2983 = vmatpush2.msra.mxu0 %v2478
        %2984 = vmatprep.subr.mxu0 0.0
        %2985 = vmatpush2.msra.mxu0 %v2477
        %2986 = vmatprep.subr.mxu0 0.0
        %2987 = vmatpush2.msra.mxu0 %v2476
        %2988 = vmatprep.subr.mxu0 0.0
        %2989 = vmatpush2.msra.mxu0 %v2475
        %2990 = vmatprep.subr.mxu0 0.0
        %2991 = vmatpush2.msra.mxu0 %v2474
        %2992 = vmatprep.subr.mxu0 0.0
        %2993 = vmatpush2.msra.mxu0 %v2473
        %2994 = vmatprep.subr.mxu0 0.0
        %2995 = vmatpush2.msra.mxu0 %v2472
        %2996 = vmatprep.subr.mxu0 0.0
        %2997 = vmatpush2.msra.mxu0 %v2471
        %2998 = vmatprep.subr.mxu0 0.0
        %2999 = vmatpush2.msra.mxu0 %v2470
        %3000 = vmatprep.subr.mxu0 0.0
        %3001 = vmatpush2.msra.mxu0 %v2469
        %3002 = vmatprep.subr.mxu0 0.0
        %3003 = vmatpush2.msra.mxu0 %v2468
        %3004 = vmatprep.subr.mxu0 0.0
        %3005 = vmatpush2.msra.mxu0 %v2467
        %3006 = vmatprep.mubr.f32.mxu0 %v2256
        %3007 = vmatmul.mubr.f32.gmra.mxu0 %v2255
        %v3008 = vpop.f32.mrf.mxu0
        %v3009 = vadd.f32 %v2939, %v3008
        %v3010 = vpop.f32.mrf.mxu0
        %3011 = vdwg.mxu0
        %3012 = vmatprep.subr.mxu0 0.0
        %3013 = vmatpush1.msra.mxu0 %v2498
        %3014 = vmatprep.subr.mxu0 0.0
        %3015 = vmatpush1.msra.mxu0 %v2497
        %3016 = vmatprep.subr.mxu0 0.0
        %3017 = vmatpush1.msra.mxu0 %v2496
        %3018 = vmatprep.subr.mxu0 0.0
        %3019 = vmatpush1.msra.mxu0 %v2495
        %3020 = vmatprep.subr.mxu0 0.0
        %3021 = vmatpush1.msra.mxu0 %v2494
        %3022 = vmatprep.subr.mxu0 0.0
        %3023 = vmatpush1.msra.mxu0 %v2493
        %3024 = vmatprep.subr.mxu0 0.0
        %3025 = vmatpush1.msra.mxu0 %v2492
        %3026 = vmatprep.subr.mxu0 0.0
        %3027 = vmatpush1.msra.mxu0 %v2491
        %3028 = vmatprep.subr.mxu0 0.0
        %3029 = vmatpush1.msra.mxu0 %v2490
        %3030 = vmatprep.subr.mxu0 0.0
        %3031 = vmatpush1.msra.mxu0 %v2489
        %3032 = vmatprep.subr.mxu0 0.0
        %3033 = vmatpush1.msra.mxu0 %v2488
        %3034 = vmatprep.subr.mxu0 0.0
        %3035 = vmatpush1.msra.mxu0 %v2487
        %3036 = vmatprep.subr.mxu0 0.0
        %3037 = vmatpush1.msra.mxu0 %v2486
        %3038 = vmatprep.subr.mxu0 0.0
        %3039 = vmatpush1.msra.mxu0 %v2485
        %3040 = vmatprep.subr.mxu0 0.0
        %3041 = vmatpush1.msra.mxu0 %v2484
        %3042 = vmatprep.subr.mxu0 0.0
        %3043 = vmatpush1.msra.mxu0 %v2483
        %3044 = vmatprep.subr.mxu0 0.0
        %3045 = vmatpush2.msra.mxu0 %v2514
        %3046 = vmatprep.subr.mxu0 0.0
        %3047 = vmatpush2.msra.mxu0 %v2513
        %3048 = vmatprep.subr.mxu0 0.0
        %3049 = vmatpush2.msra.mxu0 %v2512
        %3050 = vmatprep.subr.mxu0 0.0
        %3051 = vmatpush2.msra.mxu0 %v2511
        %3052 = vmatprep.subr.mxu0 0.0
        %3053 = vmatpush2.msra.mxu0 %v2510
        %3054 = vmatprep.subr.mxu0 0.0
        %3055 = vmatpush2.msra.mxu0 %v2509
        %3056 = vmatprep.subr.mxu0 0.0
        %3057 = vmatpush2.msra.mxu0 %v2508
        %3058 = vmatprep.subr.mxu0 0.0
        %3059 = vmatpush2.msra.mxu0 %v2507
        %3060 = vmatprep.subr.mxu0 0.0
        %3061 = vmatpush2.msra.mxu0 %v2506
        %3062 = vmatprep.subr.mxu0 0.0
        %3063 = vmatpush2.msra.mxu0 %v2505
        %3064 = vmatprep.subr.mxu0 0.0
        %3065 = vmatpush2.msra.mxu0 %v2504
        %3066 = vmatprep.subr.mxu0 0.0
        %3067 = vmatpush2.msra.mxu0 %v2503
        %3068 = vmatprep.subr.mxu0 0.0
        %3069 = vmatpush2.msra.mxu0 %v2502
        %3070 = vmatprep.subr.mxu0 0.0
        %3071 = vmatpush2.msra.mxu0 %v2501
        %3072 = vmatprep.subr.mxu0 0.0
        %3073 = vmatpush2.msra.mxu0 %v2500
        %3074 = vmatprep.subr.mxu0 0.0
        %3075 = vmatpush2.msra.mxu0 %v2499
        %3076 = vmatprep.mubr.f32.mxu0 %v2258
        %3077 = vmatmul.mubr.f32.gmra.mxu0 %v2257
        %v3078 = vpop.f32.mrf.mxu0
        %v3079 = vadd.f32 %v3009, %v3078
        %v3080 = vpop.f32.mrf.mxu0
        %3081 = vdwg.mxu0
        %v3082 = vadd.f32 %v3079, %v1523
        %v3083 = vsel %vm435, %v3082, 0.0
        %3084 = vadd.xlane.f32.xlu0 %v3083
        %v3085 = vpop.xlane.xlu0 %3084
        %v3086 = vmul.f32 %v3085, %v1499
        %v3087 = vsub.f32 %v3082, %v3086
        %v3088 = vmul.f32 %v3087, %v3087
        %v3089 = vsel %vm435, %v3088, 0.0
        %3090 = vadd.xlane.f32.xlu0 %v3089
        %v3091 = vpop.xlane.xlu0 %3090
        %v3092 = vmul.f32 %v3091, %v1499
        %v3093 = vadd.f32 %v3092, 1e-05
        %v3094 = vrsqrt.pop %v3093
        %v3095 = vmul.f32 %v3087, %v3094
        %v3096 = vmul.f32 %v3095, %v1514
        %v3097 = vadd.f32 %v3096, %v1521
        %3098 = vst.msk [vmem:[%s415] sm:$0xff] %vm435, %v3097
        %s3099 = sand.u32 %s296, 1
        %s3100 = scalar_lea.sflag [#allocation3], %s3099
        %s3101 = sand.u32 %s296, 1
        %s3102 = smul.addr %s3101, 8
        %s3103 = scalar_lea.vmem [#allocation2], %s3102
        // Predicated region
        $region69: #{tpu_custom_call.1} parent=67 // pred_check
          %p3104 = pneg %p306
        $region70: #{tpu_custom_call.1} parent=67 // pred_check_branch
          %3106 = sbr.rel (%p3104) target = $region72
        $region71: #{tpu_custom_call.1} parent=67 // pred_region
          %s3108 = ssub.s32 128, 128
          %3109 = vsyncadd %s3100, %s3108
          %s3110 = smul.addr %s26, 128
          %s3111 = scalar_lea.hbm %s12, %s3110
          %s3113 = sshll.u32 %s3103, 4
          %s3114 = int_to_ptr.vmem [resolvable:$true] %s3113
          %3116 = dma.vmem_to_hbm [thread:$0]  %s3114, 128, %s3111, %s3100
        $region72: #{tpu_custom_call.1} parent=67 // pred_fallthru
          _
      $region68: #{tpu_custom_call.1} parent=5 // pred_fallthru
        _
      %p3117 = scmp.le.s32.totalorder 2, %s21
      // Predicated region
      $region73: #{tpu_custom_call.1} parent=5 // pred_check
        %p3118 = pneg %p3117
      $region74: #{tpu_custom_call.1} parent=5 // pred_check_branch
        %3120 = sbr.rel (%p3118) target = $region76
      $region75: #{tpu_custom_call.1} parent=5 // pred_region
        %s3121 = ssub.s32 %s21, 2
        // Predicated region
        $region77: #{tpu_custom_call.1} parent=75 // pred_check
          %p3122 = pneg %p312
        $region78: #{tpu_custom_call.1} parent=75 // pred_check_branch
          %3124 = sbr.rel (%p3122) target = $region80
        $region79: #{tpu_custom_call.1} parent=75 // pred_region
          %s3125 = sand.u32 %s297, 1
          %s3126 = scalar_lea.sflag [#allocation3], %s3125
          %s3127 = sand.u32 %s297, 1
          %s3128 = smul.addr %s3127, 8
          %s3129 = scalar_lea.vmem [#allocation2], %s3128
          %3130 = dma.done %s3126, 128
        $region80: #{tpu_custom_call.1} parent=75 // pred_fallthru
          _
      $region76: #{tpu_custom_call.1} parent=5 // pred_fallthru
        _
    $region6: #{tpu_custom_call.1} parent=1 // loop_footer
      %s25 = sadd.s32 1, %s21
    $region7: #{tpu_custom_call.1} parent=1 // loop_footer_branch
      %20 = sbr.rel target = $region3
    $region8: #{tpu_custom_call.1} parent=1 // loop_exit
      _
    %3131 = vsyncpa [#allocation3], 1
    %s3132 = scalar_lea.sflag [#allocation3], 1
    %3133 = vsyncpa %s3132, 1

</llo_original>
